<compile_context>
chip_gen: v5e
topology: v5e:2x2
jax: 0.10.0
libtpu: 0.0.40
codegen_flags: <defaults>
</compile_context>

<pallas_src>
import jax
import jax.numpy as jnp
from jax.experimental import pallas as pl
from jax.experimental.pallas import tpu as pltpu

NHEAD = 8
EPS = 1e-5


def _layer_norm(x, w, b):
    mu = jnp.mean(x, axis=-1, keepdims=True)
    xc = x - mu
    var = jnp.mean(xc * xc, axis=-1, keepdims=True)
    return xc * jax.lax.rsqrt(var + EPS) * w + b


def _encoder_kernel(x_ref, wqkv_ref, bqkv_ref, wo_ref, bo_ref,
                    ln1w_ref, ln1b_ref, w1_ref, b1_ref, w2_ref, b2_ref,
                    ln2w_ref, ln2b_ref, fcw_ref, fcb_ref, out_ref):
    # x_ref: (BT, S, D) batch tile; weights already transposed to (in, out)
    # layout (bf16 for MXU operands, f32 for biases / LN / fc vector).
    BT, S, D = x_ref.shape
    M = BT * S
    hd = D // NHEAD
    scale = 1.0 / float(hd) ** 0.5

    # Flatten the batch tile into the matmul M dimension (trivial reshape:
    # lane dim unchanged, sublane-major merge).
    xf = x_ref[...].reshape(M, D)                               # f32 (M, D)
    xbf = xf.astype(jnp.bfloat16)

    # ---- fused QKV projection: one MXU pass, N = 3*D ----
    qkv = jnp.dot(xbf, wqkv_ref[...],
                  preferred_element_type=jnp.float32) + bqkv_ref[...]
    q = qkv[:, 0:D] * scale
    k = qkv[:, D:2 * D]
    v = qkv[:, 2 * D:3 * D]
    qb = q.astype(jnp.bfloat16)
    kb = k.astype(jnp.bfloat16)
    vb = v.astype(jnp.bfloat16)

    # ---- attention: per-(batch, head) scores; out-projection folded into the
    # per-head accumulation so no lane-axis concatenate is needed ----
    rows = []
    for bi in range(BT):                    # static, small (batch tile)
        r0 = bi * S
        acc = None
        for h in range(NHEAD):              # static
            lo = h * hd
            qh = qb[r0:r0 + S, lo:lo + hd]
            kh = kb[r0:r0 + S, lo:lo + hd]
            vh = vb[r0:r0 + S, lo:lo + hd]
            # scores (S, S): contract head dim of q with head dim of k.
            s = jax.lax.dot_general(
                qh, kh, dimension_numbers=(((1,), (1,)), ((), ())),
                preferred_element_type=jnp.float32)
            s = s - jnp.max(s, axis=-1, keepdims=True)
            p = jnp.exp(s)
            p = p * pl.reciprocal(jnp.sum(p, axis=-1, keepdims=True),
                                  approx=True)
            ho = jnp.dot(p.astype(jnp.bfloat16), vh,
                         preferred_element_type=jnp.float32)     # (S, hd)
            contrib = jnp.dot(ho.astype(jnp.bfloat16),
                              wo_ref[lo:lo + hd, :],
                              preferred_element_type=jnp.float32)  # (S, D)
            acc = contrib if acc is None else acc + contrib
        rows.append(acc)
    attn = jnp.concatenate(rows, axis=0) + bo_ref[...]           # (M, D)

    # ---- residual + LayerNorm1 (post-norm) ----
    h1n = _layer_norm(xf + attn, ln1w_ref[...], ln1b_ref[...])

    # ---- feed-forward: Linear -> ReLU -> Linear (hidden padded to lanes) ----
    ff = jnp.maximum(
        jnp.dot(h1n.astype(jnp.bfloat16), w1_ref[...],
                preferred_element_type=jnp.float32) + b1_ref[...], 0.0)
    ff = jnp.dot(ff.astype(jnp.bfloat16), w2_ref[...],
                 preferred_element_type=jnp.float32) + b2_ref[...]

    # ---- residual + LayerNorm2 ----
    h2n = _layer_norm(h1n + ff, ln2w_ref[...], ln2b_ref[...])

    # ---- final fc (D -> 1) as elementwise mul + lane reduction, + sigmoid ----
    h2n3 = h2n.reshape(BT, S, D)
    logits = jnp.sum(h2n3 * fcw_ref[...], axis=-1) + fcb_ref[...]   # (BT, S)
    out_ref[...] = jax.nn.sigmoid(logits)[None, :, :]               # (1, BT, S)


def init_params(key, in_dim, hid_dim):
    ks = jax.random.split(key, 8)

    def rnd(k, shape, scale=0.05):
        return jax.random.normal(k, shape, dtype=jnp.float32) * scale

    return {
        # nn.MultiheadAttention params
        "in_proj_w": rnd(ks[0], (3 * in_dim, in_dim)),
        "in_proj_b": rnd(ks[1], (3 * in_dim,)),
        "out_proj_w": rnd(ks[2], (in_dim, in_dim)),
        "out_proj_b": jnp.zeros((in_dim,), jnp.float32),
        # LayerNorms (PyTorch default init: ones / zeros)
        "ln1_w": jnp.ones((in_dim,), jnp.float32),
        "ln1_b": jnp.zeros((in_dim,), jnp.float32),
        "ln2_w": jnp.ones((in_dim,), jnp.float32),
        "ln2_b": jnp.zeros((in_dim,), jnp.float32),
        # feed-forward
        "lin1_w": rnd(ks[3], (hid_dim, in_dim)),
        "lin1_b": rnd(ks[4], (hid_dim,)),
        "lin2_w": rnd(ks[5], (in_dim, hid_dim)),
        "lin2_b": jnp.zeros((in_dim,), jnp.float32),
        # final fc
        "fc_w": rnd(ks[6], (1, in_dim)),
        "fc_b": rnd(ks[7], (1,)),
    }


def transformer_forward(x_sbd, params, *, bt=None):
    """x_sbd: (S, B, D) float32 -> (S, B, 1) float32."""
    S, B, D = x_sbd.shape
    assert D % NHEAD == 0

    # Batch-tile size: pack enough rows into the MXU M dimension while keeping
    # >= 2 grid steps when B >= 2 (pipelining + v7x 2-TC parallelism).
    if bt is None:
        bt = max(1, min(max(1, 128 // S), pl.cdiv(B, 2)))
    g = pl.cdiv(B, bt)
    bp = g * bt

    x = jnp.transpose(x_sbd, (1, 0, 2))          # kernel layout (B, S, D)
    if bp != B:
        x = jnp.pad(x, ((0, bp - B), (0, 0), (0, 0)))

    # Pad FFN hidden dim to a lane multiple (>=128); zero columns/rows keep
    # the math identical (relu(0)=0, zero rows of w2 contribute nothing).
    hid = params["lin1_w"].shape[0]
    hpad = max(128, ((hid + 127) // 128) * 128)
    w1 = params["lin1_w"].T                       # (D, hid)
    b1 = params["lin1_b"].reshape(1, -1)
    w2 = params["lin2_w"].T                       # (hid, D)
    if hpad != hid:
        w1 = jnp.pad(w1, ((0, 0), (0, hpad - hid)))
        b1 = jnp.pad(b1, ((0, 0), (0, hpad - hid)))
        w2 = jnp.pad(w2, ((0, hpad - hid), (0, 0)))

    bf16 = jnp.bfloat16
    weight_args = [
        params["in_proj_w"].T.astype(bf16),            # (D, 3D)
        params["in_proj_b"].reshape(1, -1),            # (1, 3D) f32
        params["out_proj_w"].T.astype(bf16),           # (D, D)
        params["out_proj_b"].reshape(1, -1),           # (1, D) f32
        params["ln1_w"].reshape(1, -1),
        params["ln1_b"].reshape(1, -1),
        w1.astype(bf16),                               # (D, hpad)
        b1,                                            # (1, hpad) f32
        w2.astype(bf16),                               # (hpad, D)
        params["lin2_b"].reshape(1, -1),               # (1, D) f32
        params["ln2_w"].reshape(1, -1),
        params["ln2_b"].reshape(1, -1),
        params["fc_w"].reshape(1, -1),                 # (1, D) f32
        params["fc_b"].reshape(1, 1),                  # (1, 1) f32
    ]

    def _const_spec(arr):
        n = arr.ndim
        return pl.BlockSpec(arr.shape, lambda i, n=n: (0,) * n)

    out = pl.pallas_call(
        _encoder_kernel,
        out_shape=jax.ShapeDtypeStruct((g, bt, S), jnp.float32),
        grid=(g,),
        in_specs=[pl.BlockSpec((bt, S, D), lambda i: (i, 0, 0))]
                 + [_const_spec(a) for a in weight_args],
        out_specs=pl.BlockSpec((1, bt, S), lambda i: (i, 0, 0)),
        compiler_params=pltpu.CompilerParams(
            dimension_semantics=("parallel",)),
    )(x, *weight_args)

    out = out.reshape(bp, S)[:B]                  # (B, S)
    return jnp.transpose(out, (1, 0))[..., None]  # (S, B, 1)


def reference_forward(x_sbd, params):
    """Pure-JAX f32 reference (matches torch eval-mode semantics)."""
    S, B, D = x_sbd.shape
    hd = D // NHEAD
    x = jnp.transpose(x_sbd, (1, 0, 2))  # (B, S, D)
    qkv = jnp.einsum("bsd,ed->bse", x, params["in_proj_w"]) + params["in_proj_b"]
    q, k, v = jnp.split(qkv, 3, axis=-1)
    q = q.reshape(B, S, NHEAD, hd).transpose(0, 2, 1, 3) / jnp.sqrt(float(hd))
    k = k.reshape(B, S, NHEAD, hd).transpose(0, 2, 1, 3)
    v = v.reshape(B, S, NHEAD, hd).transpose(0, 2, 1, 3)
    p = jax.nn.softmax(jnp.einsum("bhqd,bhkd->bhqk", q, k), axis=-1)
    attn = jnp.einsum("bhqk,bhkd->bhqd", p, v).transpose(0, 2, 1, 3).reshape(B, S, D)
    attn = attn @ params["out_proj_w"].T + params["out_proj_b"]

    def ln(y, w, b):
        mu = y.mean(-1, keepdims=True)
        var = ((y - mu) ** 2).mean(-1, keepdims=True)
        return (y - mu) / jnp.sqrt(var + EPS) * w + b

    h1 = ln(x + attn, params["ln1_w"], params["ln1_b"])
    ff = jnp.maximum(h1 @ params["lin1_w"].T + params["lin1_b"], 0.0)
    ff = ff @ params["lin2_w"].T + params["lin2_b"]
    h2 = ln(h1 + ff, params["ln2_w"], params["ln2_b"])
    out = jax.nn.sigmoid(h2 @ params["fc_w"].T + params["fc_b"])
    return jnp.transpose(out, (1, 0, 2))


if __name__ == "__main__":
    # Small shapes consistent with the module: seq=8, batch=4,
    # d_model=128 (divisible by nhead=8), dim_feedforward=64 (padded to 128).
    S, B, D, HID = 8, 4, 128, 64
    key = jax.random.PRNGKey(0)
    kx, kp = jax.random.split(key)
    x = jax.random.normal(kx, (S, B, D), dtype=jnp.float32)
    params = init_params(kp, D, HID)

    out = jax.block_until_ready(transformer_forward(x, params))
    ref = jax.block_until_ready(reference_forward(x, params))

    assert out.shape == (S, B, 1), out.shape
    assert bool(jnp.all(jnp.isfinite(out)))
    max_err = float(jnp.max(jnp.abs(out - ref)))
    # Tolerance accounts for bf16 MXU operands (f32 accumulation) + approx
    # reciprocal in softmax; structural errors would be orders larger.
    assert jnp.allclose(out, ref, atol=5e-3, rtol=5e-3), max_err
    print("KERNEL_OK")
</pallas_src>

<mosaic_0001>
module attributes {stable_mosaic.version = 11 : i64} {
  func.func @_encoder_kernel(%arg0: i32, %arg1: memref<2x8x128xf32, #tpu.memory_space<vmem>>, %arg2: memref<128x384xbf16, #tpu.memory_space<vmem>>, %arg3: memref<1x384xf32, #tpu.memory_space<vmem>>, %arg4: memref<128x128xbf16, #tpu.memory_space<vmem>>, %arg5: memref<1x128xf32, #tpu.memory_space<vmem>>, %arg6: memref<1x128xf32, #tpu.memory_space<vmem>>, %arg7: memref<1x128xf32, #tpu.memory_space<vmem>>, %arg8: memref<128x128xbf16, #tpu.memory_space<vmem>>, %arg9: memref<1x128xf32, #tpu.memory_space<vmem>>, %arg10: memref<128x128xbf16, #tpu.memory_space<vmem>>, %arg11: memref<1x128xf32, #tpu.memory_space<vmem>>, %arg12: memref<1x128xf32, #tpu.memory_space<vmem>>, %arg13: memref<1x128xf32, #tpu.memory_space<vmem>>, %arg14: memref<1x128xf32, #tpu.memory_space<vmem>>, %arg15: memref<1x1xf32, #tpu.memory_space<vmem>>, %arg16: memref<1x2x8xf32, #tpu.memory_space<vmem>>) attributes {dimension_semantics = [#tpu.dimension_semantics<parallel>], iteration_bounds = array<i64: 2>, scalar_prefetch = 0 : i64, scratch_operands = 0 : i64, tpu.core_type = #tpu.core_type<tc>, window_params = [{transform_indices = @transform_0, window_bounds = array<i64: 2, 8, 128>}, {pipeline_mode = #tpu.pipeline_mode<synchronous>, transform_indices = @transform_1, window_bounds = array<i64: 128, 384>}, {pipeline_mode = #tpu.pipeline_mode<synchronous>, transform_indices = @transform_2, window_bounds = array<i64: 1, 384>}, {pipeline_mode = #tpu.pipeline_mode<synchronous>, transform_indices = @transform_3, window_bounds = array<i64: 128, 128>}, {pipeline_mode = #tpu.pipeline_mode<synchronous>, transform_indices = @transform_4, window_bounds = array<i64: 1, 128>}, {pipeline_mode = #tpu.pipeline_mode<synchronous>, transform_indices = @transform_5, window_bounds = array<i64: 1, 128>}, {pipeline_mode = #tpu.pipeline_mode<synchronous>, transform_indices = @transform_6, window_bounds = array<i64: 1, 128>}, {pipeline_mode = #tpu.pipeline_mode<synchronous>, transform_indices = @transform_7, window_bounds = array<i64: 128, 128>}, {pipeline_mode = #tpu.pipeline_mode<synchronous>, transform_indices = @transform_8, window_bounds = array<i64: 1, 128>}, {pipeline_mode = #tpu.pipeline_mode<synchronous>, transform_indices = @transform_9, window_bounds = array<i64: 128, 128>}, {pipeline_mode = #tpu.pipeline_mode<synchronous>, transform_indices = @transform_10, window_bounds = array<i64: 1, 128>}, {pipeline_mode = #tpu.pipeline_mode<synchronous>, transform_indices = @transform_11, window_bounds = array<i64: 1, 128>}, {pipeline_mode = #tpu.pipeline_mode<synchronous>, transform_indices = @transform_12, window_bounds = array<i64: 1, 128>}, {pipeline_mode = #tpu.pipeline_mode<synchronous>, transform_indices = @transform_13, window_bounds = array<i64: 1, 128>}, {pipeline_mode = #tpu.pipeline_mode<synchronous>, transform_indices = @transform_14, window_bounds = array<i64: 1, 1>}, {transform_indices = @transform_15, window_bounds = array<i64: 1, 2, 8>}]} {
    %c0 = arith.constant 0 : index
    %c0_0 = arith.constant 0 : index
    %c0_1 = arith.constant 0 : index
    %0 = vector.load %arg1[%c0, %c0_0, %c0_1] : memref<2x8x128xf32, #tpu.memory_space<vmem>>, vector<2x8x128xf32>
    %1 = vector.shape_cast %0 : vector<2x8x128xf32> to vector<16x128xf32>
    %2 = arith.truncf %1 : vector<16x128xf32> to vector<16x128xbf16>
    %c0_2 = arith.constant 0 : index
    %c0_3 = arith.constant 0 : index
    %3 = vector.load %arg2[%c0_2, %c0_3] : memref<128x384xbf16, #tpu.memory_space<vmem>>, vector<128x384xbf16>
    %cst = arith.constant dense<0.000000e+00> : vector<16x384xf32>
    %4 = tpu.matmul %2, %3, %cst {dimension_numbers = #tpu.dot_dimension_numbers<[1], [0], [0], [1], [0, 0, 1, 1], [], []>} : vector<16x128xbf16>, vector<128x384xbf16>, vector<16x384xf32> -> vector<16x384xf32>
    %c0_4 = arith.constant 0 : index
    %c0_5 = arith.constant 0 : index
    %5 = vector.load %arg3[%c0_4, %c0_5] : memref<1x384xf32, #tpu.memory_space<vmem>>, vector<1x384xf32>
    %6 = vector.broadcast %5 : vector<1x384xf32> to vector<16x384xf32>
    %7 = arith.addf %4, %6 : vector<16x384xf32>
    %8 = vector.extract_strided_slice %7 {offsets = [0, 0], sizes = [16, 128], strides = [1, 1]} : vector<16x384xf32> to vector<16x128xf32>
    %cst_6 = arith.constant 2.500000e-01 : f32
    %9 = vector.broadcast %cst_6 : f32 to vector<16x128xf32>
    %10 = arith.mulf %8, %9 : vector<16x128xf32>
    %11 = vector.extract_strided_slice %7 {offsets = [0, 128], sizes = [16, 128], strides = [1, 1]} : vector<16x384xf32> to vector<16x128xf32>
    %12 = vector.extract_strided_slice %7 {offsets = [0, 256], sizes = [16, 128], strides = [1, 1]} : vector<16x384xf32> to vector<16x128xf32>
    %13 = arith.truncf %10 : vector<16x128xf32> to vector<16x128xbf16>
    %14 = arith.truncf %11 : vector<16x128xf32> to vector<16x128xbf16>
    %15 = arith.truncf %12 : vector<16x128xf32> to vector<16x128xbf16>
    %16 = vector.extract_strided_slice %13 {offsets = [0, 0], sizes = [8, 16], strides = [1, 1]} : vector<16x128xbf16> to vector<8x16xbf16>
    %17 = vector.extract_strided_slice %14 {offsets = [0, 0], sizes = [8, 16], strides = [1, 1]} : vector<16x128xbf16> to vector<8x16xbf16>
    %18 = vector.extract_strided_slice %15 {offsets = [0, 0], sizes = [8, 16], strides = [1, 1]} : vector<16x128xbf16> to vector<8x16xbf16>
    %cst_7 = arith.constant dense<0.000000e+00> : vector<8x8xf32>
    %19 = tpu.matmul %16, %17, %cst_7 {dimension_numbers = #tpu.dot_dimension_numbers<[1], [1], [0], [0], [0, 0, 1, 0], [], []>} : vector<8x16xbf16>, vector<8x16xbf16>, vector<8x8xf32> -> vector<8x8xf32>
    %cst_8 = arith.constant dense<0xFF800000> : vector<8xf32>
    %20 = vector.multi_reduction <maximumf>, %19, %cst_8 [1] : vector<8x8xf32> to vector<8xf32>
    %21 = vector.shape_cast %20 : vector<8xf32> to vector<8x1xf32>
    %22 = vector.broadcast %21 : vector<8x1xf32> to vector<8x8xf32>
    %23 = arith.subf %19, %22 : vector<8x8xf32>
    %24 = math.exp %23 : vector<8x8xf32>
    %cst_9 = arith.constant dense<0.000000e+00> : vector<8xf32>
    %25 = vector.multi_reduction <add>, %24, %cst_9 [1] : vector<8x8xf32> to vector<8xf32>
    %26 = vector.shape_cast %25 : vector<8xf32> to vector<8x1xf32>
    %27 = tpu.reciprocal %26 {approx = true} : vector<8x1xf32> -> vector<8x1xf32>
    %28 = vector.broadcast %27 : vector<8x1xf32> to vector<8x8xf32>
    %29 = arith.mulf %24, %28 : vector<8x8xf32>
    %30 = arith.truncf %29 : vector<8x8xf32> to vector<8x8xbf16>
    %cst_10 = arith.constant dense<0.000000e+00> : vector<8x16xf32>
    %31 = tpu.matmul %30, %18, %cst_10 {dimension_numbers = #tpu.dot_dimension_numbers<[1], [0], [0], [1], [0, 0, 1, 1], [], []>} : vector<8x8xbf16>, vector<8x16xbf16>, vector<8x16xf32> -> vector<8x16xf32>
    %32 = arith.truncf %31 : vector<8x16xf32> to vector<8x16xbf16>
    %c0_11 = arith.constant 0 : index
    %c0_12 = arith.constant 0 : index
    %33 = vector.load %arg4[%c0_11, %c0_12] : memref<128x128xbf16, #tpu.memory_space<vmem>>, vector<16x128xbf16>
    %cst_13 = arith.constant dense<0.000000e+00> : vector<8x128xf32>
    %34 = tpu.matmul %32, %33, %cst_13 {dimension_numbers = #tpu.dot_dimension_numbers<[1], [0], [0], [1], [0, 0, 1, 1], [], []>} : vector<8x16xbf16>, vector<16x128xbf16>, vector<8x128xf32> -> vector<8x128xf32>
    %35 = vector.extract_strided_slice %13 {offsets = [0, 16], sizes = [8, 16], strides = [1, 1]} : vector<16x128xbf16> to vector<8x16xbf16>
    %36 = vector.extract_strided_slice %14 {offsets = [0, 16], sizes = [8, 16], strides = [1, 1]} : vector<16x128xbf16> to vector<8x16xbf16>
    %37 = vector.extract_strided_slice %15 {offsets = [0, 16], sizes = [8, 16], strides = [1, 1]} : vector<16x128xbf16> to vector<8x16xbf16>
    %cst_14 = arith.constant dense<0.000000e+00> : vector<8x8xf32>
    %38 = tpu.matmul %35, %36, %cst_14 {dimension_numbers = #tpu.dot_dimension_numbers<[1], [1], [0], [0], [0, 0, 1, 0], [], []>} : vector<8x16xbf16>, vector<8x16xbf16>, vector<8x8xf32> -> vector<8x8xf32>
    %cst_15 = arith.constant dense<0xFF800000> : vector<8xf32>
    %39 = vector.multi_reduction <maximumf>, %38, %cst_15 [1] : vector<8x8xf32> to vector<8xf32>
    %40 = vector.shape_cast %39 : vector<8xf32> to vector<8x1xf32>
    %41 = vector.broadcast %40 : vector<8x1xf32> to vector<8x8xf32>
    %42 = arith.subf %38, %41 : vector<8x8xf32>
    %43 = math.exp %42 : vector<8x8xf32>
    %cst_16 = arith.constant dense<0.000000e+00> : vector<8xf32>
    %44 = vector.multi_reduction <add>, %43, %cst_16 [1] : vector<8x8xf32> to vector<8xf32>
    %45 = vector.shape_cast %44 : vector<8xf32> to vector<8x1xf32>
    %46 = tpu.reciprocal %45 {approx = true} : vector<8x1xf32> -> vector<8x1xf32>
    %47 = vector.broadcast %46 : vector<8x1xf32> to vector<8x8xf32>
    %48 = arith.mulf %43, %47 : vector<8x8xf32>
    %49 = arith.truncf %48 : vector<8x8xf32> to vector<8x8xbf16>
    %cst_17 = arith.constant dense<0.000000e+00> : vector<8x16xf32>
    %50 = tpu.matmul %49, %37, %cst_17 {dimension_numbers = #tpu.dot_dimension_numbers<[1], [0], [0], [1], [0, 0, 1, 1], [], []>} : vector<8x8xbf16>, vector<8x16xbf16>, vector<8x16xf32> -> vector<8x16xf32>
    %51 = arith.truncf %50 : vector<8x16xf32> to vector<8x16xbf16>
    %c16 = arith.constant 16 : index
    %c0_18 = arith.constant 0 : index
    %52 = vector.load %arg4[%c16, %c0_18] : memref<128x128xbf16, #tpu.memory_space<vmem>>, vector<16x128xbf16>
    %cst_19 = arith.constant dense<0.000000e+00> : vector<8x128xf32>
    %53 = tpu.matmul %51, %52, %cst_19 {dimension_numbers = #tpu.dot_dimension_numbers<[1], [0], [0], [1], [0, 0, 1, 1], [], []>} : vector<8x16xbf16>, vector<16x128xbf16>, vector<8x128xf32> -> vector<8x128xf32>
    %54 = arith.addf %34, %53 : vector<8x128xf32>
    %55 = vector.extract_strided_slice %13 {offsets = [0, 32], sizes = [8, 16], strides = [1, 1]} : vector<16x128xbf16> to vector<8x16xbf16>
    %56 = vector.extract_strided_slice %14 {offsets = [0, 32], sizes = [8, 16], strides = [1, 1]} : vector<16x128xbf16> to vector<8x16xbf16>
    %57 = vector.extract_strided_slice %15 {offsets = [0, 32], sizes = [8, 16], strides = [1, 1]} : vector<16x128xbf16> to vector<8x16xbf16>
    %cst_20 = arith.constant dense<0.000000e+00> : vector<8x8xf32>
    %58 = tpu.matmul %55, %56, %cst_20 {dimension_numbers = #tpu.dot_dimension_numbers<[1], [1], [0], [0], [0, 0, 1, 0], [], []>} : vector<8x16xbf16>, vector<8x16xbf16>, vector<8x8xf32> -> vector<8x8xf32>
    %cst_21 = arith.constant dense<0xFF800000> : vector<8xf32>
    %59 = vector.multi_reduction <maximumf>, %58, %cst_21 [1] : vector<8x8xf32> to vector<8xf32>
    %60 = vector.shape_cast %59 : vector<8xf32> to vector<8x1xf32>
    %61 = vector.broadcast %60 : vector<8x1xf32> to vector<8x8xf32>
    %62 = arith.subf %58, %61 : vector<8x8xf32>
    %63 = math.exp %62 : vector<8x8xf32>
    %cst_22 = arith.constant dense<0.000000e+00> : vector<8xf32>
    %64 = vector.multi_reduction <add>, %63, %cst_22 [1] : vector<8x8xf32> to vector<8xf32>
    %65 = vector.shape_cast %64 : vector<8xf32> to vector<8x1xf32>
    %66 = tpu.reciprocal %65 {approx = true} : vector<8x1xf32> -> vector<8x1xf32>
    %67 = vector.broadcast %66 : vector<8x1xf32> to vector<8x8xf32>
    %68 = arith.mulf %63, %67 : vector<8x8xf32>
    %69 = arith.truncf %68 : vector<8x8xf32> to vector<8x8xbf16>
    %cst_23 = arith.constant dense<0.000000e+00> : vector<8x16xf32>
    %70 = tpu.matmul %69, %57, %cst_23 {dimension_numbers = #tpu.dot_dimension_numbers<[1], [0], [0], [1], [0, 0, 1, 1], [], []>} : vector<8x8xbf16>, vector<8x16xbf16>, vector<8x16xf32> -> vector<8x16xf32>
    %71 = arith.truncf %70 : vector<8x16xf32> to vector<8x16xbf16>
    %c32 = arith.constant 32 : index
    %c0_24 = arith.constant 0 : index
    %72 = vector.load %arg4[%c32, %c0_24] : memref<128x128xbf16, #tpu.memory_space<vmem>>, vector<16x128xbf16>
    %cst_25 = arith.constant dense<0.000000e+00> : vector<8x128xf32>
    %73 = tpu.matmul %71, %72, %cst_25 {dimension_numbers = #tpu.dot_dimension_numbers<[1], [0], [0], [1], [0, 0, 1, 1], [], []>} : vector<8x16xbf16>, vector<16x128xbf16>, vector<8x128xf32> -> vector<8x128xf32>
    %74 = arith.addf %54, %73 : vector<8x128xf32>
    %75 = vector.extract_strided_slice %13 {offsets = [0, 48], sizes = [8, 16], strides = [1, 1]} : vector<16x128xbf16> to vector<8x16xbf16>
    %76 = vector.extract_strided_slice %14 {offsets = [0, 48], sizes = [8, 16], strides = [1, 1]} : vector<16x128xbf16> to vector<8x16xbf16>
    %77 = vector.extract_strided_slice %15 {offsets = [0, 48], sizes = [8, 16], strides = [1, 1]} : vector<16x128xbf16> to vector<8x16xbf16>
    %cst_26 = arith.constant dense<0.000000e+00> : vector<8x8xf32>
    %78 = tpu.matmul %75, %76, %cst_26 {dimension_numbers = #tpu.dot_dimension_numbers<[1], [1], [0], [0], [0, 0, 1, 0], [], []>} : vector<8x16xbf16>, vector<8x16xbf16>, vector<8x8xf32> -> vector<8x8xf32>
    %cst_27 = arith.constant dense<0xFF800000> : vector<8xf32>
    %79 = vector.multi_reduction <maximumf>, %78, %cst_27 [1] : vector<8x8xf32> to vector<8xf32>
    %80 = vector.shape_cast %79 : vector<8xf32> to vector<8x1xf32>
    %81 = vector.broadcast %80 : vector<8x1xf32> to vector<8x8xf32>
    %82 = arith.subf %78, %81 : vector<8x8xf32>
    %83 = math.exp %82 : vector<8x8xf32>
    %cst_28 = arith.constant dense<0.000000e+00> : vector<8xf32>
    %84 = vector.multi_reduction <add>, %83, %cst_28 [1] : vector<8x8xf32> to vector<8xf32>
    %85 = vector.shape_cast %84 : vector<8xf32> to vector<8x1xf32>
    %86 = tpu.reciprocal %85 {approx = true} : vector<8x1xf32> -> vector<8x1xf32>
    %87 = vector.broadcast %86 : vector<8x1xf32> to vector<8x8xf32>
    %88 = arith.mulf %83, %87 : vector<8x8xf32>
    %89 = arith.truncf %88 : vector<8x8xf32> to vector<8x8xbf16>
    %cst_29 = arith.constant dense<0.000000e+00> : vector<8x16xf32>
    %90 = tpu.matmul %89, %77, %cst_29 {dimension_numbers = #tpu.dot_dimension_numbers<[1], [0], [0], [1], [0, 0, 1, 1], [], []>} : vector<8x8xbf16>, vector<8x16xbf16>, vector<8x16xf32> -> vector<8x16xf32>
    %91 = arith.truncf %90 : vector<8x16xf32> to vector<8x16xbf16>
    %c48 = arith.constant 48 : index
    %c0_30 = arith.constant 0 : index
    %92 = vector.load %arg4[%c48, %c0_30] : memref<128x128xbf16, #tpu.memory_space<vmem>>, vector<16x128xbf16>
    %cst_31 = arith.constant dense<0.000000e+00> : vector<8x128xf32>
    %93 = tpu.matmul %91, %92, %cst_31 {dimension_numbers = #tpu.dot_dimension_numbers<[1], [0], [0], [1], [0, 0, 1, 1], [], []>} : vector<8x16xbf16>, vector<16x128xbf16>, vector<8x128xf32> -> vector<8x128xf32>
    %94 = arith.addf %74, %93 : vector<8x128xf32>
    %95 = vector.extract_strided_slice %13 {offsets = [0, 64], sizes = [8, 16], strides = [1, 1]} : vector<16x128xbf16> to vector<8x16xbf16>
    %96 = vector.extract_strided_slice %14 {offsets = [0, 64], sizes = [8, 16], strides = [1, 1]} : vector<16x128xbf16> to vector<8x16xbf16>
    %97 = vector.extract_strided_slice %15 {offsets = [0, 64], sizes = [8, 16], strides = [1, 1]} : vector<16x128xbf16> to vector<8x16xbf16>
    %cst_32 = arith.constant dense<0.000000e+00> : vector<8x8xf32>
    %98 = tpu.matmul %95, %96, %cst_32 {dimension_numbers = #tpu.dot_dimension_numbers<[1], [1], [0], [0], [0, 0, 1, 0], [], []>} : vector<8x16xbf16>, vector<8x16xbf16>, vector<8x8xf32> -> vector<8x8xf32>
    %cst_33 = arith.constant dense<0xFF800000> : vector<8xf32>
    %99 = vector.multi_reduction <maximumf>, %98, %cst_33 [1] : vector<8x8xf32> to vector<8xf32>
    %100 = vector.shape_cast %99 : vector<8xf32> to vector<8x1xf32>
    %101 = vector.broadcast %100 : vector<8x1xf32> to vector<8x8xf32>
    %102 = arith.subf %98, %101 : vector<8x8xf32>
    %103 = math.exp %102 : vector<8x8xf32>
    %cst_34 = arith.constant dense<0.000000e+00> : vector<8xf32>
    %104 = vector.multi_reduction <add>, %103, %cst_34 [1] : vector<8x8xf32> to vector<8xf32>
    %105 = vector.shape_cast %104 : vector<8xf32> to vector<8x1xf32>
    %106 = tpu.reciprocal %105 {approx = true} : vector<8x1xf32> -> vector<8x1xf32>
    %107 = vector.broadcast %106 : vector<8x1xf32> to vector<8x8xf32>
    %108 = arith.mulf %103, %107 : vector<8x8xf32>
    %109 = arith.truncf %108 : vector<8x8xf32> to vector<8x8xbf16>
    %cst_35 = arith.constant dense<0.000000e+00> : vector<8x16xf32>
    %110 = tpu.matmul %109, %97, %cst_35 {dimension_numbers = #tpu.dot_dimension_numbers<[1], [0], [0], [1], [0, 0, 1, 1], [], []>} : vector<8x8xbf16>, vector<8x16xbf16>, vector<8x16xf32> -> vector<8x16xf32>
    %111 = arith.truncf %110 : vector<8x16xf32> to vector<8x16xbf16>
    %c64 = arith.constant 64 : index
    %c0_36 = arith.constant 0 : index
    %112 = vector.load %arg4[%c64, %c0_36] : memref<128x128xbf16, #tpu.memory_space<vmem>>, vector<16x128xbf16>
    %cst_37 = arith.constant dense<0.000000e+00> : vector<8x128xf32>
    %113 = tpu.matmul %111, %112, %cst_37 {dimension_numbers = #tpu.dot_dimension_numbers<[1], [0], [0], [1], [0, 0, 1, 1], [], []>} : vector<8x16xbf16>, vector<16x128xbf16>, vector<8x128xf32> -> vector<8x128xf32>
    %114 = arith.addf %94, %113 : vector<8x128xf32>
    %115 = vector.extract_strided_slice %13 {offsets = [0, 80], sizes = [8, 16], strides = [1, 1]} : vector<16x128xbf16> to vector<8x16xbf16>
    %116 = vector.extract_strided_slice %14 {offsets = [0, 80], sizes = [8, 16], strides = [1, 1]} : vector<16x128xbf16> to vector<8x16xbf16>
    %117 = vector.extract_strided_slice %15 {offsets = [0, 80], sizes = [8, 16], strides = [1, 1]} : vector<16x128xbf16> to vector<8x16xbf16>
    %cst_38 = arith.constant dense<0.000000e+00> : vector<8x8xf32>
    %118 = tpu.matmul %115, %116, %cst_38 {dimension_numbers = #tpu.dot_dimension_numbers<[1], [1], [0], [0], [0, 0, 1, 0], [], []>} : vector<8x16xbf16>, vector<8x16xbf16>, vector<8x8xf32> -> vector<8x8xf32>
    %cst_39 = arith.constant dense<0xFF800000> : vector<8xf32>
    %119 = vector.multi_reduction <maximumf>, %118, %cst_39 [1] : vector<8x8xf32> to vector<8xf32>
    %120 = vector.shape_cast %119 : vector<8xf32> to vector<8x1xf32>
    %121 = vector.broadcast %120 : vector<8x1xf32> to vector<8x8xf32>
    %122 = arith.subf %118, %121 : vector<8x8xf32>
    %123 = math.exp %122 : vector<8x8xf32>
    %cst_40 = arith.constant dense<0.000000e+00> : vector<8xf32>
    %124 = vector.multi_reduction <add>, %123, %cst_40 [1] : vector<8x8xf32> to vector<8xf32>
    %125 = vector.shape_cast %124 : vector<8xf32> to vector<8x1xf32>
    %126 = tpu.reciprocal %125 {approx = true} : vector<8x1xf32> -> vector<8x1xf32>
    %127 = vector.broadcast %126 : vector<8x1xf32> to vector<8x8xf32>
    %128 = arith.mulf %123, %127 : vector<8x8xf32>
    %129 = arith.truncf %128 : vector<8x8xf32> to vector<8x8xbf16>
    %cst_41 = arith.constant dense<0.000000e+00> : vector<8x16xf32>
    %130 = tpu.matmul %129, %117, %cst_41 {dimension_numbers = #tpu.dot_dimension_numbers<[1], [0], [0], [1], [0, 0, 1, 1], [], []>} : vector<8x8xbf16>, vector<8x16xbf16>, vector<8x16xf32> -> vector<8x16xf32>
    %131 = arith.truncf %130 : vector<8x16xf32> to vector<8x16xbf16>
    %c80 = arith.constant 80 : index
    %c0_42 = arith.constant 0 : index
    %132 = vector.load %arg4[%c80, %c0_42] : memref<128x128xbf16, #tpu.memory_space<vmem>>, vector<16x128xbf16>
    %cst_43 = arith.constant dense<0.000000e+00> : vector<8x128xf32>
    %133 = tpu.matmul %131, %132, %cst_43 {dimension_numbers = #tpu.dot_dimension_numbers<[1], [0], [0], [1], [0, 0, 1, 1], [], []>} : vector<8x16xbf16>, vector<16x128xbf16>, vector<8x128xf32> -> vector<8x128xf32>
    %134 = arith.addf %114, %133 : vector<8x128xf32>
    %135 = vector.extract_strided_slice %13 {offsets = [0, 96], sizes = [8, 16], strides = [1, 1]} : vector<16x128xbf16> to vector<8x16xbf16>
    %136 = vector.extract_strided_slice %14 {offsets = [0, 96], sizes = [8, 16], strides = [1, 1]} : vector<16x128xbf16> to vector<8x16xbf16>
    %137 = vector.extract_strided_slice %15 {offsets = [0, 96], sizes = [8, 16], strides = [1, 1]} : vector<16x128xbf16> to vector<8x16xbf16>
    %cst_44 = arith.constant dense<0.000000e+00> : vector<8x8xf32>
    %138 = tpu.matmul %135, %136, %cst_44 {dimension_numbers = #tpu.dot_dimension_numbers<[1], [1], [0], [0], [0, 0, 1, 0], [], []>} : vector<8x16xbf16>, vector<8x16xbf16>, vector<8x8xf32> -> vector<8x8xf32>
    %cst_45 = arith.constant dense<0xFF800000> : vector<8xf32>
    %139 = vector.multi_reduction <maximumf>, %138, %cst_45 [1] : vector<8x8xf32> to vector<8xf32>
    %140 = vector.shape_cast %139 : vector<8xf32> to vector<8x1xf32>
    %141 = vector.broadcast %140 : vector<8x1xf32> to vector<8x8xf32>
    %142 = arith.subf %138, %141 : vector<8x8xf32>
    %143 = math.exp %142 : vector<8x8xf32>
    %cst_46 = arith.constant dense<0.000000e+00> : vector<8xf32>
    %144 = vector.multi_reduction <add>, %143, %cst_46 [1] : vector<8x8xf32> to vector<8xf32>
    %145 = vector.shape_cast %144 : vector<8xf32> to vector<8x1xf32>
    %146 = tpu.reciprocal %145 {approx = true} : vector<8x1xf32> -> vector<8x1xf32>
    %147 = vector.broadcast %146 : vector<8x1xf32> to vector<8x8xf32>
    %148 = arith.mulf %143, %147 : vector<8x8xf32>
    %149 = arith.truncf %148 : vector<8x8xf32> to vector<8x8xbf16>
    %cst_47 = arith.constant dense<0.000000e+00> : vector<8x16xf32>
    %150 = tpu.matmul %149, %137, %cst_47 {dimension_numbers = #tpu.dot_dimension_numbers<[1], [0], [0], [1], [0, 0, 1, 1], [], []>} : vector<8x8xbf16>, vector<8x16xbf16>, vector<8x16xf32> -> vector<8x16xf32>
    %151 = arith.truncf %150 : vector<8x16xf32> to vector<8x16xbf16>
    %c96 = arith.constant 96 : index
    %c0_48 = arith.constant 0 : index
    %152 = vector.load %arg4[%c96, %c0_48] : memref<128x128xbf16, #tpu.memory_space<vmem>>, vector<16x128xbf16>
    %cst_49 = arith.constant dense<0.000000e+00> : vector<8x128xf32>
    %153 = tpu.matmul %151, %152, %cst_49 {dimension_numbers = #tpu.dot_dimension_numbers<[1], [0], [0], [1], [0, 0, 1, 1], [], []>} : vector<8x16xbf16>, vector<16x128xbf16>, vector<8x128xf32> -> vector<8x128xf32>
    %154 = arith.addf %134, %153 : vector<8x128xf32>
    %155 = vector.extract_strided_slice %13 {offsets = [0, 112], sizes = [8, 16], strides = [1, 1]} : vector<16x128xbf16> to vector<8x16xbf16>
    %156 = vector.extract_strided_slice %14 {offsets = [0, 112], sizes = [8, 16], strides = [1, 1]} : vector<16x128xbf16> to vector<8x16xbf16>
    %157 = vector.extract_strided_slice %15 {offsets = [0, 112], sizes = [8, 16], strides = [1, 1]} : vector<16x128xbf16> to vector<8x16xbf16>
    %cst_50 = arith.constant dense<0.000000e+00> : vector<8x8xf32>
    %158 = tpu.matmul %155, %156, %cst_50 {dimension_numbers = #tpu.dot_dimension_numbers<[1], [1], [0], [0], [0, 0, 1, 0], [], []>} : vector<8x16xbf16>, vector<8x16xbf16>, vector<8x8xf32> -> vector<8x8xf32>
    %cst_51 = arith.constant dense<0xFF800000> : vector<8xf32>
    %159 = vector.multi_reduction <maximumf>, %158, %cst_51 [1] : vector<8x8xf32> to vector<8xf32>
    %160 = vector.shape_cast %159 : vector<8xf32> to vector<8x1xf32>
    %161 = vector.broadcast %160 : vector<8x1xf32> to vector<8x8xf32>
    %162 = arith.subf %158, %161 : vector<8x8xf32>
    %163 = math.exp %162 : vector<8x8xf32>
    %cst_52 = arith.constant dense<0.000000e+00> : vector<8xf32>
    %164 = vector.multi_reduction <add>, %163, %cst_52 [1] : vector<8x8xf32> to vector<8xf32>
    %165 = vector.shape_cast %164 : vector<8xf32> to vector<8x1xf32>
    %166 = tpu.reciprocal %165 {approx = true} : vector<8x1xf32> -> vector<8x1xf32>
    %167 = vector.broadcast %166 : vector<8x1xf32> to vector<8x8xf32>
    %168 = arith.mulf %163, %167 : vector<8x8xf32>
    %169 = arith.truncf %168 : vector<8x8xf32> to vector<8x8xbf16>
    %cst_53 = arith.constant dense<0.000000e+00> : vector<8x16xf32>
    %170 = tpu.matmul %169, %157, %cst_53 {dimension_numbers = #tpu.dot_dimension_numbers<[1], [0], [0], [1], [0, 0, 1, 1], [], []>} : vector<8x8xbf16>, vector<8x16xbf16>, vector<8x16xf32> -> vector<8x16xf32>
    %171 = arith.truncf %170 : vector<8x16xf32> to vector<8x16xbf16>
    %c112 = arith.constant 112 : index
    %c0_54 = arith.constant 0 : index
    %172 = vector.load %arg4[%c112, %c0_54] : memref<128x128xbf16, #tpu.memory_space<vmem>>, vector<16x128xbf16>
    %cst_55 = arith.constant dense<0.000000e+00> : vector<8x128xf32>
    %173 = tpu.matmul %171, %172, %cst_55 {dimension_numbers = #tpu.dot_dimension_numbers<[1], [0], [0], [1], [0, 0, 1, 1], [], []>} : vector<8x16xbf16>, vector<16x128xbf16>, vector<8x128xf32> -> vector<8x128xf32>
    %174 = arith.addf %154, %173 : vector<8x128xf32>
    %175 = vector.extract_strided_slice %13 {offsets = [8, 0], sizes = [8, 16], strides = [1, 1]} : vector<16x128xbf16> to vector<8x16xbf16>
    %176 = vector.extract_strided_slice %14 {offsets = [8, 0], sizes = [8, 16], strides = [1, 1]} : vector<16x128xbf16> to vector<8x16xbf16>
    %177 = vector.extract_strided_slice %15 {offsets = [8, 0], sizes = [8, 16], strides = [1, 1]} : vector<16x128xbf16> to vector<8x16xbf16>
    %cst_56 = arith.constant dense<0.000000e+00> : vector<8x8xf32>
    %178 = tpu.matmul %175, %176, %cst_56 {dimension_numbers = #tpu.dot_dimension_numbers<[1], [1], [0], [0], [0, 0, 1, 0], [], []>} : vector<8x16xbf16>, vector<8x16xbf16>, vector<8x8xf32> -> vector<8x8xf32>
    %cst_57 = arith.constant dense<0xFF800000> : vector<8xf32>
    %179 = vector.multi_reduction <maximumf>, %178, %cst_57 [1] : vector<8x8xf32> to vector<8xf32>
    %180 = vector.shape_cast %179 : vector<8xf32> to vector<8x1xf32>
    %181 = vector.broadcast %180 : vector<8x1xf32> to vector<8x8xf32>
    %182 = arith.subf %178, %181 : vector<8x8xf32>
    %183 = math.exp %182 : vector<8x8xf32>
    %cst_58 = arith.constant dense<0.000000e+00> : vector<8xf32>
    %184 = vector.multi_reduction <add>, %183, %cst_58 [1] : vector<8x8xf32> to vector<8xf32>
    %185 = vector.shape_cast %184 : vector<8xf32> to vector<8x1xf32>
    %186 = tpu.reciprocal %185 {approx = true} : vector<8x1xf32> -> vector<8x1xf32>
    %187 = vector.broadcast %186 : vector<8x1xf32> to vector<8x8xf32>
    %188 = arith.mulf %183, %187 : vector<8x8xf32>
    %189 = arith.truncf %188 : vector<8x8xf32> to vector<8x8xbf16>
    %cst_59 = arith.constant dense<0.000000e+00> : vector<8x16xf32>
    %190 = tpu.matmul %189, %177, %cst_59 {dimension_numbers = #tpu.dot_dimension_numbers<[1], [0], [0], [1], [0, 0, 1, 1], [], []>} : vector<8x8xbf16>, vector<8x16xbf16>, vector<8x16xf32> -> vector<8x16xf32>
    %191 = arith.truncf %190 : vector<8x16xf32> to vector<8x16xbf16>
    %c0_60 = arith.constant 0 : index
    %c0_61 = arith.constant 0 : index
    %192 = vector.load %arg4[%c0_60, %c0_61] : memref<128x128xbf16, #tpu.memory_space<vmem>>, vector<16x128xbf16>
    %cst_62 = arith.constant dense<0.000000e+00> : vector<8x128xf32>
    %193 = tpu.matmul %191, %192, %cst_62 {dimension_numbers = #tpu.dot_dimension_numbers<[1], [0], [0], [1], [0, 0, 1, 1], [], []>} : vector<8x16xbf16>, vector<16x128xbf16>, vector<8x128xf32> -> vector<8x128xf32>
    %194 = vector.extract_strided_slice %13 {offsets = [8, 16], sizes = [8, 16], strides = [1, 1]} : vector<16x128xbf16> to vector<8x16xbf16>
    %195 = vector.extract_strided_slice %14 {offsets = [8, 16], sizes = [8, 16], strides = [1, 1]} : vector<16x128xbf16> to vector<8x16xbf16>
    %196 = vector.extract_strided_slice %15 {offsets = [8, 16], sizes = [8, 16], strides = [1, 1]} : vector<16x128xbf16> to vector<8x16xbf16>
    %cst_63 = arith.constant dense<0.000000e+00> : vector<8x8xf32>
    %197 = tpu.matmul %194, %195, %cst_63 {dimension_numbers = #tpu.dot_dimension_numbers<[1], [1], [0], [0], [0, 0, 1, 0], [], []>} : vector<8x16xbf16>, vector<8x16xbf16>, vector<8x8xf32> -> vector<8x8xf32>
    %cst_64 = arith.constant dense<0xFF800000> : vector<8xf32>
    %198 = vector.multi_reduction <maximumf>, %197, %cst_64 [1] : vector<8x8xf32> to vector<8xf32>
    %199 = vector.shape_cast %198 : vector<8xf32> to vector<8x1xf32>
    %200 = vector.broadcast %199 : vector<8x1xf32> to vector<8x8xf32>
    %201 = arith.subf %197, %200 : vector<8x8xf32>
    %202 = math.exp %201 : vector<8x8xf32>
    %cst_65 = arith.constant dense<0.000000e+00> : vector<8xf32>
    %203 = vector.multi_reduction <add>, %202, %cst_65 [1] : vector<8x8xf32> to vector<8xf32>
    %204 = vector.shape_cast %203 : vector<8xf32> to vector<8x1xf32>
    %205 = tpu.reciprocal %204 {approx = true} : vector<8x1xf32> -> vector<8x1xf32>
    %206 = vector.broadcast %205 : vector<8x1xf32> to vector<8x8xf32>
    %207 = arith.mulf %202, %206 : vector<8x8xf32>
    %208 = arith.truncf %207 : vector<8x8xf32> to vector<8x8xbf16>
    %cst_66 = arith.constant dense<0.000000e+00> : vector<8x16xf32>
    %209 = tpu.matmul %208, %196, %cst_66 {dimension_numbers = #tpu.dot_dimension_numbers<[1], [0], [0], [1], [0, 0, 1, 1], [], []>} : vector<8x8xbf16>, vector<8x16xbf16>, vector<8x16xf32> -> vector<8x16xf32>
    %210 = arith.truncf %209 : vector<8x16xf32> to vector<8x16xbf16>
    %c16_67 = arith.constant 16 : index
    %c0_68 = arith.constant 0 : index
    %211 = vector.load %arg4[%c16_67, %c0_68] : memref<128x128xbf16, #tpu.memory_space<vmem>>, vector<16x128xbf16>
    %cst_69 = arith.constant dense<0.000000e+00> : vector<8x128xf32>
    %212 = tpu.matmul %210, %211, %cst_69 {dimension_numbers = #tpu.dot_dimension_numbers<[1], [0], [0], [1], [0, 0, 1, 1], [], []>} : vector<8x16xbf16>, vector<16x128xbf16>, vector<8x128xf32> -> vector<8x128xf32>
    %213 = arith.addf %193, %212 : vector<8x128xf32>
    %214 = vector.extract_strided_slice %13 {offsets = [8, 32], sizes = [8, 16], strides = [1, 1]} : vector<16x128xbf16> to vector<8x16xbf16>
    %215 = vector.extract_strided_slice %14 {offsets = [8, 32], sizes = [8, 16], strides = [1, 1]} : vector<16x128xbf16> to vector<8x16xbf16>
    %216 = vector.extract_strided_slice %15 {offsets = [8, 32], sizes = [8, 16], strides = [1, 1]} : vector<16x128xbf16> to vector<8x16xbf16>
    %cst_70 = arith.constant dense<0.000000e+00> : vector<8x8xf32>
    %217 = tpu.matmul %214, %215, %cst_70 {dimension_numbers = #tpu.dot_dimension_numbers<[1], [1], [0], [0], [0, 0, 1, 0], [], []>} : vector<8x16xbf16>, vector<8x16xbf16>, vector<8x8xf32> -> vector<8x8xf32>
    %cst_71 = arith.constant dense<0xFF800000> : vector<8xf32>
    %218 = vector.multi_reduction <maximumf>, %217, %cst_71 [1] : vector<8x8xf32> to vector<8xf32>
    %219 = vector.shape_cast %218 : vector<8xf32> to vector<8x1xf32>
    %220 = vector.broadcast %219 : vector<8x1xf32> to vector<8x8xf32>
    %221 = arith.subf %217, %220 : vector<8x8xf32>
    %222 = math.exp %221 : vector<8x8xf32>
    %cst_72 = arith.constant dense<0.000000e+00> : vector<8xf32>
    %223 = vector.multi_reduction <add>, %222, %cst_72 [1] : vector<8x8xf32> to vector<8xf32>
    %224 = vector.shape_cast %223 : vector<8xf32> to vector<8x1xf32>
    %225 = tpu.reciprocal %224 {approx = true} : vector<8x1xf32> -> vector<8x1xf32>
    %226 = vector.broadcast %225 : vector<8x1xf32> to vector<8x8xf32>
    %227 = arith.mulf %222, %226 : vector<8x8xf32>
    %228 = arith.truncf %227 : vector<8x8xf32> to vector<8x8xbf16>
    %cst_73 = arith.constant dense<0.000000e+00> : vector<8x16xf32>
    %229 = tpu.matmul %228, %216, %cst_73 {dimension_numbers = #tpu.dot_dimension_numbers<[1], [0], [0], [1], [0, 0, 1, 1], [], []>} : vector<8x8xbf16>, vector<8x16xbf16>, vector<8x16xf32> -> vector<8x16xf32>
    %230 = arith.truncf %229 : vector<8x16xf32> to vector<8x16xbf16>
    %c32_74 = arith.constant 32 : index
    %c0_75 = arith.constant 0 : index
    %231 = vector.load %arg4[%c32_74, %c0_75] : memref<128x128xbf16, #tpu.memory_space<vmem>>, vector<16x128xbf16>
    %cst_76 = arith.constant dense<0.000000e+00> : vector<8x128xf32>
    %232 = tpu.matmul %230, %231, %cst_76 {dimension_numbers = #tpu.dot_dimension_numbers<[1], [0], [0], [1], [0, 0, 1, 1], [], []>} : vector<8x16xbf16>, vector<16x128xbf16>, vector<8x128xf32> -> vector<8x128xf32>
    %233 = arith.addf %213, %232 : vector<8x128xf32>
    %234 = vector.extract_strided_slice %13 {offsets = [8, 48], sizes = [8, 16], strides = [1, 1]} : vector<16x128xbf16> to vector<8x16xbf16>
    %235 = vector.extract_strided_slice %14 {offsets = [8, 48], sizes = [8, 16], strides = [1, 1]} : vector<16x128xbf16> to vector<8x16xbf16>
    %236 = vector.extract_strided_slice %15 {offsets = [8, 48], sizes = [8, 16], strides = [1, 1]} : vector<16x128xbf16> to vector<8x16xbf16>
    %cst_77 = arith.constant dense<0.000000e+00> : vector<8x8xf32>
    %237 = tpu.matmul %234, %235, %cst_77 {dimension_numbers = #tpu.dot_dimension_numbers<[1], [1], [0], [0], [0, 0, 1, 0], [], []>} : vector<8x16xbf16>, vector<8x16xbf16>, vector<8x8xf32> -> vector<8x8xf32>
    %cst_78 = arith.constant dense<0xFF800000> : vector<8xf32>
    %238 = vector.multi_reduction <maximumf>, %237, %cst_78 [1] : vector<8x8xf32> to vector<8xf32>
    %239 = vector.shape_cast %238 : vector<8xf32> to vector<8x1xf32>
    %240 = vector.broadcast %239 : vector<8x1xf32> to vector<8x8xf32>
    %241 = arith.subf %237, %240 : vector<8x8xf32>
    %242 = math.exp %241 : vector<8x8xf32>
    %cst_79 = arith.constant dense<0.000000e+00> : vector<8xf32>
    %243 = vector.multi_reduction <add>, %242, %cst_79 [1] : vector<8x8xf32> to vector<8xf32>
    %244 = vector.shape_cast %243 : vector<8xf32> to vector<8x1xf32>
    %245 = tpu.reciprocal %244 {approx = true} : vector<8x1xf32> -> vector<8x1xf32>
    %246 = vector.broadcast %245 : vector<8x1xf32> to vector<8x8xf32>
    %247 = arith.mulf %242, %246 : vector<8x8xf32>
    %248 = arith.truncf %247 : vector<8x8xf32> to vector<8x8xbf16>
    %cst_80 = arith.constant dense<0.000000e+00> : vector<8x16xf32>
    %249 = tpu.matmul %248, %236, %cst_80 {dimension_numbers = #tpu.dot_dimension_numbers<[1], [0], [0], [1], [0, 0, 1, 1], [], []>} : vector<8x8xbf16>, vector<8x16xbf16>, vector<8x16xf32> -> vector<8x16xf32>
    %250 = arith.truncf %249 : vector<8x16xf32> to vector<8x16xbf16>
    %c48_81 = arith.constant 48 : index
    %c0_82 = arith.constant 0 : index
    %251 = vector.load %arg4[%c48_81, %c0_82] : memref<128x128xbf16, #tpu.memory_space<vmem>>, vector<16x128xbf16>
    %cst_83 = arith.constant dense<0.000000e+00> : vector<8x128xf32>
    %252 = tpu.matmul %250, %251, %cst_83 {dimension_numbers = #tpu.dot_dimension_numbers<[1], [0], [0], [1], [0, 0, 1, 1], [], []>} : vector<8x16xbf16>, vector<16x128xbf16>, vector<8x128xf32> -> vector<8x128xf32>
    %253 = arith.addf %233, %252 : vector<8x128xf32>
    %254 = vector.extract_strided_slice %13 {offsets = [8, 64], sizes = [8, 16], strides = [1, 1]} : vector<16x128xbf16> to vector<8x16xbf16>
    %255 = vector.extract_strided_slice %14 {offsets = [8, 64], sizes = [8, 16], strides = [1, 1]} : vector<16x128xbf16> to vector<8x16xbf16>
    %256 = vector.extract_strided_slice %15 {offsets = [8, 64], sizes = [8, 16], strides = [1, 1]} : vector<16x128xbf16> to vector<8x16xbf16>
    %cst_84 = arith.constant dense<0.000000e+00> : vector<8x8xf32>
    %257 = tpu.matmul %254, %255, %cst_84 {dimension_numbers = #tpu.dot_dimension_numbers<[1], [1], [0], [0], [0, 0, 1, 0], [], []>} : vector<8x16xbf16>, vector<8x16xbf16>, vector<8x8xf32> -> vector<8x8xf32>
    %cst_85 = arith.constant dense<0xFF800000> : vector<8xf32>
    %258 = vector.multi_reduction <maximumf>, %257, %cst_85 [1] : vector<8x8xf32> to vector<8xf32>
    %259 = vector.shape_cast %258 : vector<8xf32> to vector<8x1xf32>
    %260 = vector.broadcast %259 : vector<8x1xf32> to vector<8x8xf32>
    %261 = arith.subf %257, %260 : vector<8x8xf32>
    %262 = math.exp %261 : vector<8x8xf32>
    %cst_86 = arith.constant dense<0.000000e+00> : vector<8xf32>
    %263 = vector.multi_reduction <add>, %262, %cst_86 [1] : vector<8x8xf32> to vector<8xf32>
    %264 = vector.shape_cast %263 : vector<8xf32> to vector<8x1xf32>
    %265 = tpu.reciprocal %264 {approx = true} : vector<8x1xf32> -> vector<8x1xf32>
    %266 = vector.broadcast %265 : vector<8x1xf32> to vector<8x8xf32>
    %267 = arith.mulf %262, %266 : vector<8x8xf32>
    %268 = arith.truncf %267 : vector<8x8xf32> to vector<8x8xbf16>
    %cst_87 = arith.constant dense<0.000000e+00> : vector<8x16xf32>
    %269 = tpu.matmul %268, %256, %cst_87 {dimension_numbers = #tpu.dot_dimension_numbers<[1], [0], [0], [1], [0, 0, 1, 1], [], []>} : vector<8x8xbf16>, vector<8x16xbf16>, vector<8x16xf32> -> vector<8x16xf32>
    %270 = arith.truncf %269 : vector<8x16xf32> to vector<8x16xbf16>
    %c64_88 = arith.constant 64 : index
    %c0_89 = arith.constant 0 : index
    %271 = vector.load %arg4[%c64_88, %c0_89] : memref<128x128xbf16, #tpu.memory_space<vmem>>, vector<16x128xbf16>
    %cst_90 = arith.constant dense<0.000000e+00> : vector<8x128xf32>
    %272 = tpu.matmul %270, %271, %cst_90 {dimension_numbers = #tpu.dot_dimension_numbers<[1], [0], [0], [1], [0, 0, 1, 1], [], []>} : vector<8x16xbf16>, vector<16x128xbf16>, vector<8x128xf32> -> vector<8x128xf32>
    %273 = arith.addf %253, %272 : vector<8x128xf32>
    %274 = vector.extract_strided_slice %13 {offsets = [8, 80], sizes = [8, 16], strides = [1, 1]} : vector<16x128xbf16> to vector<8x16xbf16>
    %275 = vector.extract_strided_slice %14 {offsets = [8, 80], sizes = [8, 16], strides = [1, 1]} : vector<16x128xbf16> to vector<8x16xbf16>
    %276 = vector.extract_strided_slice %15 {offsets = [8, 80], sizes = [8, 16], strides = [1, 1]} : vector<16x128xbf16> to vector<8x16xbf16>
    %cst_91 = arith.constant dense<0.000000e+00> : vector<8x8xf32>
    %277 = tpu.matmul %274, %275, %cst_91 {dimension_numbers = #tpu.dot_dimension_numbers<[1], [1], [0], [0], [0, 0, 1, 0], [], []>} : vector<8x16xbf16>, vector<8x16xbf16>, vector<8x8xf32> -> vector<8x8xf32>
    %cst_92 = arith.constant dense<0xFF800000> : vector<8xf32>
    %278 = vector.multi_reduction <maximumf>, %277, %cst_92 [1] : vector<8x8xf32> to vector<8xf32>
    %279 = vector.shape_cast %278 : vector<8xf32> to vector<8x1xf32>
    %280 = vector.broadcast %279 : vector<8x1xf32> to vector<8x8xf32>
    %281 = arith.subf %277, %280 : vector<8x8xf32>
    %282 = math.exp %281 : vector<8x8xf32>
    %cst_93 = arith.constant dense<0.000000e+00> : vector<8xf32>
    %283 = vector.multi_reduction <add>, %282, %cst_93 [1] : vector<8x8xf32> to vector<8xf32>
    %284 = vector.shape_cast %283 : vector<8xf32> to vector<8x1xf32>
    %285 = tpu.reciprocal %284 {approx = true} : vector<8x1xf32> -> vector<8x1xf32>
    %286 = vector.broadcast %285 : vector<8x1xf32> to vector<8x8xf32>
    %287 = arith.mulf %282, %286 : vector<8x8xf32>
    %288 = arith.truncf %287 : vector<8x8xf32> to vector<8x8xbf16>
    %cst_94 = arith.constant dense<0.000000e+00> : vector<8x16xf32>
    %289 = tpu.matmul %288, %276, %cst_94 {dimension_numbers = #tpu.dot_dimension_numbers<[1], [0], [0], [1], [0, 0, 1, 1], [], []>} : vector<8x8xbf16>, vector<8x16xbf16>, vector<8x16xf32> -> vector<8x16xf32>
    %290 = arith.truncf %289 : vector<8x16xf32> to vector<8x16xbf16>
    %c80_95 = arith.constant 80 : index
    %c0_96 = arith.constant 0 : index
    %291 = vector.load %arg4[%c80_95, %c0_96] : memref<128x128xbf16, #tpu.memory_space<vmem>>, vector<16x128xbf16>
    %cst_97 = arith.constant dense<0.000000e+00> : vector<8x128xf32>
    %292 = tpu.matmul %290, %291, %cst_97 {dimension_numbers = #tpu.dot_dimension_numbers<[1], [0], [0], [1], [0, 0, 1, 1], [], []>} : vector<8x16xbf16>, vector<16x128xbf16>, vector<8x128xf32> -> vector<8x128xf32>
    %293 = arith.addf %273, %292 : vector<8x128xf32>
    %294 = vector.extract_strided_slice %13 {offsets = [8, 96], sizes = [8, 16], strides = [1, 1]} : vector<16x128xbf16> to vector<8x16xbf16>
    %295 = vector.extract_strided_slice %14 {offsets = [8, 96], sizes = [8, 16], strides = [1, 1]} : vector<16x128xbf16> to vector<8x16xbf16>
    %296 = vector.extract_strided_slice %15 {offsets = [8, 96], sizes = [8, 16], strides = [1, 1]} : vector<16x128xbf16> to vector<8x16xbf16>
    %cst_98 = arith.constant dense<0.000000e+00> : vector<8x8xf32>
    %297 = tpu.matmul %294, %295, %cst_98 {dimension_numbers = #tpu.dot_dimension_numbers<[1], [1], [0], [0], [0, 0, 1, 0], [], []>} : vector<8x16xbf16>, vector<8x16xbf16>, vector<8x8xf32> -> vector<8x8xf32>
    %cst_99 = arith.constant dense<0xFF800000> : vector<8xf32>
    %298 = vector.multi_reduction <maximumf>, %297, %cst_99 [1] : vector<8x8xf32> to vector<8xf32>
    %299 = vector.shape_cast %298 : vector<8xf32> to vector<8x1xf32>
    %300 = vector.broadcast %299 : vector<8x1xf32> to vector<8x8xf32>
    %301 = arith.subf %297, %300 : vector<8x8xf32>
    %302 = math.exp %301 : vector<8x8xf32>
    %cst_100 = arith.constant dense<0.000000e+00> : vector<8xf32>
    %303 = vector.multi_reduction <add>, %302, %cst_100 [1] : vector<8x8xf32> to vector<8xf32>
    %304 = vector.shape_cast %303 : vector<8xf32> to vector<8x1xf32>
    %305 = tpu.reciprocal %304 {approx = true} : vector<8x1xf32> -> vector<8x1xf32>
    %306 = vector.broadcast %305 : vector<8x1xf32> to vector<8x8xf32>
    %307 = arith.mulf %302, %306 : vector<8x8xf32>
    %308 = arith.truncf %307 : vector<8x8xf32> to vector<8x8xbf16>
    %cst_101 = arith.constant dense<0.000000e+00> : vector<8x16xf32>
    %309 = tpu.matmul %308, %296, %cst_101 {dimension_numbers = #tpu.dot_dimension_numbers<[1], [0], [0], [1], [0, 0, 1, 1], [], []>} : vector<8x8xbf16>, vector<8x16xbf16>, vector<8x16xf32> -> vector<8x16xf32>
    %310 = arith.truncf %309 : vector<8x16xf32> to vector<8x16xbf16>
    %c96_102 = arith.constant 96 : index
    %c0_103 = arith.constant 0 : index
    %311 = vector.load %arg4[%c96_102, %c0_103] : memref<128x128xbf16, #tpu.memory_space<vmem>>, vector<16x128xbf16>
    %cst_104 = arith.constant dense<0.000000e+00> : vector<8x128xf32>
    %312 = tpu.matmul %310, %311, %cst_104 {dimension_numbers = #tpu.dot_dimension_numbers<[1], [0], [0], [1], [0, 0, 1, 1], [], []>} : vector<8x16xbf16>, vector<16x128xbf16>, vector<8x128xf32> -> vector<8x128xf32>
    %313 = arith.addf %293, %312 : vector<8x128xf32>
    %314 = vector.extract_strided_slice %13 {offsets = [8, 112], sizes = [8, 16], strides = [1, 1]} : vector<16x128xbf16> to vector<8x16xbf16>
    %315 = vector.extract_strided_slice %14 {offsets = [8, 112], sizes = [8, 16], strides = [1, 1]} : vector<16x128xbf16> to vector<8x16xbf16>
    %316 = vector.extract_strided_slice %15 {offsets = [8, 112], sizes = [8, 16], strides = [1, 1]} : vector<16x128xbf16> to vector<8x16xbf16>
    %cst_105 = arith.constant dense<0.000000e+00> : vector<8x8xf32>
    %317 = tpu.matmul %314, %315, %cst_105 {dimension_numbers = #tpu.dot_dimension_numbers<[1], [1], [0], [0], [0, 0, 1, 0], [], []>} : vector<8x16xbf16>, vector<8x16xbf16>, vector<8x8xf32> -> vector<8x8xf32>
    %cst_106 = arith.constant dense<0xFF800000> : vector<8xf32>
    %318 = vector.multi_reduction <maximumf>, %317, %cst_106 [1] : vector<8x8xf32> to vector<8xf32>
    %319 = vector.shape_cast %318 : vector<8xf32> to vector<8x1xf32>
    %320 = vector.broadcast %319 : vector<8x1xf32> to vector<8x8xf32>
    %321 = arith.subf %317, %320 : vector<8x8xf32>
    %322 = math.exp %321 : vector<8x8xf32>
    %cst_107 = arith.constant dense<0.000000e+00> : vector<8xf32>
    %323 = vector.multi_reduction <add>, %322, %cst_107 [1] : vector<8x8xf32> to vector<8xf32>
    %324 = vector.shape_cast %323 : vector<8xf32> to vector<8x1xf32>
    %325 = tpu.reciprocal %324 {approx = true} : vector<8x1xf32> -> vector<8x1xf32>
    %326 = vector.broadcast %325 : vector<8x1xf32> to vector<8x8xf32>
    %327 = arith.mulf %322, %326 : vector<8x8xf32>
    %328 = arith.truncf %327 : vector<8x8xf32> to vector<8x8xbf16>
    %cst_108 = arith.constant dense<0.000000e+00> : vector<8x16xf32>
    %329 = tpu.matmul %328, %316, %cst_108 {dimension_numbers = #tpu.dot_dimension_numbers<[1], [0], [0], [1], [0, 0, 1, 1], [], []>} : vector<8x8xbf16>, vector<8x16xbf16>, vector<8x16xf32> -> vector<8x16xf32>
    %330 = arith.truncf %329 : vector<8x16xf32> to vector<8x16xbf16>
    %c112_109 = arith.constant 112 : index
    %c0_110 = arith.constant 0 : index
    %331 = vector.load %arg4[%c112_109, %c0_110] : memref<128x128xbf16, #tpu.memory_space<vmem>>, vector<16x128xbf16>
    %cst_111 = arith.constant dense<0.000000e+00> : vector<8x128xf32>
    %332 = tpu.matmul %330, %331, %cst_111 {dimension_numbers = #tpu.dot_dimension_numbers<[1], [0], [0], [1], [0, 0, 1, 1], [], []>} : vector<8x16xbf16>, vector<16x128xbf16>, vector<8x128xf32> -> vector<8x128xf32>
    %333 = arith.addf %313, %332 : vector<8x128xf32>
    %334 = tpu.concatenate %174, %333 in 0 : vector<8x128xf32>, vector<8x128xf32> -> vector<16x128xf32>
    %c0_112 = arith.constant 0 : index
    %c0_113 = arith.constant 0 : index
    %335 = vector.load %arg5[%c0_112, %c0_113] : memref<1x128xf32, #tpu.memory_space<vmem>>, vector<1x128xf32>
    %336 = vector.broadcast %335 : vector<1x128xf32> to vector<16x128xf32>
    %337 = arith.addf %334, %336 : vector<16x128xf32>
    %338 = arith.addf %1, %337 : vector<16x128xf32>
    %c0_114 = arith.constant 0 : index
    %c0_115 = arith.constant 0 : index
    %339 = vector.load %arg6[%c0_114, %c0_115] : memref<1x128xf32, #tpu.memory_space<vmem>>, vector<1x128xf32>
    %c0_116 = arith.constant 0 : index
    %c0_117 = arith.constant 0 : index
    %340 = vector.load %arg7[%c0_116, %c0_117] : memref<1x128xf32, #tpu.memory_space<vmem>>, vector<1x128xf32>
    %cst_118 = arith.constant dense<0.000000e+00> : vector<16xf32>
    %341 = vector.multi_reduction <add>, %338, %cst_118 [1] : vector<16x128xf32> to vector<16xf32>
    %342 = vector.shape_cast %341 : vector<16xf32> to vector<16x1xf32>
    %cst_119 = arith.constant 1.280000e+02 : f32
    %343 = vector.broadcast %cst_119 : f32 to vector<16x1xf32>
    %344 = arith.divf %342, %343 : vector<16x1xf32>
    %345 = vector.broadcast %344 : vector<16x1xf32> to vector<16x128xf32>
    %346 = arith.subf %338, %345 : vector<16x128xf32>
    %347 = arith.mulf %346, %346 : vector<16x128xf32>
    %cst_120 = arith.constant dense<0.000000e+00> : vector<16xf32>
    %348 = vector.multi_reduction <add>, %347, %cst_120 [1] : vector<16x128xf32> to vector<16xf32>
    %349 = vector.shape_cast %348 : vector<16xf32> to vector<16x1xf32>
    %cst_121 = arith.constant 1.280000e+02 : f32
    %350 = vector.broadcast %cst_121 : f32 to vector<16x1xf32>
    %351 = arith.divf %349, %350 : vector<16x1xf32>
    %cst_122 = arith.constant 9.99999974E-6 : f32
    %352 = vector.broadcast %cst_122 : f32 to vector<16x1xf32>
    %353 = arith.addf %351, %352 : vector<16x1xf32>
    %354 = math.rsqrt %353 : vector<16x1xf32>
    %355 = vector.broadcast %354 : vector<16x1xf32> to vector<16x128xf32>
    %356 = arith.mulf %346, %355 : vector<16x128xf32>
    %357 = vector.broadcast %339 : vector<1x128xf32> to vector<16x128xf32>
    %358 = arith.mulf %356, %357 : vector<16x128xf32>
    %359 = vector.broadcast %340 : vector<1x128xf32> to vector<16x128xf32>
    %360 = arith.addf %358, %359 : vector<16x128xf32>
    %361 = arith.truncf %360 : vector<16x128xf32> to vector<16x128xbf16>
    %c0_123 = arith.constant 0 : index
    %c0_124 = arith.constant 0 : index
    %362 = vector.load %arg8[%c0_123, %c0_124] : memref<128x128xbf16, #tpu.memory_space<vmem>>, vector<128x128xbf16>
    %cst_125 = arith.constant dense<0.000000e+00> : vector<16x128xf32>
    %363 = tpu.matmul %361, %362, %cst_125 {dimension_numbers = #tpu.dot_dimension_numbers<[1], [0], [0], [1], [0, 0, 1, 1], [], []>} : vector<16x128xbf16>, vector<128x128xbf16>, vector<16x128xf32> -> vector<16x128xf32>
    %c0_126 = arith.constant 0 : index
    %c0_127 = arith.constant 0 : index
    %364 = vector.load %arg9[%c0_126, %c0_127] : memref<1x128xf32, #tpu.memory_space<vmem>>, vector<1x128xf32>
    %365 = vector.broadcast %364 : vector<1x128xf32> to vector<16x128xf32>
    %366 = arith.addf %363, %365 : vector<16x128xf32>
    %cst_128 = arith.constant 0.000000e+00 : f32
    %367 = vector.broadcast %cst_128 : f32 to vector<16x128xf32>
    %368 = arith.maximumf %366, %367 : vector<16x128xf32>
    %369 = arith.truncf %368 : vector<16x128xf32> to vector<16x128xbf16>
    %c0_129 = arith.constant 0 : index
    %c0_130 = arith.constant 0 : index
    %370 = vector.load %arg10[%c0_129, %c0_130] : memref<128x128xbf16, #tpu.memory_space<vmem>>, vector<128x128xbf16>
    %cst_131 = arith.constant dense<0.000000e+00> : vector<16x128xf32>
    %371 = tpu.matmul %369, %370, %cst_131 {dimension_numbers = #tpu.dot_dimension_numbers<[1], [0], [0], [1], [0, 0, 1, 1], [], []>} : vector<16x128xbf16>, vector<128x128xbf16>, vector<16x128xf32> -> vector<16x128xf32>
    %c0_132 = arith.constant 0 : index
    %c0_133 = arith.constant 0 : index
    %372 = vector.load %arg11[%c0_132, %c0_133] : memref<1x128xf32, #tpu.memory_space<vmem>>, vector<1x128xf32>
    %373 = vector.broadcast %372 : vector<1x128xf32> to vector<16x128xf32>
    %374 = arith.addf %371, %373 : vector<16x128xf32>
    %375 = arith.addf %360, %374 : vector<16x128xf32>
    %c0_134 = arith.constant 0 : index
    %c0_135 = arith.constant 0 : index
    %376 = vector.load %arg12[%c0_134, %c0_135] : memref<1x128xf32, #tpu.memory_space<vmem>>, vector<1x128xf32>
    %c0_136 = arith.constant 0 : index
    %c0_137 = arith.constant 0 : index
    %377 = vector.load %arg13[%c0_136, %c0_137] : memref<1x128xf32, #tpu.memory_space<vmem>>, vector<1x128xf32>
    %cst_138 = arith.constant dense<0.000000e+00> : vector<16xf32>
    %378 = vector.multi_reduction <add>, %375, %cst_138 [1] : vector<16x128xf32> to vector<16xf32>
    %379 = vector.shape_cast %378 : vector<16xf32> to vector<16x1xf32>
    %cst_139 = arith.constant 1.280000e+02 : f32
    %380 = vector.broadcast %cst_139 : f32 to vector<16x1xf32>
    %381 = arith.divf %379, %380 : vector<16x1xf32>
    %382 = vector.broadcast %381 : vector<16x1xf32> to vector<16x128xf32>
    %383 = arith.subf %375, %382 : vector<16x128xf32>
    %384 = arith.mulf %383, %383 : vector<16x128xf32>
    %cst_140 = arith.constant dense<0.000000e+00> : vector<16xf32>
    %385 = vector.multi_reduction <add>, %384, %cst_140 [1] : vector<16x128xf32> to vector<16xf32>
    %386 = vector.shape_cast %385 : vector<16xf32> to vector<16x1xf32>
    %cst_141 = arith.constant 1.280000e+02 : f32
    %387 = vector.broadcast %cst_141 : f32 to vector<16x1xf32>
    %388 = arith.divf %386, %387 : vector<16x1xf32>
    %cst_142 = arith.constant 9.99999974E-6 : f32
    %389 = vector.broadcast %cst_142 : f32 to vector<16x1xf32>
    %390 = arith.addf %388, %389 : vector<16x1xf32>
    %391 = math.rsqrt %390 : vector<16x1xf32>
    %392 = vector.broadcast %391 : vector<16x1xf32> to vector<16x128xf32>
    %393 = arith.mulf %383, %392 : vector<16x128xf32>
    %394 = vector.broadcast %376 : vector<1x128xf32> to vector<16x128xf32>
    %395 = arith.mulf %393, %394 : vector<16x128xf32>
    %396 = vector.broadcast %377 : vector<1x128xf32> to vector<16x128xf32>
    %397 = arith.addf %395, %396 : vector<16x128xf32>
    %398 = vector.shape_cast %397 : vector<16x128xf32> to vector<2x8x128xf32>
    %c0_143 = arith.constant 0 : index
    %c0_144 = arith.constant 0 : index
    %399 = vector.load %arg14[%c0_143, %c0_144] : memref<1x128xf32, #tpu.memory_space<vmem>>, vector<1x128xf32>
    %400 = vector.shape_cast %399 : vector<1x128xf32> to vector<1x1x128xf32>
    %401 = vector.broadcast %400 : vector<1x1x128xf32> to vector<2x8x128xf32>
    %402 = arith.mulf %398, %401 : vector<2x8x128xf32>
    %cst_145 = arith.constant dense<0.000000e+00> : vector<2x8xf32>
    %403 = vector.multi_reduction <add>, %402, %cst_145 [2] : vector<2x8x128xf32> to vector<2x8xf32>
    %c0_146 = arith.constant 0 : index
    %c0_147 = arith.constant 0 : index
    %404 = vector.load %arg15[%c0_146, %c0_147] : memref<1x1xf32, #tpu.memory_space<vmem>>, vector<1x1xf32>
    %405 = vector.broadcast %404 : vector<1x1xf32> to vector<2x8xf32>
    %406 = arith.addf %403, %405 : vector<2x8xf32>
    %407 = arith.negf %406 : vector<2x8xf32>
    %408 = math.exp %407 : vector<2x8xf32>
    %cst_148 = arith.constant 1.000000e+00 : f32
    %409 = vector.broadcast %cst_148 : f32 to vector<2x8xf32>
    %410 = arith.addf %409, %408 : vector<2x8xf32>
    %411 = arith.divf %409, %410 : vector<2x8xf32>
    %412 = vector.shape_cast %411 : vector<2x8xf32> to vector<1x2x8xf32>
    %c0_149 = arith.constant 0 : index
    %c0_150 = arith.constant 0 : index
    %c0_151 = arith.constant 0 : index
    %413 = vector.load %arg16[%c0_149, %c0_150, %c0_151] : memref<1x2x8xf32, #tpu.memory_space<vmem>>, vector<1x2x8xf32>
    tpu.vector_store %arg16[%c0_149, %c0_150, %c0_151], %412 {strides = array<i32>} : memref<1x2x8xf32, #tpu.memory_space<vmem>>, vector<1x2x8xf32>,
    return
  }
  func.func @transform_0(%arg0: i32) -> (i32, i32, i32) {
    %c0_i32 = arith.constant 0 : i32
    %c0_i32_0 = arith.constant 0 : i32
    %c0_i32_1 = arith.constant 0 : i32
    return %arg0, %c0_i32, %c0_i32_0 : i32, i32, i32
  }
  func.func @transform_1(%arg0: i32) -> (i32, i32) {
    %c0_i32 = arith.constant 0 : i32
    %c0_i32_0 = arith.constant 0 : i32
    %c0_i32_1 = arith.constant 0 : i32
    return %c0_i32, %c0_i32_0 : i32, i32
  }
  func.func @transform_2(%arg0: i32) -> (i32, i32) {
    %c0_i32 = arith.constant 0 : i32
    %c0_i32_0 = arith.constant 0 : i32
    %c0_i32_1 = arith.constant 0 : i32
    return %c0_i32, %c0_i32_0 : i32, i32
  }
  func.func @transform_3(%arg0: i32) -> (i32, i32) {
    %c0_i32 = arith.constant 0 : i32
    %c0_i32_0 = arith.constant 0 : i32
    %c0_i32_1 = arith.constant 0 : i32
    return %c0_i32, %c0_i32_0 : i32, i32
  }
  func.func @transform_4(%arg0: i32) -> (i32, i32) {
    %c0_i32 = arith.constant 0 : i32
    %c0_i32_0 = arith.constant 0 : i32
    %c0_i32_1 = arith.constant 0 : i32
    return %c0_i32, %c0_i32_0 : i32, i32
  }
  func.func @transform_5(%arg0: i32) -> (i32, i32) {
    %c0_i32 = arith.constant 0 : i32
    %c0_i32_0 = arith.constant 0 : i32
    %c0_i32_1 = arith.constant 0 : i32
    return %c0_i32, %c0_i32_0 : i32, i32
  }
  func.func @transform_6(%arg0: i32) -> (i32, i32) {
    %c0_i32 = arith.constant 0 : i32
    %c0_i32_0 = arith.constant 0 : i32
    %c0_i32_1 = arith.constant 0 : i32
    return %c0_i32, %c0_i32_0 : i32, i32
  }
  func.func @transform_7(%arg0: i32) -> (i32, i32) {
    %c0_i32 = arith.constant 0 : i32
    %c0_i32_0 = arith.constant 0 : i32
    %c0_i32_1 = arith.constant 0 : i32
    return %c0_i32, %c0_i32_0 : i32, i32
  }
  func.func @transform_8(%arg0: i32) -> (i32, i32) {
    %c0_i32 = arith.constant 0 : i32
    %c0_i32_0 = arith.constant 0 : i32
    %c0_i32_1 = arith.constant 0 : i32
    return %c0_i32, %c0_i32_0 : i32, i32
  }
  func.func @transform_9(%arg0: i32) -> (i32, i32) {
    %c0_i32 = arith.constant 0 : i32
    %c0_i32_0 = arith.constant 0 : i32
    %c0_i32_1 = arith.constant 0 : i32
    return %c0_i32, %c0_i32_0 : i32, i32
  }
  func.func @transform_10(%arg0: i32) -> (i32, i32) {
    %c0_i32 = arith.constant 0 : i32
    %c0_i32_0 = arith.constant 0 : i32
    %c0_i32_1 = arith.constant 0 : i32
    return %c0_i32, %c0_i32_0 : i32, i32
  }
  func.func @transform_11(%arg0: i32) -> (i32, i32) {
    %c0_i32 = arith.constant 0 : i32
    %c0_i32_0 = arith.constant 0 : i32
    %c0_i32_1 = arith.constant 0 : i32
    return %c0_i32, %c0_i32_0 : i32, i32
  }
  func.func @transform_12(%arg0: i32) -> (i32, i32) {
    %c0_i32 = arith.constant 0 : i32
    %c0_i32_0 = arith.constant 0 : i32
    %c0_i32_1 = arith.constant 0 : i32
    return %c0_i32, %c0_i32_0 : i32, i32
  }
  func.func @transform_13(%arg0: i32) -> (i32, i32) {
    %c0_i32 = arith.constant 0 : i32
    %c0_i32_0 = arith.constant 0 : i32
    %c0_i32_1 = arith.constant 0 : i32
    return %c0_i32, %c0_i32_0 : i32, i32
  }
  func.func @transform_14(%arg0: i32) -> (i32, i32) {
    %c0_i32 = arith.constant 0 : i32
    %c0_i32_0 = arith.constant 0 : i32
    %c0_i32_1 = arith.constant 0 : i32
    return %c0_i32, %c0_i32_0 : i32, i32
  }
  func.func @transform_15(%arg0: i32) -> (i32, i32, i32) {
    %c0_i32 = arith.constant 0 : i32
    %c0_i32_0 = arith.constant 0 : i32
    %c0_i32_1 = arith.constant 0 : i32
    return %arg0, %c0_i32, %c0_i32_0 : i32, i32, i32
  }
}

</mosaic_0001>

<llo_original>
// kernel: tpu_custom_call.1
$region0: #{tpu_custom_call.1}
  #allocation0 [shape = 'u32[]', space=smem, size = 0x4, offset = 0x4, fixed_abs, tag = 'smem constant byte address 0x4 - core index']
  #allocation1 [shape = 'u32[72,128]{1,0:T(1,128)}', space=vmem, size = 0x9000, scoped, tag = 'internal scratch']
  #allocation2 [shape = 'f32[1,1]{1,0:T(1,128)S(1)}', space=vmem, size = 0x200, scoped, tag = 'scoped memory for tpu_custom_call.1']
  %s0 = inlined_call_operand.hbm [shape: f32[4,8,128], index: 0, kind: input, shape index: {}]
  %s1 = inlined_call_operand.hbm [shape: bf16[128,384], index: 1, kind: input, shape index: {}]
  %s2 = inlined_call_operand.vmem [shape: f32[1,384], index: 2, kind: input, shape index: {}]
  %s3 = inlined_call_operand.hbm [shape: bf16[128,128], index: 3, kind: input, shape index: {}]
  %s4 = inlined_call_operand.vmem [shape: f32[1,128], index: 4, kind: input, shape index: {}]
  %s5 = inlined_call_operand.vmem [shape: f32[1,128], index: 5, kind: input, shape index: {}]
  %s6 = inlined_call_operand.vmem [shape: f32[1,128], index: 6, kind: input, shape index: {}]
  %s7 = inlined_call_operand.hbm [shape: bf16[128,128], index: 7, kind: input, shape index: {}]
  %s8 = inlined_call_operand.vmem [shape: f32[1,128], index: 8, kind: input, shape index: {}]
  %s9 = inlined_call_operand.hbm [shape: bf16[128,128], index: 9, kind: input, shape index: {}]
  %s10 = inlined_call_operand.vmem [shape: f32[1,128], index: 10, kind: input, shape index: {}]
  %s11 = inlined_call_operand.vmem [shape: f32[1,128], index: 11, kind: input, shape index: {}]
  %s12 = inlined_call_operand.vmem [shape: f32[1,128], index: 12, kind: input, shape index: {}]
  %s13 = inlined_call_operand.vmem [shape: f32[1,128], index: 13, kind: input, shape index: {}]
  %s14 = inlined_call_operand.<no memory space> [shape: f32[1,1], index: 14, kind: input, shape index: {}]
  %s15 = inlined_call_operand.hbm [shape: f32[2,2,8], index: 15, kind: output, shape index: {}]
  %s16 = sld [smem:[#allocation0]]
  $region113: #{tpu_custom_call.1} parent=0
    _
  %s18 = ssub.s32 1, %s16
  %s19 = scalar_select 0, %s18, %s16
  %v20 = vstv %s14
  %21 = vst [vmem:[#allocation2] sm:$0x1] %v20
  $region1: #{tpu_custom_call.1} parent=0
    #allocation3 [shape = 'u8[16384]{0}', space=vmem, size = 0x4000, scoped, tag = 'input window, operand 0']
    #allocation4 [shape = 's32[2]{0}', space=sflag, size = 0x8, scoped, tag = 'scoped memory for tpu_custom_call.1']
    #allocation5 [shape = 's32[2]{0}', space=sflag, size = 0x8, scoped, tag = 'scoped memory for tpu_custom_call.1']
    #allocation6 [shape = 'u8[98304]{0}', space=vmem, size = 0x18000, scoped, tag = 'input window, operand 1, single buffered']
    #allocation7 [shape = 's32[1]{0}', space=sflag, size = 0x4, scoped, tag = 'scoped memory for tpu_custom_call.1']
    #allocation8 [shape = 'u8[32768]{0}', space=vmem, size = 0x8000, scoped, tag = 'input window, operand 3, single buffered']
    #allocation9 [shape = 'u8[32768]{0}', space=vmem, size = 0x8000, scoped, tag = 'input window, operand 7, single buffered']
    #allocation10 [shape = 's32[1]{0}', space=sflag, size = 0x4, scoped, tag = 'scoped memory for tpu_custom_call.1']
    #allocation11 [shape = 'u8[32768]{0}', space=vmem, size = 0x8000, scoped, tag = 'input window, operand 9, single buffered']
    #allocation12 [shape = 'u8[2048]{0}', space=vmem, size = 0x800, scoped, tag = 'output window, operand 0']
    %22 = vsyncpa [#allocation4], 0
    %s23 = scalar_lea.sflag [#allocation4], 1
    %24 = vsyncpa %s23, 0
    %25 = vsyncpa [#allocation7], 0
    %26 = vsyncpa [#allocation10], 0
    %27 = vsyncpa [#allocation5], 0
    %s28 = scalar_lea.sflag [#allocation5], 1
    %29 = vsyncpa %s28, 0
    loop: start=0, step=1, limit=4
    $region2: #{tpu_custom_call.1} parent=1 // loop_pre_header
      _
    $region3: #{tpu_custom_call.1} parent=1 // loop_header
      %s31 = sphi 0, %s35
      %p32 = scmp.ge.s32.totalorder %s31, 4
      %s41 = sphi 0, %s43
      %s44 = sphi 0, %s41
      %s45 = sphi 0, %s44
      %s61 = sphi 0, %s45
      %s65 = sphi 0, %s65
      %s67 = sphi 0, %s65
      %s68 = sphi 0, %s67
      %s82 = sphi 0, %s68
      %s86 = sphi 0, %s86
      %s88 = sphi 0, %s86
      %s89 = sphi 0, %s88
      %s103 = sphi 0, %s89
      %s107 = sphi 0, %s107
      %s109 = sphi 0, %s107
      %s110 = sphi 0, %s109
      %s124 = sphi 0, %s110
      %s128 = sphi 0, %s128
      %s130 = sphi 0, %s128
      %s131 = sphi 0, %s130
      %s145 = sphi 0, %s131
      %s149 = sphi 0, %s149
      %s151 = sphi 0, %s149
      %s152 = sphi 0, %s151
      %s166 = sphi 0, %s152
      %s170 = sphi 0, %s170
      %s172 = sphi 0, %s170
      %s173 = sphi 0, %s172
      %s187 = sphi 0, %s173
      %s191 = sphi 0, %s191
      %s193 = sphi 0, %s191
      %s194 = sphi 0, %s193
      %s208 = sphi 0, %s194
      %s212 = sphi 0, %s212
      %s214 = sphi 0, %s212
      %s215 = sphi 0, %s214
      %s229 = sphi 0, %s215
      %s233 = sphi 0, %s233
      %s235 = sphi 0, %s233
      %s236 = sphi 0, %s235
      %s250 = sphi 0, %s236
      %s254 = sphi 0, %s254
      %s256 = sphi 0, %s254
      %s257 = sphi 0, %s256
      %s271 = sphi 0, %s257
      %s275 = sphi 0, %s275
      %s277 = sphi 0, %s275
      %s278 = sphi 0, %s277
      %s292 = sphi 0, %s278
      %s296 = sphi 0, %s296
      %s298 = sphi 0, %s296
      %s299 = sphi 0, %s298
      %s313 = sphi 0, %s299
      %s317 = sphi 0, %s317
      %s319 = sphi 0, %s317
      %s320 = sphi 0, %s319
      %s334 = sphi 0, %s320
      %s338 = sphi 0, %s338
      %s340 = sphi 0, %s338
      %s341 = sphi 0, %s340
      %s355 = sphi 0, %s341
      %s361 = sphi 0, %s363
      %s364 = sphi 0, %s361
      %s365 = sphi 0, %s364
      %s381 = sphi 0, %s365
    $region4: #{tpu_custom_call.1} parent=1 // loop_header_branch
      %34 = sbr.rel (%p32) target = $region8
    $region5: #{tpu_custom_call.1} parent=1 // loop_body
      %s36 = ssub.s32 %s31, 1
      %s37 = ssub.s32 %s31, 2
      %s38 = sadd.s32 %s31, 1
      %s39 = ssub.s32 %s31, %s38
      %p40 = scmp.eq.s32.totalorder %s39, 0
      %s42 = sadd.s32 %s41, 1
      %s43 = scalar_select %p40, %s41, %s42
      %p46 = pneg %p40
      %p47 = scmp.eq.s32.totalorder %s31, 1
      %p48 = por %p46, %p47
      %p49 = scmp.ne.s32.totalorder %s41, %s44
      %p50 = scmp.eq.s32.totalorder %s31, 0
      %p51 = por %p49, %p50
      %p52 = scmp.ne.s32.totalorder %s41, %s44
      %p53 = scmp.eq.s32.totalorder %s36, 1
      %p54 = por %p52, %p53
      %p55 = scmp.ne.s32.totalorder %s44, %s45
      %p56 = scmp.eq.s32.totalorder %s36, 0
      %p57 = por %p55, %p56
      %p58 = scmp.ne.s32.totalorder %s44, %s45
      %p59 = scmp.eq.s32.totalorder %s37, 1
      %p60 = por %p58, %p59
      %p62 = scmp.ne.s32.totalorder %s45, %s61
      %p63 = scmp.eq.s32.totalorder %s37, 0
      %p64 = por %p62, %p63
      %s66 = sadd.s32 %s65, 1
      %p69 = scmp.eq.s32.totalorder %s31, 1
      %p70 = scmp.ne.s32.totalorder %s65, %s67
      %p71 = scmp.eq.s32.totalorder %s31, 0
      %p72 = por %p70, %p71
      %p73 = scmp.ne.s32.totalorder %s65, %s67
      %p74 = scmp.eq.s32.totalorder %s36, 1
      %p75 = por %p73, %p74
      %p76 = scmp.ne.s32.totalorder %s67, %s68
      %p77 = scmp.eq.s32.totalorder %s36, 0
      %p78 = por %p76, %p77
      %p79 = scmp.ne.s32.totalorder %s67, %s68
      %p80 = scmp.eq.s32.totalorder %s37, 1
      %p81 = por %p79, %p80
      %p83 = scmp.ne.s32.totalorder %s68, %s82
      %p84 = scmp.eq.s32.totalorder %s37, 0
      %p85 = por %p83, %p84
      %s87 = sadd.s32 %s86, 1
      %p90 = scmp.eq.s32.totalorder %s31, 1
      %p91 = scmp.ne.s32.totalorder %s86, %s88
      %p92 = scmp.eq.s32.totalorder %s31, 0
      %p93 = por %p91, %p92
      %p94 = scmp.ne.s32.totalorder %s86, %s88
      %p95 = scmp.eq.s32.totalorder %s36, 1
      %p96 = por %p94, %p95
      %p97 = scmp.ne.s32.totalorder %s88, %s89
      %p98 = scmp.eq.s32.totalorder %s36, 0
      %p99 = por %p97, %p98
      %p100 = scmp.ne.s32.totalorder %s88, %s89
      %p101 = scmp.eq.s32.totalorder %s37, 1
      %p102 = por %p100, %p101
      %p104 = scmp.ne.s32.totalorder %s89, %s103
      %p105 = scmp.eq.s32.totalorder %s37, 0
      %p106 = por %p104, %p105
      %s108 = sadd.s32 %s107, 1
      %p111 = scmp.eq.s32.totalorder %s31, 1
      %p112 = scmp.ne.s32.totalorder %s107, %s109
      %p113 = scmp.eq.s32.totalorder %s31, 0
      %p114 = por %p112, %p113
      %p115 = scmp.ne.s32.totalorder %s107, %s109
      %p116 = scmp.eq.s32.totalorder %s36, 1
      %p117 = por %p115, %p116
      %p118 = scmp.ne.s32.totalorder %s109, %s110
      %p119 = scmp.eq.s32.totalorder %s36, 0
      %p120 = por %p118, %p119
      %p121 = scmp.ne.s32.totalorder %s109, %s110
      %p122 = scmp.eq.s32.totalorder %s37, 1
      %p123 = por %p121, %p122
      %p125 = scmp.ne.s32.totalorder %s110, %s124
      %p126 = scmp.eq.s32.totalorder %s37, 0
      %p127 = por %p125, %p126
      %s129 = sadd.s32 %s128, 1
      %p132 = scmp.eq.s32.totalorder %s31, 1
      %p133 = scmp.ne.s32.totalorder %s128, %s130
      %p134 = scmp.eq.s32.totalorder %s31, 0
      %p135 = por %p133, %p134
      %p136 = scmp.ne.s32.totalorder %s128, %s130
      %p137 = scmp.eq.s32.totalorder %s36, 1
      %p138 = por %p136, %p137
      %p139 = scmp.ne.s32.totalorder %s130, %s131
      %p140 = scmp.eq.s32.totalorder %s36, 0
      %p141 = por %p139, %p140
      %p142 = scmp.ne.s32.totalorder %s130, %s131
      %p143 = scmp.eq.s32.totalorder %s37, 1
      %p144 = por %p142, %p143
      %p146 = scmp.ne.s32.totalorder %s131, %s145
      %p147 = scmp.eq.s32.totalorder %s37, 0
      %p148 = por %p146, %p147
      %s150 = sadd.s32 %s149, 1
      %p153 = scmp.eq.s32.totalorder %s31, 1
      %p154 = scmp.ne.s32.totalorder %s149, %s151
      %p155 = scmp.eq.s32.totalorder %s31, 0
      %p156 = por %p154, %p155
      %p157 = scmp.ne.s32.totalorder %s149, %s151
      %p158 = scmp.eq.s32.totalorder %s36, 1
      %p159 = por %p157, %p158
      %p160 = scmp.ne.s32.totalorder %s151, %s152
      %p161 = scmp.eq.s32.totalorder %s36, 0
      %p162 = por %p160, %p161
      %p163 = scmp.ne.s32.totalorder %s151, %s152
      %p164 = scmp.eq.s32.totalorder %s37, 1
      %p165 = por %p163, %p164
      %p167 = scmp.ne.s32.totalorder %s152, %s166
      %p168 = scmp.eq.s32.totalorder %s37, 0
      %p169 = por %p167, %p168
      %s171 = sadd.s32 %s170, 1
      %p174 = scmp.eq.s32.totalorder %s31, 1
      %p175 = scmp.ne.s32.totalorder %s170, %s172
      %p176 = scmp.eq.s32.totalorder %s31, 0
      %p177 = por %p175, %p176
      %p178 = scmp.ne.s32.totalorder %s170, %s172
      %p179 = scmp.eq.s32.totalorder %s36, 1
      %p180 = por %p178, %p179
      %p181 = scmp.ne.s32.totalorder %s172, %s173
      %p182 = scmp.eq.s32.totalorder %s36, 0
      %p183 = por %p181, %p182
      %p184 = scmp.ne.s32.totalorder %s172, %s173
      %p185 = scmp.eq.s32.totalorder %s37, 1
      %p186 = por %p184, %p185
      %p188 = scmp.ne.s32.totalorder %s173, %s187
      %p189 = scmp.eq.s32.totalorder %s37, 0
      %p190 = por %p188, %p189
      %s192 = sadd.s32 %s191, 1
      %p195 = scmp.eq.s32.totalorder %s31, 1
      %p196 = scmp.ne.s32.totalorder %s191, %s193
      %p197 = scmp.eq.s32.totalorder %s31, 0
      %p198 = por %p196, %p197
      %p199 = scmp.ne.s32.totalorder %s191, %s193
      %p200 = scmp.eq.s32.totalorder %s36, 1
      %p201 = por %p199, %p200
      %p202 = scmp.ne.s32.totalorder %s193, %s194
      %p203 = scmp.eq.s32.totalorder %s36, 0
      %p204 = por %p202, %p203
      %p205 = scmp.ne.s32.totalorder %s193, %s194
      %p206 = scmp.eq.s32.totalorder %s37, 1
      %p207 = por %p205, %p206
      %p209 = scmp.ne.s32.totalorder %s194, %s208
      %p210 = scmp.eq.s32.totalorder %s37, 0
      %p211 = por %p209, %p210
      %s213 = sadd.s32 %s212, 1
      %p216 = scmp.eq.s32.totalorder %s31, 1
      %p217 = scmp.ne.s32.totalorder %s212, %s214
      %p218 = scmp.eq.s32.totalorder %s31, 0
      %p219 = por %p217, %p218
      %p220 = scmp.ne.s32.totalorder %s212, %s214
      %p221 = scmp.eq.s32.totalorder %s36, 1
      %p222 = por %p220, %p221
      %p223 = scmp.ne.s32.totalorder %s214, %s215
      %p224 = scmp.eq.s32.totalorder %s36, 0
      %p225 = por %p223, %p224
      %p226 = scmp.ne.s32.totalorder %s214, %s215
      %p227 = scmp.eq.s32.totalorder %s37, 1
      %p228 = por %p226, %p227
      %p230 = scmp.ne.s32.totalorder %s215, %s229
      %p231 = scmp.eq.s32.totalorder %s37, 0
      %p232 = por %p230, %p231
      %s234 = sadd.s32 %s233, 1
      %p237 = scmp.eq.s32.totalorder %s31, 1
      %p238 = scmp.ne.s32.totalorder %s233, %s235
      %p239 = scmp.eq.s32.totalorder %s31, 0
      %p240 = por %p238, %p239
      %p241 = scmp.ne.s32.totalorder %s233, %s235
      %p242 = scmp.eq.s32.totalorder %s36, 1
      %p243 = por %p241, %p242
      %p244 = scmp.ne.s32.totalorder %s235, %s236
      %p245 = scmp.eq.s32.totalorder %s36, 0
      %p246 = por %p244, %p245
      %p247 = scmp.ne.s32.totalorder %s235, %s236
      %p248 = scmp.eq.s32.totalorder %s37, 1
      %p249 = por %p247, %p248
      %p251 = scmp.ne.s32.totalorder %s236, %s250
      %p252 = scmp.eq.s32.totalorder %s37, 0
      %p253 = por %p251, %p252
      %s255 = sadd.s32 %s254, 1
      %p258 = scmp.eq.s32.totalorder %s31, 1
      %p259 = scmp.ne.s32.totalorder %s254, %s256
      %p260 = scmp.eq.s32.totalorder %s31, 0
      %p261 = por %p259, %p260
      %p262 = scmp.ne.s32.totalorder %s254, %s256
      %p263 = scmp.eq.s32.totalorder %s36, 1
      %p264 = por %p262, %p263
      %p265 = scmp.ne.s32.totalorder %s256, %s257
      %p266 = scmp.eq.s32.totalorder %s36, 0
      %p267 = por %p265, %p266
      %p268 = scmp.ne.s32.totalorder %s256, %s257
      %p269 = scmp.eq.s32.totalorder %s37, 1
      %p270 = por %p268, %p269
      %p272 = scmp.ne.s32.totalorder %s257, %s271
      %p273 = scmp.eq.s32.totalorder %s37, 0
      %p274 = por %p272, %p273
      %s276 = sadd.s32 %s275, 1
      %p279 = scmp.eq.s32.totalorder %s31, 1
      %p280 = scmp.ne.s32.totalorder %s275, %s277
      %p281 = scmp.eq.s32.totalorder %s31, 0
      %p282 = por %p280, %p281
      %p283 = scmp.ne.s32.totalorder %s275, %s277
      %p284 = scmp.eq.s32.totalorder %s36, 1
      %p285 = por %p283, %p284
      %p286 = scmp.ne.s32.totalorder %s277, %s278
      %p287 = scmp.eq.s32.totalorder %s36, 0
      %p288 = por %p286, %p287
      %p289 = scmp.ne.s32.totalorder %s277, %s278
      %p290 = scmp.eq.s32.totalorder %s37, 1
      %p291 = por %p289, %p290
      %p293 = scmp.ne.s32.totalorder %s278, %s292
      %p294 = scmp.eq.s32.totalorder %s37, 0
      %p295 = por %p293, %p294
      %s297 = sadd.s32 %s296, 1
      %p300 = scmp.eq.s32.totalorder %s31, 1
      %p301 = scmp.ne.s32.totalorder %s296, %s298
      %p302 = scmp.eq.s32.totalorder %s31, 0
      %p303 = por %p301, %p302
      %p304 = scmp.ne.s32.totalorder %s296, %s298
      %p305 = scmp.eq.s32.totalorder %s36, 1
      %p306 = por %p304, %p305
      %p307 = scmp.ne.s32.totalorder %s298, %s299
      %p308 = scmp.eq.s32.totalorder %s36, 0
      %p309 = por %p307, %p308
      %p310 = scmp.ne.s32.totalorder %s298, %s299
      %p311 = scmp.eq.s32.totalorder %s37, 1
      %p312 = por %p310, %p311
      %p314 = scmp.ne.s32.totalorder %s299, %s313
      %p315 = scmp.eq.s32.totalorder %s37, 0
      %p316 = por %p314, %p315
      %s318 = sadd.s32 %s317, 1
      %p321 = scmp.eq.s32.totalorder %s31, 1
      %p322 = scmp.ne.s32.totalorder %s317, %s319
      %p323 = scmp.eq.s32.totalorder %s31, 0
      %p324 = por %p322, %p323
      %p325 = scmp.ne.s32.totalorder %s317, %s319
      %p326 = scmp.eq.s32.totalorder %s36, 1
      %p327 = por %p325, %p326
      %p328 = scmp.ne.s32.totalorder %s319, %s320
      %p329 = scmp.eq.s32.totalorder %s36, 0
      %p330 = por %p328, %p329
      %p331 = scmp.ne.s32.totalorder %s319, %s320
      %p332 = scmp.eq.s32.totalorder %s37, 1
      %p333 = por %p331, %p332
      %p335 = scmp.ne.s32.totalorder %s320, %s334
      %p336 = scmp.eq.s32.totalorder %s37, 0
      %p337 = por %p335, %p336
      %s339 = sadd.s32 %s338, 1
      %p342 = scmp.eq.s32.totalorder %s31, 1
      %p343 = scmp.ne.s32.totalorder %s338, %s340
      %p344 = scmp.eq.s32.totalorder %s31, 0
      %p345 = por %p343, %p344
      %p346 = scmp.ne.s32.totalorder %s338, %s340
      %p347 = scmp.eq.s32.totalorder %s36, 1
      %p348 = por %p346, %p347
      %p349 = scmp.ne.s32.totalorder %s340, %s341
      %p350 = scmp.eq.s32.totalorder %s36, 0
      %p351 = por %p349, %p350
      %p352 = scmp.ne.s32.totalorder %s340, %s341
      %p353 = scmp.eq.s32.totalorder %s37, 1
      %p354 = por %p352, %p353
      %p356 = scmp.ne.s32.totalorder %s341, %s355
      %p357 = scmp.eq.s32.totalorder %s37, 0
      %p358 = por %p356, %p357
      %s359 = ssub.s32 %s31, %s38
      %p360 = scmp.eq.s32.totalorder %s359, 0
      %s362 = sadd.s32 %s361, 1
      %s363 = scalar_select %p360, %s361, %s362
      %p366 = pneg %p360
      %p367 = scmp.eq.s32.totalorder %s31, 1
      %p368 = por %p366, %p367
      %p369 = scmp.ne.s32.totalorder %s361, %s364
      %p370 = scmp.eq.s32.totalorder %s31, 0
      %p371 = por %p369, %p370
      %p372 = scmp.ne.s32.totalorder %s361, %s364
      %p373 = scmp.eq.s32.totalorder %s36, 1
      %p374 = por %p372, %p373
      %p375 = scmp.ne.s32.totalorder %s364, %s365
      %p376 = scmp.eq.s32.totalorder %s36, 0
      %p377 = por %p375, %p376
      %p378 = scmp.ne.s32.totalorder %s364, %s365
      %p379 = scmp.eq.s32.totalorder %s37, 1
      %p380 = por %p378, %p379
      %p382 = scmp.ne.s32.totalorder %s365, %s381
      %p383 = scmp.eq.s32.totalorder %s37, 0
      %p384 = por %p382, %p383
      %p385 = scmp.le.s32.totalorder 1, %s31
      %p386 = scmp.lt.s32.totalorder %s31, 3
      %p387 = pnand %p385, %p386
      %p388 = pneg %p387
      // Predicated region
      $region9: #{tpu_custom_call.1} parent=5 // pred_check
        _
      $region10: #{tpu_custom_call.1} parent=5 // pred_check_branch
        %390 = sbr.rel (%p387) target = $region12
      $region11: #{tpu_custom_call.1} parent=5 // pred_region
        %s391 = ssub.s32 %s31, 1
        // Predicated region
        $region13: #{tpu_custom_call.1} parent=11 // pred_check
          %p392 = pneg %p78
        $region14: #{tpu_custom_call.1} parent=11 // pred_check_branch
          %394 = sbr.rel (%p392) target = $region16
        $region15: #{tpu_custom_call.1} parent=11 // pred_region
          %396 = vsyncadd [#allocation7], 0
          %s397 = sshll.u32 %s1, 4
          %s398 = int_to_ptr.hbm [resolvable:$true] %s397
          %s399 = sshll.u32 [#allocation6], 4
          %s400 = int_to_ptr.vmem [resolvable:$true] %s399
          %405 = dma.hbm_to_vmem [thread:$0]  %s398, 3072, %s400, [#allocation7], 192, 192, 12
        $region16: #{tpu_custom_call.1} parent=11 // pred_fallthru
          _
        // Predicated region
        $region17: #{tpu_custom_call.1} parent=11 // pred_check
          %p406 = pneg %p99
        $region18: #{tpu_custom_call.1} parent=11 // pred_check_branch
          %408 = sbr.rel (%p406) target = $region20
        $region19: #{tpu_custom_call.1} parent=11 // pred_region
          _
        $region20: #{tpu_custom_call.1} parent=11 // pred_fallthru
          _
        // Predicated region
        $region21: #{tpu_custom_call.1} parent=11 // pred_check
          %p409 = pneg %p120
        $region22: #{tpu_custom_call.1} parent=11 // pred_check_branch
          %411 = sbr.rel (%p409) target = $region24
        $region23: #{tpu_custom_call.1} parent=11 // pred_region
          %413 = vsyncadd [#allocation7], 0
          %s414 = sshll.u32 %s3, 4
          %s415 = int_to_ptr.hbm [resolvable:$true] %s414
          %s416 = sshll.u32 [#allocation8], 4
          %s417 = int_to_ptr.vmem [resolvable:$true] %s416
          %422 = dma.hbm_to_vmem [thread:$0]  %s415, 1024, %s417, [#allocation7], 64, 64, 4
        $region24: #{tpu_custom_call.1} parent=11 // pred_fallthru
          _
        // Predicated region
        $region25: #{tpu_custom_call.1} parent=11 // pred_check
          %p423 = pneg %p141
        $region26: #{tpu_custom_call.1} parent=11 // pred_check_branch
          %425 = sbr.rel (%p423) target = $region28
        $region27: #{tpu_custom_call.1} parent=11 // pred_region
          _
        $region28: #{tpu_custom_call.1} parent=11 // pred_fallthru
          _
        // Predicated region
        $region29: #{tpu_custom_call.1} parent=11 // pred_check
          %p426 = pneg %p162
        $region30: #{tpu_custom_call.1} parent=11 // pred_check_branch
          %428 = sbr.rel (%p426) target = $region32
        $region31: #{tpu_custom_call.1} parent=11 // pred_region
          _
        $region32: #{tpu_custom_call.1} parent=11 // pred_fallthru
          _
        // Predicated region
        $region33: #{tpu_custom_call.1} parent=11 // pred_check
          %p429 = pneg %p183
        $region34: #{tpu_custom_call.1} parent=11 // pred_check_branch
          %431 = sbr.rel (%p429) target = $region36
        $region35: #{tpu_custom_call.1} parent=11 // pred_region
          _
        $region36: #{tpu_custom_call.1} parent=11 // pred_fallthru
          _
        // Predicated region
        $region37: #{tpu_custom_call.1} parent=11 // pred_check
          %p432 = pneg %p204
        $region38: #{tpu_custom_call.1} parent=11 // pred_check_branch
          %434 = sbr.rel (%p432) target = $region40
        $region39: #{tpu_custom_call.1} parent=11 // pred_region
          %436 = vsyncadd [#allocation10], 0
          %s437 = sshll.u32 %s7, 4
          %s438 = int_to_ptr.hbm [resolvable:$true] %s437
          %s439 = sshll.u32 [#allocation9], 4
          %s440 = int_to_ptr.vmem [resolvable:$true] %s439
          %445 = dma.hbm_to_vmem [thread:$0]  %s438, 1024, %s440, [#allocation10], 64, 64, 4
        $region40: #{tpu_custom_call.1} parent=11 // pred_fallthru
          _
        // Predicated region
        $region41: #{tpu_custom_call.1} parent=11 // pred_check
          %p446 = pneg %p225
        $region42: #{tpu_custom_call.1} parent=11 // pred_check_branch
          %448 = sbr.rel (%p446) target = $region44
        $region43: #{tpu_custom_call.1} parent=11 // pred_region
          _
        $region44: #{tpu_custom_call.1} parent=11 // pred_fallthru
          _
        // Predicated region
        $region45: #{tpu_custom_call.1} parent=11 // pred_check
          %p449 = pneg %p246
        $region46: #{tpu_custom_call.1} parent=11 // pred_check_branch
          %451 = sbr.rel (%p449) target = $region48
        $region47: #{tpu_custom_call.1} parent=11 // pred_region
          %453 = vsyncadd [#allocation10], 0
          %s454 = sshll.u32 %s9, 4
          %s455 = int_to_ptr.hbm [resolvable:$true] %s454
          %s456 = sshll.u32 [#allocation11], 4
          %s457 = int_to_ptr.vmem [resolvable:$true] %s456
          %462 = dma.hbm_to_vmem [thread:$0]  %s455, 1024, %s457, [#allocation10], 64, 64, 4
        $region48: #{tpu_custom_call.1} parent=11 // pred_fallthru
          _
        // Predicated region
        $region49: #{tpu_custom_call.1} parent=11 // pred_check
          %p463 = pneg %p267
        $region50: #{tpu_custom_call.1} parent=11 // pred_check_branch
          %465 = sbr.rel (%p463) target = $region52
        $region51: #{tpu_custom_call.1} parent=11 // pred_region
          _
        $region52: #{tpu_custom_call.1} parent=11 // pred_fallthru
          _
        // Predicated region
        $region53: #{tpu_custom_call.1} parent=11 // pred_check
          %p466 = pneg %p288
        $region54: #{tpu_custom_call.1} parent=11 // pred_check_branch
          %468 = sbr.rel (%p466) target = $region56
        $region55: #{tpu_custom_call.1} parent=11 // pred_region
          _
        $region56: #{tpu_custom_call.1} parent=11 // pred_fallthru
          _
        // Predicated region
        $region57: #{tpu_custom_call.1} parent=11 // pred_check
          %p469 = pneg %p309
        $region58: #{tpu_custom_call.1} parent=11 // pred_check_branch
          %471 = sbr.rel (%p469) target = $region60
        $region59: #{tpu_custom_call.1} parent=11 // pred_region
          _
        $region60: #{tpu_custom_call.1} parent=11 // pred_fallthru
          _
        // Predicated region
        $region61: #{tpu_custom_call.1} parent=11 // pred_check
          %p472 = pneg %p330
        $region62: #{tpu_custom_call.1} parent=11 // pred_check_branch
          %474 = sbr.rel (%p472) target = $region64
        $region63: #{tpu_custom_call.1} parent=11 // pred_region
          _
        $region64: #{tpu_custom_call.1} parent=11 // pred_fallthru
          _
        // Predicated region
        $region65: #{tpu_custom_call.1} parent=11 // pred_check
          %p475 = pneg %p351
        $region66: #{tpu_custom_call.1} parent=11 // pred_check_branch
          %477 = sbr.rel (%p475) target = $region68
        $region67: #{tpu_custom_call.1} parent=11 // pred_region
          _
        $region68: #{tpu_custom_call.1} parent=11 // pred_fallthru
          _
      $region12: #{tpu_custom_call.1} parent=5 // pred_fallthru
        _
      %p478 = scmp.lt.s32.totalorder %s31, 2
      // Predicated region
      $region69: #{tpu_custom_call.1} parent=5 // pred_check
        %p479 = pneg %p478
      $region70: #{tpu_custom_call.1} parent=5 // pred_check_branch
        %481 = sbr.rel (%p479) target = $region72
      $region71: #{tpu_custom_call.1} parent=5 // pred_region
        // Predicated region
        $region73: #{tpu_custom_call.1} parent=71 // pred_check
          %p482 = pneg %p51
        $region74: #{tpu_custom_call.1} parent=71 // pred_check_branch
          %484 = sbr.rel (%p482) target = $region76
        $region75: #{tpu_custom_call.1} parent=71 // pred_region
          %s485 = sand.u32 %s41, 1
          %s486 = scalar_lea.sflag [#allocation4], %s485
          %s487 = sand.u32 %s41, 1
          %s488 = smul.addr %s487, 16
          %s489 = scalar_lea.vmem [#allocation3], %s488
          %s490 = smul.u32 2, %s31
          %492 = vsyncadd %s486, 0
          %s493 = smul.addr %s490, 8
          %s494 = scalar_lea.hbm %s0, %s493
          %s495 = sshll.u32 %s494, 4
          %s496 = int_to_ptr.hbm [resolvable:$true] %s495
          %s497 = sshll.u32 %s489, 4
          %s498 = int_to_ptr.vmem [resolvable:$true] %s497
          %503 = dma.hbm_to_vmem [thread:$0]  %s496, 256, %s498, %s486, 128, 128, 8
        $region76: #{tpu_custom_call.1} parent=71 // pred_fallthru
          _
      $region72: #{tpu_custom_call.1} parent=5 // pred_fallthru
        _
      %p504 = scmp.le.s32.totalorder 1, %s31
      %p505 = scmp.lt.s32.totalorder %s31, 3
      %p506 = pnand %p504, %p505
      %p507 = pneg %p506
      // Predicated region
      $region77: #{tpu_custom_call.1} parent=5 // pred_check
        _
      $region78: #{tpu_custom_call.1} parent=5 // pred_check_branch
        %509 = sbr.rel (%p506) target = $region80
      $region79: #{tpu_custom_call.1} parent=5 // pred_region
        %s510 = ssub.s32 %s31, 1
        %s511 = sand.u32 %s44, 1
        %s512 = scalar_lea.sflag [#allocation4], %s511
        %s513 = sand.u32 %s44, 1
        %s514 = smul.addr %s513, 16
        %s515 = scalar_lea.vmem [#allocation3], %s514
        // Predicated region
        $region81: #{tpu_custom_call.1} parent=79 // pred_check
          %p516 = pneg %p57
        $region82: #{tpu_custom_call.1} parent=79 // pred_check_branch
          %518 = sbr.rel (%p516) target = $region84
        $region83: #{tpu_custom_call.1} parent=79 // pred_region
          %520 = dma.done %s512, 256
        $region84: #{tpu_custom_call.1} parent=79 // pred_fallthru
          _
        // Predicated region
        $region85: #{tpu_custom_call.1} parent=79 // pred_check
          %p521 = pneg %p78
        $region86: #{tpu_custom_call.1} parent=79 // pred_check_branch
          %523 = sbr.rel (%p521) target = $region88
        $region87: #{tpu_custom_call.1} parent=79 // pred_region
          %525 = dma.done [#allocation7], 3072
        $region88: #{tpu_custom_call.1} parent=79 // pred_fallthru
          _
        // Predicated region
        $region89: #{tpu_custom_call.1} parent=79 // pred_check
          %p526 = pneg %p120
        $region90: #{tpu_custom_call.1} parent=79 // pred_check_branch
          %528 = sbr.rel (%p526) target = $region92
        $region91: #{tpu_custom_call.1} parent=79 // pred_region
          %530 = dma.done [#allocation7], 1024
        $region92: #{tpu_custom_call.1} parent=79 // pred_fallthru
          _
        // Predicated region
        $region93: #{tpu_custom_call.1} parent=79 // pred_check
          %p531 = pneg %p204
        $region94: #{tpu_custom_call.1} parent=79 // pred_check_branch
          %533 = sbr.rel (%p531) target = $region96
        $region95: #{tpu_custom_call.1} parent=79 // pred_region
          %535 = dma.done [#allocation10], 1024
        $region96: #{tpu_custom_call.1} parent=79 // pred_fallthru
          _
        // Predicated region
        $region97: #{tpu_custom_call.1} parent=79 // pred_check
          %p536 = pneg %p246
        $region98: #{tpu_custom_call.1} parent=79 // pred_check_branch
          %538 = sbr.rel (%p536) target = $region100
        $region99: #{tpu_custom_call.1} parent=79 // pred_region
          %540 = dma.done [#allocation10], 1024
        $region100: #{tpu_custom_call.1} parent=79 // pred_fallthru
          _
        %s541 = sand.u32 %s44, 1
        %s542 = scalar_lea.sflag [#allocation4], %s541
        %s543 = sand.u32 %s44, 1
        %s544 = smul.addr %s543, 16
        %s545 = scalar_lea.vmem [#allocation3], %s544
        %p546 = pneg %p57
        %p547 = pneg %p54
        %p548 = pneg %p78
        %p549 = pneg %p75
        %p550 = pneg %p99
        %p551 = pneg %p96
        %p552 = pneg %p120
        %p553 = pneg %p117
        %p554 = pneg %p141
        %p555 = pneg %p138
        %p556 = pneg %p162
        %p557 = pneg %p159
        %p558 = pneg %p183
        %p559 = pneg %p180
        %p560 = pneg %p204
        %p561 = pneg %p201
        %p562 = pneg %p225
        %p563 = pneg %p222
        %p564 = pneg %p246
        %p565 = pneg %p243
        %p566 = pneg %p267
        %p567 = pneg %p264
        %p568 = pneg %p288
        %p569 = pneg %p285
        %p570 = pneg %p309
        %p571 = pneg %p306
        %p572 = pneg %p330
        %p573 = pneg %p327
        %p574 = pneg %p351
        %p575 = pneg %p348
        %p576 = pneg %p377
        %p577 = pneg %p374
        %s578 = sand.u32 %s364, 1
        %s579 = scalar_lea.sflag [#allocation5], %s578
        %s580 = sand.u32 %s364, 1
        %s581 = smul.addr %s580, 2
        %s582 = scalar_lea.vmem [#allocation12], %s581
        %s583 = smul.u32 2, %s36
        %v585 = vld [vmem:[%s515] sm:$0xff]
        %v586 = vld [vmem:[%s515 + $0x8] sm:$0xff]
        %v587 = vpack.c.bf16 %v586, %v585
        %v588 = vld [vmem:[#allocation6] sm:$0xff]
        %v589 = vld [vmem:[#allocation6 + $0x8] sm:$0xf]
        %v590 = vld [vmem:[#allocation6 + $0xc] sm:$0xff]
        %v591 = vld [vmem:[#allocation6 + $0x14] sm:$0xf]
        %v592 = vld [vmem:[#allocation6 + $0x18] sm:$0xff]
        %v593 = vld [vmem:[#allocation6 + $0x20] sm:$0xf]
        %v594 = vld [vmem:[#allocation6 + $0x24] sm:$0xff]
        %v595 = vld [vmem:[#allocation6 + $0x2c] sm:$0xf]
        %v596 = vld [vmem:[#allocation6 + $0x30] sm:$0xff]
        %v597 = vld [vmem:[#allocation6 + $0x38] sm:$0xf]
        %v598 = vld [vmem:[#allocation6 + $0x3c] sm:$0xff]
        %v599 = vld [vmem:[#allocation6 + $0x44] sm:$0xf]
        %v600 = vld [vmem:[#allocation6 + $0x48] sm:$0xff]
        %v601 = vld [vmem:[#allocation6 + $0x50] sm:$0xf]
        %v602 = vld [vmem:[#allocation6 + $0x54] sm:$0xff]
        %v603 = vld [vmem:[#allocation6 + $0x5c] sm:$0xf]
        %v604 = vld [vmem:[#allocation6 + $0x60] sm:$0xff]
        %v605 = vld [vmem:[#allocation6 + $0x68] sm:$0xf]
        %v606 = vld [vmem:[#allocation6 + $0x6c] sm:$0xff]
        %v607 = vld [vmem:[#allocation6 + $0x74] sm:$0xf]
        %v608 = vld [vmem:[#allocation6 + $0x78] sm:$0xff]
        %v609 = vld [vmem:[#allocation6 + $0x80] sm:$0xf]
        %v610 = vld [vmem:[#allocation6 + $0x84] sm:$0xff]
        %v611 = vld [vmem:[#allocation6 + $0x8c] sm:$0xf]
        %v612 = vld [vmem:[#allocation6 + $0x90] sm:$0xff]
        %v613 = vld [vmem:[#allocation6 + $0x98] sm:$0xf]
        %v614 = vld [vmem:[#allocation6 + $0x9c] sm:$0xff]
        %v615 = vld [vmem:[#allocation6 + $0xa4] sm:$0xf]
        %v616 = vld [vmem:[#allocation6 + $0xa8] sm:$0xff]
        %v617 = vld [vmem:[#allocation6 + $0xb0] sm:$0xf]
        %v618 = vld [vmem:[#allocation6 + $0xb4] sm:$0xff]
        %v619 = vld [vmem:[#allocation6 + $0xbc] sm:$0xf]
        %v620 = vld [vmem:[%s2] sm:$0x7]
        %v622 = vperm.slane %v620, 0
        %v623 = vperm.slane %v620, 1
        %v624 = vperm.slane %v620, 2
        %v660 = vunpack.c.l.b16 %v588
        %v661 = vunpack.c.h.b16 %v588
        %v662 = vunpack.c.l.b16 %v589
        %v663 = vunpack.c.l.b16 %v590
        %v664 = vunpack.c.h.b16 %v590
        %v665 = vunpack.c.l.b16 %v591
        %v666 = vunpack.c.l.b16 %v592
        %v667 = vunpack.c.h.b16 %v592
        %v668 = vunpack.c.l.b16 %v593
        %v669 = vunpack.c.l.b16 %v594
        %v670 = vunpack.c.h.b16 %v594
        %v671 = vunpack.c.l.b16 %v595
        %v672 = vunpack.c.l.b16 %v596
        %v673 = vunpack.c.h.b16 %v596
        %v674 = vunpack.c.l.b16 %v597
        %v675 = vunpack.c.l.b16 %v598
        %v676 = vunpack.c.h.b16 %v598
        %v677 = vunpack.c.l.b16 %v599
        %v678 = vunpack.c.l.b16 %v600
        %v679 = vunpack.c.h.b16 %v600
        %v680 = vunpack.c.l.b16 %v601
        %v681 = vunpack.c.l.b16 %v602
        %v682 = vunpack.c.h.b16 %v602
        %v683 = vunpack.c.l.b16 %v603
        %v684 = vunpack.c.l.b16 %v604
        %v685 = vunpack.c.h.b16 %v604
        %v686 = vunpack.c.l.b16 %v605
        %v687 = vunpack.c.l.b16 %v606
        %v688 = vunpack.c.h.b16 %v606
        %v689 = vunpack.c.l.b16 %v607
        %v690 = vunpack.c.l.b16 %v608
        %v691 = vunpack.c.h.b16 %v608
        %v692 = vunpack.c.l.b16 %v609
        %v693 = vunpack.c.l.b16 %v610
        %v694 = vunpack.c.h.b16 %v610
        %v695 = vunpack.c.l.b16 %v611
        %v696 = vunpack.c.l.b16 %v612
        %v697 = vunpack.c.h.b16 %v612
        %v698 = vunpack.c.l.b16 %v613
        %v699 = vunpack.c.l.b16 %v614
        %v700 = vunpack.c.h.b16 %v614
        %v701 = vunpack.c.l.b16 %v615
        %v702 = vunpack.c.l.b16 %v616
        %v703 = vunpack.c.h.b16 %v616
        %v704 = vunpack.c.l.b16 %v617
        %v705 = vunpack.c.l.b16 %v618
        %v706 = vunpack.c.h.b16 %v618
        %v707 = vunpack.c.l.b16 %v619
        %v708 = vpack.c.b16 %v663, %v660
        %v709 = vpack.c.b16 %v664, %v661
        %v710 = vpack.c.b16 %v665, %v662
        %v711 = vpack.c.b16 %v669, %v666
        %v712 = vpack.c.b16 %v670, %v667
        %v713 = vpack.c.b16 %v671, %v668
        %v714 = vpack.c.b16 %v675, %v672
        %v715 = vpack.c.b16 %v676, %v673
        %v716 = vpack.c.b16 %v677, %v674
        %v717 = vpack.c.b16 %v681, %v678
        %v718 = vpack.c.b16 %v682, %v679
        %v719 = vpack.c.b16 %v683, %v680
        %v720 = vpack.c.b16 %v687, %v684
        %v721 = vpack.c.b16 %v688, %v685
        %v722 = vpack.c.b16 %v689, %v686
        %v723 = vpack.c.b16 %v693, %v690
        %v724 = vpack.c.b16 %v694, %v691
        %v725 = vpack.c.b16 %v695, %v692
        %v726 = vpack.c.b16 %v699, %v696
        %v727 = vpack.c.b16 %v700, %v697
        %v728 = vpack.c.b16 %v701, %v698
        %v729 = vpack.c.b16 %v705, %v702
        %v730 = vpack.c.b16 %v706, %v703
        %v731 = vpack.c.b16 %v707, %v704
        %756 = vmatpush.bf16.msra.mxu0 %v729
        %757 = vmatpush.bf16.msra.mxu0 %v726
        %758 = vmatpush.bf16.msra.mxu0 %v723
        %759 = vmatpush.bf16.msra.mxu0 %v720
        %760 = vmatpush.bf16.msra.mxu0 %v717
        %761 = vmatpush.bf16.msra.mxu0 %v714
        %762 = vmatpush.bf16.msra.mxu0 %v711
        %763 = vmatpush.bf16.msra.mxu0 %v708
        %764 = vmatmul.bf16.gmra.mxu0 %v587
        %v765 = vpop.f32.mrf.mxu0
        %v766 = vadd.f32 %v622, %v765
        %v767 = vpop.f32.mrf.mxu0
        %v768 = vadd.f32 %v622, %v767
        %769 = vdwg.mxu0
        %770 = vmatpush.bf16.msra.mxu0 %v730
        %771 = vmatpush.bf16.msra.mxu0 %v727
        %772 = vmatpush.bf16.msra.mxu0 %v724
        %773 = vmatpush.bf16.msra.mxu0 %v721
        %774 = vmatpush.bf16.msra.mxu0 %v718
        %775 = vmatpush.bf16.msra.mxu0 %v715
        %776 = vmatpush.bf16.msra.mxu0 %v712
        %777 = vmatpush.bf16.msra.mxu0 %v709
        %778 = vmatmul.bf16.gmra.mxu0 %v587
        %v779 = vpop.f32.mrf.mxu0
        %v780 = vadd.f32 %v623, %v779
        %v781 = vpop.f32.mrf.mxu0
        %v782 = vadd.f32 %v623, %v781
        %783 = vdwg.mxu0
        %784 = vmatpush.bf16.msra.mxu0 %v731
        %785 = vmatpush.bf16.msra.mxu0 %v728
        %786 = vmatpush.bf16.msra.mxu0 %v725
        %787 = vmatpush.bf16.msra.mxu0 %v722
        %788 = vmatpush.bf16.msra.mxu0 %v719
        %789 = vmatpush.bf16.msra.mxu0 %v716
        %790 = vmatpush.bf16.msra.mxu0 %v713
        %791 = vmatpush.bf16.msra.mxu0 %v710
        %792 = vmatmul.bf16.gmra.mxu0 %v587
        %v793 = vpop.f32.mrf.mxu0
        %v794 = vadd.f32 %v624, %v793
        %v795 = vpop.f32.mrf.mxu0
        %v796 = vadd.f32 %v624, %v795
        %797 = vdwg.mxu0
        %v798 = vmul.f32 %v766, 0.25
        %v799 = vmul.f32 %v768, 0.25
        %v800 = vpack.c.bf16 %v798, %v798
        %v801 = vpack.c.bf16 %v799, %v799
        %v802 = vpack.c.bf16 %v780, %v780
        %v803 = vpack.c.bf16 %v782, %v782
        %v804 = vpack.c.bf16 %v794, %v794
        %v805 = vpack.c.bf16 %v796, %v796
        %vm806 = vcmask 130048
        %v808 = vsel %vm806, %v800, 0
        %v811 = vsel %vm806, %v802, 0
        %813 = vmatpush.bf16.xpose.msra.mxu0 0
        %814 = vmatpush.bf16.xpose.msra.mxu0 0
        %815 = vmatpush.bf16.xpose.msra.mxu0 0
        %816 = vmatpush.bf16.xpose.msra.mxu0 0
        %817 = vmatpush.bf16.xpose.msra.mxu0 0
        %818 = vmatpush.bf16.xpose.msra.mxu0 0
        %819 = vmatpush.bf16.xpose.msra.mxu0 0
        %820 = vmatpush.bf16.xpose.msra.mxu0 %v811
        %821 = vmatmul.bf16.gmra.mxu0 %v808
        %v822 = vpop.f32.mrf.mxu0
        %v823 = vadd.f32 0.0, %v822
        %v824 = vpop.f32.mrf.mxu0
        %825 = vdwg.mxu0
        %vm826 = vcmask 64512
        %v827 = vsel %vm826, %v823, -inf
        %828 = vmax.xlane.f32.xlu0 %v827
        %v829 = vpop.xlane.xlu0 %828
        %v830 = vsub.f32 %v823, %v829
        %v831 = vmul.f32 %v830, 1.442695
        %v832 = vpow.pop %v831
        %v833 = vsel %vm826, %v832, 0.0
        %834 = vadd.xlane.f32.xlu0 %v833
        %v835 = vpop.xlane.xlu0 %834
        %v836 = vrcp.pop %v835
        %v837 = vmul.f32 %v832, %v836
        %v838 = vpack.c.bf16 %v837, %v837
        %v840 = vsel %vm826, %v838, 0
        %vm842 = vcmask 1043456
        %v844 = vsel %vm842, %v804, 0
        %846 = vmatpush.bf16.msra.mxu0 0
        %847 = vmatpush.bf16.msra.mxu0 0
        %848 = vmatpush.bf16.msra.mxu0 0
        %849 = vmatpush.bf16.msra.mxu0 0
        %850 = vmatpush.bf16.msra.mxu0 0
        %851 = vmatpush.bf16.msra.mxu0 0
        %852 = vmatpush.bf16.msra.mxu0 0
        %853 = vmatpush.bf16.msra.mxu0 %v844
        %854 = vmatmul.bf16.gmra.mxu0 %v840
        %v855 = vpop.f32.mrf.mxu0
        %v856 = vadd.f32 0.0, %v855
        %v857 = vpop.f32.mrf.mxu0
        %858 = vdwg.mxu0
        %v859 = vpack.c.bf16 %v856, %v856
        %v860 = vld [vmem:[#allocation8] sm:$0xf]
        %v861 = vld [vmem:[#allocation8 + $0x4] sm:$0xf]
        %v863 = vunpack.c.l.b16 %v800
        %v864 = vpack.c.b16 %v863, %v863
        %865 = vrot.lane.b32.xlu0 %v864, 112
        %v866 = vpop.permute.xlu0 %865
        %v868 = vunpack.c.l.b16 %v802
        %v869 = vpack.c.b16 %v868, %v868
        %870 = vrot.lane.b32.xlu0 %v869, 112
        %v871 = vpop.permute.xlu0 %870
        %v873 = vsel %vm806, %v866, 0
        %v876 = vsel %vm806, %v871, 0
        %878 = vmatpush.bf16.xpose.msra.mxu0 0
        %879 = vmatpush.bf16.xpose.msra.mxu0 0
        %880 = vmatpush.bf16.xpose.msra.mxu0 0
        %881 = vmatpush.bf16.xpose.msra.mxu0 0
        %882 = vmatpush.bf16.xpose.msra.mxu0 0
        %883 = vmatpush.bf16.xpose.msra.mxu0 0
        %884 = vmatpush.bf16.xpose.msra.mxu0 0
        %885 = vmatpush.bf16.xpose.msra.mxu0 %v876
        %886 = vmatmul.bf16.gmra.mxu0 %v873
        %v887 = vpop.f32.mrf.mxu0
        %v888 = vadd.f32 0.0, %v887
        %v889 = vpop.f32.mrf.mxu0
        %890 = vdwg.mxu0
        %v891 = vsel %vm826, %v888, -inf
        %892 = vmax.xlane.f32.xlu0 %v891
        %v893 = vpop.xlane.xlu0 %892
        %v894 = vsub.f32 %v888, %v893
        %v895 = vmul.f32 %v894, 1.442695
        %v896 = vpow.pop %v895
        %v897 = vsel %vm826, %v896, 0.0
        %898 = vadd.xlane.f32.xlu0 %v897
        %v899 = vpop.xlane.xlu0 %898
        %v900 = vrcp.pop %v899
        %v901 = vmul.f32 %v896, %v900
        %v902 = vpack.c.bf16 %v901, %v901
        %v904 = vunpack.c.l.b16 %v804
        %v905 = vpack.c.b16 %v904, %v904
        %906 = vrot.lane.b32.xlu0 %v905, 112
        %v907 = vpop.permute.xlu0 %906
        %v909 = vsel %vm826, %v902, 0
        %v912 = vsel %vm842, %v907, 0
        %914 = vmatpush.bf16.msra.mxu0 0
        %915 = vmatpush.bf16.msra.mxu0 0
        %916 = vmatpush.bf16.msra.mxu0 0
        %917 = vmatpush.bf16.msra.mxu0 0
        %918 = vmatpush.bf16.msra.mxu0 0
        %919 = vmatpush.bf16.msra.mxu0 0
        %920 = vmatpush.bf16.msra.mxu0 0
        %921 = vmatpush.bf16.msra.mxu0 %v912
        %922 = vmatmul.bf16.gmra.mxu0 %v909
        %v923 = vpop.f32.mrf.mxu0
        %v924 = vadd.f32 0.0, %v923
        %v925 = vpop.f32.mrf.mxu0
        %926 = vdwg.mxu0
        %v927 = vpack.c.bf16 %v924, %v924
        %v928 = vld [vmem:[#allocation8 + $0x8] sm:$0xf]
        %v929 = vld [vmem:[#allocation8 + $0xc] sm:$0xf]
        %v932 = vunpack.c.l.b16 %v928
        %v933 = vunpack.c.l.b16 %v929
        %v934 = vpack.c.b16 %v933, %v932
        %v937 = vsel %vm806, %v927, 0
        %939 = vmatpush.bf16.msra.mxu0 0
        %940 = vmatpush.bf16.msra.mxu0 0
        %941 = vmatpush.bf16.msra.mxu0 0
        %942 = vmatpush.bf16.msra.mxu0 0
        %943 = vmatpush.bf16.msra.mxu0 0
        %944 = vmatpush.bf16.msra.mxu0 0
        %945 = vmatpush.bf16.msra.mxu0 0
        %946 = vmatpush.bf16.msra.mxu0 %v934
        %947 = vmatmul.bf16.gmra.mxu0 %v937
        %v948 = vpop.f32.mrf.mxu0
        %v949 = vadd.f32 0.0, %v948
        %v950 = vpop.f32.mrf.mxu0
        %951 = vdwg.mxu0
        %v954 = vunpack.c.l.b16 %v860
        %v955 = vunpack.c.l.b16 %v861
        %v956 = vpack.c.b16 %v955, %v954
        %v959 = vsel %vm806, %v859, 0
        %961 = vmatpush.bf16.msra.mxu0 0
        %962 = vmatpush.bf16.msra.mxu0 0
        %963 = vmatpush.bf16.msra.mxu0 0
        %964 = vmatpush.bf16.msra.mxu0 0
        %965 = vmatpush.bf16.msra.mxu0 0
        %966 = vmatpush.bf16.msra.mxu0 0
        %967 = vmatpush.bf16.msra.mxu0 0
        %968 = vmatpush.bf16.msra.mxu0 %v956
        %969 = vmatmul.bf16.gmra.mxu0 %v959
        %v970 = vpop.f32.mrf.mxu0
        %v971 = vadd.f32 %v949, %v970
        %v972 = vpop.f32.mrf.mxu0
        %973 = vdwg.mxu0
        %974 = vrot.lane.b32.xlu0 %v864, 96
        %v975 = vpop.permute.xlu0 %974
        %976 = vrot.lane.b32.xlu0 %v869, 96
        %v977 = vpop.permute.xlu0 %976
        %v979 = vsel %vm806, %v975, 0
        %v982 = vsel %vm806, %v977, 0
        %984 = vmatpush.bf16.xpose.msra.mxu0 0
        %985 = vmatpush.bf16.xpose.msra.mxu0 0
        %986 = vmatpush.bf16.xpose.msra.mxu0 0
        %987 = vmatpush.bf16.xpose.msra.mxu0 0
        %988 = vmatpush.bf16.xpose.msra.mxu0 0
        %989 = vmatpush.bf16.xpose.msra.mxu0 0
        %990 = vmatpush.bf16.xpose.msra.mxu0 0
        %991 = vmatpush.bf16.xpose.msra.mxu0 %v982
        %992 = vmatmul.bf16.gmra.mxu0 %v979
        %v993 = vpop.f32.mrf.mxu0
        %v994 = vadd.f32 0.0, %v993
        %v995 = vpop.f32.mrf.mxu0
        %996 = vdwg.mxu0
        %v997 = vsel %vm826, %v994, -inf
        %998 = vmax.xlane.f32.xlu0 %v997
        %v999 = vpop.xlane.xlu0 %998
        %v1000 = vsub.f32 %v994, %v999
        %v1001 = vmul.f32 %v1000, 1.442695
        %v1002 = vpow.pop %v1001
        %v1003 = vsel %vm826, %v1002, 0.0
        %1004 = vadd.xlane.f32.xlu0 %v1003
        %v1005 = vpop.xlane.xlu0 %1004
        %v1006 = vrcp.pop %v1005
        %v1007 = vmul.f32 %v1002, %v1006
        %v1008 = vpack.c.bf16 %v1007, %v1007
        %1009 = vrot.lane.b32.xlu0 %v905, 96
        %v1010 = vpop.permute.xlu0 %1009
        %v1012 = vsel %vm826, %v1008, 0
        %v1015 = vsel %vm842, %v1010, 0
        %1017 = vmatpush.bf16.msra.mxu0 0
        %1018 = vmatpush.bf16.msra.mxu0 0
        %1019 = vmatpush.bf16.msra.mxu0 0
        %1020 = vmatpush.bf16.msra.mxu0 0
        %1021 = vmatpush.bf16.msra.mxu0 0
        %1022 = vmatpush.bf16.msra.mxu0 0
        %1023 = vmatpush.bf16.msra.mxu0 0
        %1024 = vmatpush.bf16.msra.mxu0 %v1015
        %1025 = vmatmul.bf16.gmra.mxu0 %v1012
        %v1026 = vpop.f32.mrf.mxu0
        %v1027 = vadd.f32 0.0, %v1026
        %v1028 = vpop.f32.mrf.mxu0
        %1029 = vdwg.mxu0
        %v1030 = vpack.c.bf16 %v1027, %v1027
        %v1031 = vld [vmem:[#allocation8 + $0x10] sm:$0xf]
        %v1032 = vld [vmem:[#allocation8 + $0x14] sm:$0xf]
        %v1035 = vunpack.c.l.b16 %v1031
        %v1036 = vunpack.c.l.b16 %v1032
        %v1037 = vpack.c.b16 %v1036, %v1035
        %v1040 = vsel %vm806, %v1030, 0
        %1042 = vmatpush.bf16.msra.mxu0 0
        %1043 = vmatpush.bf16.msra.mxu0 0
        %1044 = vmatpush.bf16.msra.mxu0 0
        %1045 = vmatpush.bf16.msra.mxu0 0
        %1046 = vmatpush.bf16.msra.mxu0 0
        %1047 = vmatpush.bf16.msra.mxu0 0
        %1048 = vmatpush.bf16.msra.mxu0 0
        %1049 = vmatpush.bf16.msra.mxu0 %v1037
        %1050 = vmatmul.bf16.gmra.mxu0 %v1040
        %v1051 = vpop.f32.mrf.mxu0
        %v1052 = vadd.f32 0.0, %v1051
        %v1053 = vpop.f32.mrf.mxu0
        %1054 = vdwg.mxu0
        %v1055 = vadd.f32 %v971, %v1052
        %1056 = vrot.lane.b32.xlu0 %v864, 80
        %v1057 = vpop.permute.xlu0 %1056
        %1058 = vrot.lane.b32.xlu0 %v869, 80
        %v1059 = vpop.permute.xlu0 %1058
        %v1061 = vsel %vm806, %v1057, 0
        %v1064 = vsel %vm806, %v1059, 0
        %1066 = vmatpush.bf16.xpose.msra.mxu0 0
        %1067 = vmatpush.bf16.xpose.msra.mxu0 0
        %1068 = vmatpush.bf16.xpose.msra.mxu0 0
        %1069 = vmatpush.bf16.xpose.msra.mxu0 0
        %1070 = vmatpush.bf16.xpose.msra.mxu0 0
        %1071 = vmatpush.bf16.xpose.msra.mxu0 0
        %1072 = vmatpush.bf16.xpose.msra.mxu0 0
        %1073 = vmatpush.bf16.xpose.msra.mxu0 %v1064
        %1074 = vmatmul.bf16.gmra.mxu0 %v1061
        %v1075 = vpop.f32.mrf.mxu0
        %v1076 = vadd.f32 0.0, %v1075
        %v1077 = vpop.f32.mrf.mxu0
        %1078 = vdwg.mxu0
        %v1079 = vsel %vm826, %v1076, -inf
        %1080 = vmax.xlane.f32.xlu0 %v1079
        %v1081 = vpop.xlane.xlu0 %1080
        %v1082 = vsub.f32 %v1076, %v1081
        %v1083 = vmul.f32 %v1082, 1.442695
        %v1084 = vpow.pop %v1083
        %v1085 = vsel %vm826, %v1084, 0.0
        %1086 = vadd.xlane.f32.xlu0 %v1085
        %v1087 = vpop.xlane.xlu0 %1086
        %v1088 = vrcp.pop %v1087
        %v1089 = vmul.f32 %v1084, %v1088
        %v1090 = vpack.c.bf16 %v1089, %v1089
        %1091 = vrot.lane.b32.xlu0 %v905, 80
        %v1092 = vpop.permute.xlu0 %1091
        %v1094 = vsel %vm826, %v1090, 0
        %v1097 = vsel %vm842, %v1092, 0
        %1099 = vmatpush.bf16.msra.mxu0 0
        %1100 = vmatpush.bf16.msra.mxu0 0
        %1101 = vmatpush.bf16.msra.mxu0 0
        %1102 = vmatpush.bf16.msra.mxu0 0
        %1103 = vmatpush.bf16.msra.mxu0 0
        %1104 = vmatpush.bf16.msra.mxu0 0
        %1105 = vmatpush.bf16.msra.mxu0 0
        %1106 = vmatpush.bf16.msra.mxu0 %v1097
        %1107 = vmatmul.bf16.gmra.mxu0 %v1094
        %v1108 = vpop.f32.mrf.mxu0
        %v1109 = vadd.f32 0.0, %v1108
        %v1110 = vpop.f32.mrf.mxu0
        %1111 = vdwg.mxu0
        %v1112 = vpack.c.bf16 %v1109, %v1109
        %v1113 = vld [vmem:[#allocation8 + $0x18] sm:$0xf]
        %v1114 = vld [vmem:[#allocation8 + $0x1c] sm:$0xf]
        %v1117 = vunpack.c.l.b16 %v1113
        %v1118 = vunpack.c.l.b16 %v1114
        %v1119 = vpack.c.b16 %v1118, %v1117
        %v1122 = vsel %vm806, %v1112, 0
        %1124 = vmatpush.bf16.msra.mxu0 0
        %1125 = vmatpush.bf16.msra.mxu0 0
        %1126 = vmatpush.bf16.msra.mxu0 0
        %1127 = vmatpush.bf16.msra.mxu0 0
        %1128 = vmatpush.bf16.msra.mxu0 0
        %1129 = vmatpush.bf16.msra.mxu0 0
        %1130 = vmatpush.bf16.msra.mxu0 0
        %1131 = vmatpush.bf16.msra.mxu0 %v1119
        %1132 = vmatmul.bf16.gmra.mxu0 %v1122
        %v1133 = vpop.f32.mrf.mxu0
        %v1134 = vadd.f32 0.0, %v1133
        %v1135 = vpop.f32.mrf.mxu0
        %1136 = vdwg.mxu0
        %v1137 = vadd.f32 %v1055, %v1134
        %1138 = vrot.lane.b32.xlu0 %v864, 64
        %v1139 = vpop.permute.xlu0 %1138
        %1140 = vrot.lane.b32.xlu0 %v869, 64
        %v1141 = vpop.permute.xlu0 %1140
        %v1143 = vsel %vm806, %v1139, 0
        %v1146 = vsel %vm806, %v1141, 0
        %1148 = vmatpush.bf16.xpose.msra.mxu0 0
        %1149 = vmatpush.bf16.xpose.msra.mxu0 0
        %1150 = vmatpush.bf16.xpose.msra.mxu0 0
        %1151 = vmatpush.bf16.xpose.msra.mxu0 0
        %1152 = vmatpush.bf16.xpose.msra.mxu0 0
        %1153 = vmatpush.bf16.xpose.msra.mxu0 0
        %1154 = vmatpush.bf16.xpose.msra.mxu0 0
        %1155 = vmatpush.bf16.xpose.msra.mxu0 %v1146
        %1156 = vmatmul.bf16.gmra.mxu0 %v1143
        %v1157 = vpop.f32.mrf.mxu0
        %v1158 = vadd.f32 0.0, %v1157
        %v1159 = vpop.f32.mrf.mxu0
        %1160 = vdwg.mxu0
        %v1161 = vsel %vm826, %v1158, -inf
        %1162 = vmax.xlane.f32.xlu0 %v1161
        %v1163 = vpop.xlane.xlu0 %1162
        %v1164 = vsub.f32 %v1158, %v1163
        %v1165 = vmul.f32 %v1164, 1.442695
        %v1166 = vpow.pop %v1165
        %v1167 = vsel %vm826, %v1166, 0.0
        %1168 = vadd.xlane.f32.xlu0 %v1167
        %v1169 = vpop.xlane.xlu0 %1168
        %v1170 = vrcp.pop %v1169
        %v1171 = vmul.f32 %v1166, %v1170
        %v1172 = vpack.c.bf16 %v1171, %v1171
        %1173 = vrot.lane.b32.xlu0 %v905, 64
        %v1174 = vpop.permute.xlu0 %1173
        %v1176 = vsel %vm826, %v1172, 0
        %v1179 = vsel %vm842, %v1174, 0
        %1181 = vmatpush.bf16.msra.mxu0 0
        %1182 = vmatpush.bf16.msra.mxu0 0
        %1183 = vmatpush.bf16.msra.mxu0 0
        %1184 = vmatpush.bf16.msra.mxu0 0
        %1185 = vmatpush.bf16.msra.mxu0 0
        %1186 = vmatpush.bf16.msra.mxu0 0
        %1187 = vmatpush.bf16.msra.mxu0 0
        %1188 = vmatpush.bf16.msra.mxu0 %v1179
        %1189 = vmatmul.bf16.gmra.mxu0 %v1176
        %v1190 = vpop.f32.mrf.mxu0
        %v1191 = vadd.f32 0.0, %v1190
        %v1192 = vpop.f32.mrf.mxu0
        %1193 = vdwg.mxu0
        %v1194 = vpack.c.bf16 %v1191, %v1191
        %v1195 = vld [vmem:[#allocation8 + $0x20] sm:$0xf]
        %v1196 = vld [vmem:[#allocation8 + $0x24] sm:$0xf]
        %v1199 = vunpack.c.l.b16 %v1195
        %v1200 = vunpack.c.l.b16 %v1196
        %v1201 = vpack.c.b16 %v1200, %v1199
        %v1204 = vsel %vm806, %v1194, 0
        %1206 = vmatpush.bf16.msra.mxu0 0
        %1207 = vmatpush.bf16.msra.mxu0 0
        %1208 = vmatpush.bf16.msra.mxu0 0
        %1209 = vmatpush.bf16.msra.mxu0 0
        %1210 = vmatpush.bf16.msra.mxu0 0
        %1211 = vmatpush.bf16.msra.mxu0 0
        %1212 = vmatpush.bf16.msra.mxu0 0
        %1213 = vmatpush.bf16.msra.mxu0 %v1201
        %1214 = vmatmul.bf16.gmra.mxu0 %v1204
        %v1215 = vpop.f32.mrf.mxu0
        %v1216 = vadd.f32 0.0, %v1215
        %v1217 = vpop.f32.mrf.mxu0
        %1218 = vdwg.mxu0
        %v1219 = vadd.f32 %v1137, %v1216
        %1220 = vrot.lane.b32.xlu0 %v864, 48
        %v1221 = vpop.permute.xlu0 %1220
        %1222 = vrot.lane.b32.xlu0 %v869, 48
        %v1223 = vpop.permute.xlu0 %1222
        %v1225 = vsel %vm806, %v1221, 0
        %v1228 = vsel %vm806, %v1223, 0
        %1230 = vmatpush.bf16.xpose.msra.mxu0 0
        %1231 = vmatpush.bf16.xpose.msra.mxu0 0
        %1232 = vmatpush.bf16.xpose.msra.mxu0 0
        %1233 = vmatpush.bf16.xpose.msra.mxu0 0
        %1234 = vmatpush.bf16.xpose.msra.mxu0 0
        %1235 = vmatpush.bf16.xpose.msra.mxu0 0
        %1236 = vmatpush.bf16.xpose.msra.mxu0 0
        %1237 = vmatpush.bf16.xpose.msra.mxu0 %v1228
        %1238 = vmatmul.bf16.gmra.mxu0 %v1225
        %v1239 = vpop.f32.mrf.mxu0
        %v1240 = vadd.f32 0.0, %v1239
        %v1241 = vpop.f32.mrf.mxu0
        %1242 = vdwg.mxu0
        %v1243 = vsel %vm826, %v1240, -inf
        %1244 = vmax.xlane.f32.xlu0 %v1243
        %v1245 = vpop.xlane.xlu0 %1244
        %v1246 = vsub.f32 %v1240, %v1245
        %v1247 = vmul.f32 %v1246, 1.442695
        %v1248 = vpow.pop %v1247
        %v1249 = vsel %vm826, %v1248, 0.0
        %1250 = vadd.xlane.f32.xlu0 %v1249
        %v1251 = vpop.xlane.xlu0 %1250
        %v1252 = vrcp.pop %v1251
        %v1253 = vmul.f32 %v1248, %v1252
        %v1254 = vpack.c.bf16 %v1253, %v1253
        %1255 = vrot.lane.b32.xlu0 %v905, 48
        %v1256 = vpop.permute.xlu0 %1255
        %v1258 = vsel %vm826, %v1254, 0
        %v1261 = vsel %vm842, %v1256, 0
        %1263 = vmatpush.bf16.msra.mxu0 0
        %1264 = vmatpush.bf16.msra.mxu0 0
        %1265 = vmatpush.bf16.msra.mxu0 0
        %1266 = vmatpush.bf16.msra.mxu0 0
        %1267 = vmatpush.bf16.msra.mxu0 0
        %1268 = vmatpush.bf16.msra.mxu0 0
        %1269 = vmatpush.bf16.msra.mxu0 0
        %1270 = vmatpush.bf16.msra.mxu0 %v1261
        %1271 = vmatmul.bf16.gmra.mxu0 %v1258
        %v1272 = vpop.f32.mrf.mxu0
        %v1273 = vadd.f32 0.0, %v1272
        %v1274 = vpop.f32.mrf.mxu0
        %1275 = vdwg.mxu0
        %v1276 = vpack.c.bf16 %v1273, %v1273
        %v1277 = vld [vmem:[#allocation8 + $0x28] sm:$0xf]
        %v1278 = vld [vmem:[#allocation8 + $0x2c] sm:$0xf]
        %v1281 = vunpack.c.l.b16 %v1277
        %v1282 = vunpack.c.l.b16 %v1278
        %v1283 = vpack.c.b16 %v1282, %v1281
        %v1286 = vsel %vm806, %v1276, 0
        %1288 = vmatpush.bf16.msra.mxu0 0
        %1289 = vmatpush.bf16.msra.mxu0 0
        %1290 = vmatpush.bf16.msra.mxu0 0
        %1291 = vmatpush.bf16.msra.mxu0 0
        %1292 = vmatpush.bf16.msra.mxu0 0
        %1293 = vmatpush.bf16.msra.mxu0 0
        %1294 = vmatpush.bf16.msra.mxu0 0
        %1295 = vmatpush.bf16.msra.mxu0 %v1283
        %1296 = vmatmul.bf16.gmra.mxu0 %v1286
        %v1297 = vpop.f32.mrf.mxu0
        %v1298 = vadd.f32 0.0, %v1297
        %v1299 = vpop.f32.mrf.mxu0
        %1300 = vdwg.mxu0
        %v1301 = vadd.f32 %v1219, %v1298
        %1302 = vrot.lane.b32.xlu0 %v864, 32
        %v1303 = vpop.permute.xlu0 %1302
        %1304 = vrot.lane.b32.xlu0 %v869, 32
        %v1305 = vpop.permute.xlu0 %1304
        %v1307 = vsel %vm806, %v1303, 0
        %v1310 = vsel %vm806, %v1305, 0
        %1312 = vmatpush.bf16.xpose.msra.mxu0 0
        %1313 = vmatpush.bf16.xpose.msra.mxu0 0
        %1314 = vmatpush.bf16.xpose.msra.mxu0 0
        %1315 = vmatpush.bf16.xpose.msra.mxu0 0
        %1316 = vmatpush.bf16.xpose.msra.mxu0 0
        %1317 = vmatpush.bf16.xpose.msra.mxu0 0
        %1318 = vmatpush.bf16.xpose.msra.mxu0 0
        %1319 = vmatpush.bf16.xpose.msra.mxu0 %v1310
        %1320 = vmatmul.bf16.gmra.mxu0 %v1307
        %v1321 = vpop.f32.mrf.mxu0
        %v1322 = vadd.f32 0.0, %v1321
        %v1323 = vpop.f32.mrf.mxu0
        %1324 = vdwg.mxu0
        %v1325 = vsel %vm826, %v1322, -inf
        %1326 = vmax.xlane.f32.xlu0 %v1325
        %v1327 = vpop.xlane.xlu0 %1326
        %v1328 = vsub.f32 %v1322, %v1327
        %v1329 = vmul.f32 %v1328, 1.442695
        %v1330 = vpow.pop %v1329
        %v1331 = vsel %vm826, %v1330, 0.0
        %1332 = vadd.xlane.f32.xlu0 %v1331
        %v1333 = vpop.xlane.xlu0 %1332
        %v1334 = vrcp.pop %v1333
        %v1335 = vmul.f32 %v1330, %v1334
        %v1336 = vpack.c.bf16 %v1335, %v1335
        %1337 = vrot.lane.b32.xlu0 %v905, 32
        %v1338 = vpop.permute.xlu0 %1337
        %v1340 = vsel %vm826, %v1336, 0
        %v1343 = vsel %vm842, %v1338, 0
        %1345 = vmatpush.bf16.msra.mxu0 0
        %1346 = vmatpush.bf16.msra.mxu0 0
        %1347 = vmatpush.bf16.msra.mxu0 0
        %1348 = vmatpush.bf16.msra.mxu0 0
        %1349 = vmatpush.bf16.msra.mxu0 0
        %1350 = vmatpush.bf16.msra.mxu0 0
        %1351 = vmatpush.bf16.msra.mxu0 0
        %1352 = vmatpush.bf16.msra.mxu0 %v1343
        %1353 = vmatmul.bf16.gmra.mxu0 %v1340
        %v1354 = vpop.f32.mrf.mxu0
        %v1355 = vadd.f32 0.0, %v1354
        %v1356 = vpop.f32.mrf.mxu0
        %1357 = vdwg.mxu0
        %v1358 = vpack.c.bf16 %v1355, %v1355
        %v1359 = vld [vmem:[#allocation8 + $0x30] sm:$0xf]
        %v1360 = vld [vmem:[#allocation8 + $0x34] sm:$0xf]
        %v1363 = vunpack.c.l.b16 %v1359
        %v1364 = vunpack.c.l.b16 %v1360
        %v1365 = vpack.c.b16 %v1364, %v1363
        %v1368 = vsel %vm806, %v1358, 0
        %1370 = vmatpush.bf16.msra.mxu0 0
        %1371 = vmatpush.bf16.msra.mxu0 0
        %1372 = vmatpush.bf16.msra.mxu0 0
        %1373 = vmatpush.bf16.msra.mxu0 0
        %1374 = vmatpush.bf16.msra.mxu0 0
        %1375 = vmatpush.bf16.msra.mxu0 0
        %1376 = vmatpush.bf16.msra.mxu0 0
        %1377 = vmatpush.bf16.msra.mxu0 %v1365
        %1378 = vmatmul.bf16.gmra.mxu0 %v1368
        %v1379 = vpop.f32.mrf.mxu0
        %v1380 = vadd.f32 0.0, %v1379
        %v1381 = vpop.f32.mrf.mxu0
        %1382 = vdwg.mxu0
        %v1383 = vadd.f32 %v1301, %v1380
        %1384 = vrot.lane.b32.xlu0 %v864, 16
        %v1385 = vpop.permute.xlu0 %1384
        %1386 = vrot.lane.b32.xlu0 %v869, 16
        %v1387 = vpop.permute.xlu0 %1386
        %v1389 = vsel %vm806, %v1385, 0
        %v1392 = vsel %vm806, %v1387, 0
        %1394 = vmatpush.bf16.xpose.msra.mxu0 0
        %1395 = vmatpush.bf16.xpose.msra.mxu0 0
        %1396 = vmatpush.bf16.xpose.msra.mxu0 0
        %1397 = vmatpush.bf16.xpose.msra.mxu0 0
        %1398 = vmatpush.bf16.xpose.msra.mxu0 0
        %1399 = vmatpush.bf16.xpose.msra.mxu0 0
        %1400 = vmatpush.bf16.xpose.msra.mxu0 0
        %1401 = vmatpush.bf16.xpose.msra.mxu0 %v1392
        %1402 = vmatmul.bf16.gmra.mxu0 %v1389
        %v1403 = vpop.f32.mrf.mxu0
        %v1404 = vadd.f32 0.0, %v1403
        %v1405 = vpop.f32.mrf.mxu0
        %1406 = vdwg.mxu0
        %v1407 = vsel %vm826, %v1404, -inf
        %1408 = vmax.xlane.f32.xlu0 %v1407
        %v1409 = vpop.xlane.xlu0 %1408
        %v1410 = vsub.f32 %v1404, %v1409
        %v1411 = vmul.f32 %v1410, 1.442695
        %v1412 = vpow.pop %v1411
        %v1413 = vsel %vm826, %v1412, 0.0
        %1414 = vadd.xlane.f32.xlu0 %v1413
        %v1415 = vpop.xlane.xlu0 %1414
        %v1416 = vrcp.pop %v1415
        %v1417 = vmul.f32 %v1412, %v1416
        %v1418 = vpack.c.bf16 %v1417, %v1417
        %1419 = vrot.lane.b32.xlu0 %v905, 16
        %v1420 = vpop.permute.xlu0 %1419
        %v1422 = vsel %vm826, %v1418, 0
        %v1425 = vsel %vm842, %v1420, 0
        %1427 = vmatpush.bf16.msra.mxu0 0
        %1428 = vmatpush.bf16.msra.mxu0 0
        %1429 = vmatpush.bf16.msra.mxu0 0
        %1430 = vmatpush.bf16.msra.mxu0 0
        %1431 = vmatpush.bf16.msra.mxu0 0
        %1432 = vmatpush.bf16.msra.mxu0 0
        %1433 = vmatpush.bf16.msra.mxu0 0
        %1434 = vmatpush.bf16.msra.mxu0 %v1425
        %1435 = vmatmul.bf16.gmra.mxu0 %v1422
        %v1436 = vpop.f32.mrf.mxu0
        %v1437 = vadd.f32 0.0, %v1436
        %v1438 = vpop.f32.mrf.mxu0
        %1439 = vdwg.mxu0
        %v1440 = vpack.c.bf16 %v1437, %v1437
        %v1441 = vld [vmem:[#allocation8 + $0x38] sm:$0xf]
        %v1442 = vld [vmem:[#allocation8 + $0x3c] sm:$0xf]
        %v1445 = vunpack.c.l.b16 %v1441
        %v1446 = vunpack.c.l.b16 %v1442
        %v1447 = vpack.c.b16 %v1446, %v1445
        %v1450 = vsel %vm806, %v1440, 0
        %1452 = vmatpush.bf16.msra.mxu0 0
        %1453 = vmatpush.bf16.msra.mxu0 0
        %1454 = vmatpush.bf16.msra.mxu0 0
        %1455 = vmatpush.bf16.msra.mxu0 0
        %1456 = vmatpush.bf16.msra.mxu0 0
        %1457 = vmatpush.bf16.msra.mxu0 0
        %1458 = vmatpush.bf16.msra.mxu0 0
        %1459 = vmatpush.bf16.msra.mxu0 %v1447
        %1460 = vmatmul.bf16.gmra.mxu0 %v1450
        %v1461 = vpop.f32.mrf.mxu0
        %v1462 = vadd.f32 0.0, %v1461
        %v1463 = vpop.f32.mrf.mxu0
        %1464 = vdwg.mxu0
        %v1465 = vadd.f32 %v1383, %v1462
        %v1467 = vsel %vm806, %v801, 0
        %v1470 = vsel %vm806, %v803, 0
        %1472 = vmatpush.bf16.xpose.msra.mxu0 0
        %1473 = vmatpush.bf16.xpose.msra.mxu0 0
        %1474 = vmatpush.bf16.xpose.msra.mxu0 0
        %1475 = vmatpush.bf16.xpose.msra.mxu0 0
        %1476 = vmatpush.bf16.xpose.msra.mxu0 0
        %1477 = vmatpush.bf16.xpose.msra.mxu0 0
        %1478 = vmatpush.bf16.xpose.msra.mxu0 0
        %1479 = vmatpush.bf16.xpose.msra.mxu0 %v1470
        %1480 = vmatmul.bf16.gmra.mxu0 %v1467
        %v1481 = vpop.f32.mrf.mxu0
        %v1482 = vadd.f32 0.0, %v1481
        %v1483 = vpop.f32.mrf.mxu0
        %1484 = vdwg.mxu0
        %v1485 = vsel %vm826, %v1482, -inf
        %1486 = vmax.xlane.f32.xlu0 %v1485
        %v1487 = vpop.xlane.xlu0 %1486
        %v1488 = vsub.f32 %v1482, %v1487
        %v1489 = vmul.f32 %v1488, 1.442695
        %v1490 = vpow.pop %v1489
        %v1491 = vsel %vm826, %v1490, 0.0
        %1492 = vadd.xlane.f32.xlu0 %v1491
        %v1493 = vpop.xlane.xlu0 %1492
        %v1494 = vrcp.pop %v1493
        %v1495 = vmul.f32 %v1490, %v1494
        %v1496 = vpack.c.bf16 %v1495, %v1495
        %v1498 = vsel %vm826, %v1496, 0
        %v1501 = vsel %vm842, %v805, 0
        %1503 = vmatpush.bf16.msra.mxu0 0
        %1504 = vmatpush.bf16.msra.mxu0 0
        %1505 = vmatpush.bf16.msra.mxu0 0
        %1506 = vmatpush.bf16.msra.mxu0 0
        %1507 = vmatpush.bf16.msra.mxu0 0
        %1508 = vmatpush.bf16.msra.mxu0 0
        %1509 = vmatpush.bf16.msra.mxu0 0
        %1510 = vmatpush.bf16.msra.mxu0 %v1501
        %1511 = vmatmul.bf16.gmra.mxu0 %v1498
        %v1512 = vpop.f32.mrf.mxu0
        %v1513 = vadd.f32 0.0, %v1512
        %v1514 = vpop.f32.mrf.mxu0
        %1515 = vdwg.mxu0
        %v1516 = vpack.c.bf16 %v1513, %v1513
        %v1518 = vunpack.c.l.b16 %v801
        %v1519 = vpack.c.b16 %v1518, %v1518
        %1520 = vrot.lane.b32.xlu0 %v1519, 112
        %v1521 = vpop.permute.xlu0 %1520
        %v1523 = vunpack.c.l.b16 %v803
        %v1524 = vpack.c.b16 %v1523, %v1523
        %1525 = vrot.lane.b32.xlu0 %v1524, 112
        %v1526 = vpop.permute.xlu0 %1525
        %v1528 = vsel %vm806, %v1521, 0
        %v1531 = vsel %vm806, %v1526, 0
        %1533 = vmatpush.bf16.xpose.msra.mxu0 0
        %1534 = vmatpush.bf16.xpose.msra.mxu0 0
        %1535 = vmatpush.bf16.xpose.msra.mxu0 0
        %1536 = vmatpush.bf16.xpose.msra.mxu0 0
        %1537 = vmatpush.bf16.xpose.msra.mxu0 0
        %1538 = vmatpush.bf16.xpose.msra.mxu0 0
        %1539 = vmatpush.bf16.xpose.msra.mxu0 0
        %1540 = vmatpush.bf16.xpose.msra.mxu0 %v1531
        %1541 = vmatmul.bf16.gmra.mxu0 %v1528
        %v1542 = vpop.f32.mrf.mxu0
        %v1543 = vadd.f32 0.0, %v1542
        %v1544 = vpop.f32.mrf.mxu0
        %1545 = vdwg.mxu0
        %v1546 = vsel %vm826, %v1543, -inf
        %1547 = vmax.xlane.f32.xlu0 %v1546
        %v1548 = vpop.xlane.xlu0 %1547
        %v1549 = vsub.f32 %v1543, %v1548
        %v1550 = vmul.f32 %v1549, 1.442695
        %v1551 = vpow.pop %v1550
        %v1552 = vsel %vm826, %v1551, 0.0
        %1553 = vadd.xlane.f32.xlu0 %v1552
        %v1554 = vpop.xlane.xlu0 %1553
        %v1555 = vrcp.pop %v1554
        %v1556 = vmul.f32 %v1551, %v1555
        %v1557 = vpack.c.bf16 %v1556, %v1556
        %v1559 = vunpack.c.l.b16 %v805
        %v1560 = vpack.c.b16 %v1559, %v1559
        %1561 = vrot.lane.b32.xlu0 %v1560, 112
        %v1562 = vpop.permute.xlu0 %1561
        %v1564 = vsel %vm826, %v1557, 0
        %v1567 = vsel %vm842, %v1562, 0
        %1569 = vmatpush.bf16.msra.mxu0 0
        %1570 = vmatpush.bf16.msra.mxu0 0
        %1571 = vmatpush.bf16.msra.mxu0 0
        %1572 = vmatpush.bf16.msra.mxu0 0
        %1573 = vmatpush.bf16.msra.mxu0 0
        %1574 = vmatpush.bf16.msra.mxu0 0
        %1575 = vmatpush.bf16.msra.mxu0 0
        %1576 = vmatpush.bf16.msra.mxu0 %v1567
        %1577 = vmatmul.bf16.gmra.mxu0 %v1564
        %v1578 = vpop.f32.mrf.mxu0
        %v1579 = vadd.f32 0.0, %v1578
        %v1580 = vpop.f32.mrf.mxu0
        %1581 = vdwg.mxu0
        %v1582 = vpack.c.bf16 %v1579, %v1579
        %v1584 = vsel %vm806, %v1582, 0
        %1586 = vmatpush.bf16.msra.mxu0 0
        %1587 = vmatpush.bf16.msra.mxu0 0
        %1588 = vmatpush.bf16.msra.mxu0 0
        %1589 = vmatpush.bf16.msra.mxu0 0
        %1590 = vmatpush.bf16.msra.mxu0 0
        %1591 = vmatpush.bf16.msra.mxu0 0
        %1592 = vmatpush.bf16.msra.mxu0 0
        %1593 = vmatpush.bf16.msra.mxu0 %v934
        %1594 = vmatmul.bf16.gmra.mxu0 %v1584
        %v1595 = vpop.f32.mrf.mxu0
        %v1596 = vadd.f32 0.0, %v1595
        %v1597 = vpop.f32.mrf.mxu0
        %1598 = vdwg.mxu0
        %v1600 = vsel %vm806, %v1516, 0
        %1602 = vmatpush.bf16.msra.mxu0 0
        %1603 = vmatpush.bf16.msra.mxu0 0
        %1604 = vmatpush.bf16.msra.mxu0 0
        %1605 = vmatpush.bf16.msra.mxu0 0
        %1606 = vmatpush.bf16.msra.mxu0 0
        %1607 = vmatpush.bf16.msra.mxu0 0
        %1608 = vmatpush.bf16.msra.mxu0 0
        %1609 = vmatpush.bf16.msra.mxu0 %v956
        %1610 = vmatmul.bf16.gmra.mxu0 %v1600
        %v1611 = vpop.f32.mrf.mxu0
        %v1612 = vadd.f32 %v1596, %v1611
        %v1613 = vpop.f32.mrf.mxu0
        %1614 = vdwg.mxu0
        %1615 = vrot.lane.b32.xlu0 %v1519, 96
        %v1616 = vpop.permute.xlu0 %1615
        %1617 = vrot.lane.b32.xlu0 %v1524, 96
        %v1618 = vpop.permute.xlu0 %1617
        %v1620 = vsel %vm806, %v1616, 0
        %v1623 = vsel %vm806, %v1618, 0
        %1625 = vmatpush.bf16.xpose.msra.mxu0 0
        %1626 = vmatpush.bf16.xpose.msra.mxu0 0
        %1627 = vmatpush.bf16.xpose.msra.mxu0 0
        %1628 = vmatpush.bf16.xpose.msra.mxu0 0
        %1629 = vmatpush.bf16.xpose.msra.mxu0 0
        %1630 = vmatpush.bf16.xpose.msra.mxu0 0
        %1631 = vmatpush.bf16.xpose.msra.mxu0 0
        %1632 = vmatpush.bf16.xpose.msra.mxu0 %v1623
        %1633 = vmatmul.bf16.gmra.mxu0 %v1620
        %v1634 = vpop.f32.mrf.mxu0
        %v1635 = vadd.f32 0.0, %v1634
        %v1636 = vpop.f32.mrf.mxu0
        %1637 = vdwg.mxu0
        %v1638 = vsel %vm826, %v1635, -inf
        %1639 = vmax.xlane.f32.xlu0 %v1638
        %v1640 = vpop.xlane.xlu0 %1639
        %v1641 = vsub.f32 %v1635, %v1640
        %v1642 = vmul.f32 %v1641, 1.442695
        %v1643 = vpow.pop %v1642
        %v1644 = vsel %vm826, %v1643, 0.0
        %1645 = vadd.xlane.f32.xlu0 %v1644
        %v1646 = vpop.xlane.xlu0 %1645
        %v1647 = vrcp.pop %v1646
        %v1648 = vmul.f32 %v1643, %v1647
        %v1649 = vpack.c.bf16 %v1648, %v1648
        %1650 = vrot.lane.b32.xlu0 %v1560, 96
        %v1651 = vpop.permute.xlu0 %1650
        %v1653 = vsel %vm826, %v1649, 0
        %v1656 = vsel %vm842, %v1651, 0
        %1658 = vmatpush.bf16.msra.mxu0 0
        %1659 = vmatpush.bf16.msra.mxu0 0
        %1660 = vmatpush.bf16.msra.mxu0 0
        %1661 = vmatpush.bf16.msra.mxu0 0
        %1662 = vmatpush.bf16.msra.mxu0 0
        %1663 = vmatpush.bf16.msra.mxu0 0
        %1664 = vmatpush.bf16.msra.mxu0 0
        %1665 = vmatpush.bf16.msra.mxu0 %v1656
        %1666 = vmatmul.bf16.gmra.mxu0 %v1653
        %v1667 = vpop.f32.mrf.mxu0
        %v1668 = vadd.f32 0.0, %v1667
        %v1669 = vpop.f32.mrf.mxu0
        %1670 = vdwg.mxu0
        %v1671 = vpack.c.bf16 %v1668, %v1668
        %v1673 = vsel %vm806, %v1671, 0
        %1675 = vmatpush.bf16.msra.mxu0 0
        %1676 = vmatpush.bf16.msra.mxu0 0
        %1677 = vmatpush.bf16.msra.mxu0 0
        %1678 = vmatpush.bf16.msra.mxu0 0
        %1679 = vmatpush.bf16.msra.mxu0 0
        %1680 = vmatpush.bf16.msra.mxu0 0
        %1681 = vmatpush.bf16.msra.mxu0 0
        %1682 = vmatpush.bf16.msra.mxu0 %v1037
        %1683 = vmatmul.bf16.gmra.mxu0 %v1673
        %v1684 = vpop.f32.mrf.mxu0
        %v1685 = vadd.f32 0.0, %v1684
        %v1686 = vpop.f32.mrf.mxu0
        %1687 = vdwg.mxu0
        %v1688 = vadd.f32 %v1612, %v1685
        %1689 = vrot.lane.b32.xlu0 %v1519, 80
        %v1690 = vpop.permute.xlu0 %1689
        %1691 = vrot.lane.b32.xlu0 %v1524, 80
        %v1692 = vpop.permute.xlu0 %1691
        %v1694 = vsel %vm806, %v1690, 0
        %v1697 = vsel %vm806, %v1692, 0
        %1699 = vmatpush.bf16.xpose.msra.mxu0 0
        %1700 = vmatpush.bf16.xpose.msra.mxu0 0
        %1701 = vmatpush.bf16.xpose.msra.mxu0 0
        %1702 = vmatpush.bf16.xpose.msra.mxu0 0
        %1703 = vmatpush.bf16.xpose.msra.mxu0 0
        %1704 = vmatpush.bf16.xpose.msra.mxu0 0
        %1705 = vmatpush.bf16.xpose.msra.mxu0 0
        %1706 = vmatpush.bf16.xpose.msra.mxu0 %v1697
        %1707 = vmatmul.bf16.gmra.mxu0 %v1694
        %v1708 = vpop.f32.mrf.mxu0
        %v1709 = vadd.f32 0.0, %v1708
        %v1710 = vpop.f32.mrf.mxu0
        %1711 = vdwg.mxu0
        %v1712 = vsel %vm826, %v1709, -inf
        %1713 = vmax.xlane.f32.xlu0 %v1712
        %v1714 = vpop.xlane.xlu0 %1713
        %v1715 = vsub.f32 %v1709, %v1714
        %v1716 = vmul.f32 %v1715, 1.442695
        %v1717 = vpow.pop %v1716
        %v1718 = vsel %vm826, %v1717, 0.0
        %1719 = vadd.xlane.f32.xlu0 %v1718
        %v1720 = vpop.xlane.xlu0 %1719
        %v1721 = vrcp.pop %v1720
        %v1722 = vmul.f32 %v1717, %v1721
        %v1723 = vpack.c.bf16 %v1722, %v1722
        %1724 = vrot.lane.b32.xlu0 %v1560, 80
        %v1725 = vpop.permute.xlu0 %1724
        %v1727 = vsel %vm826, %v1723, 0
        %v1730 = vsel %vm842, %v1725, 0
        %1732 = vmatpush.bf16.msra.mxu0 0
        %1733 = vmatpush.bf16.msra.mxu0 0
        %1734 = vmatpush.bf16.msra.mxu0 0
        %1735 = vmatpush.bf16.msra.mxu0 0
        %1736 = vmatpush.bf16.msra.mxu0 0
        %1737 = vmatpush.bf16.msra.mxu0 0
        %1738 = vmatpush.bf16.msra.mxu0 0
        %1739 = vmatpush.bf16.msra.mxu0 %v1730
        %1740 = vmatmul.bf16.gmra.mxu0 %v1727
        %v1741 = vpop.f32.mrf.mxu0
        %v1742 = vadd.f32 0.0, %v1741
        %v1743 = vpop.f32.mrf.mxu0
        %1744 = vdwg.mxu0
        %v1745 = vpack.c.bf16 %v1742, %v1742
        %v1747 = vsel %vm806, %v1745, 0
        %1749 = vmatpush.bf16.msra.mxu0 0
        %1750 = vmatpush.bf16.msra.mxu0 0
        %1751 = vmatpush.bf16.msra.mxu0 0
        %1752 = vmatpush.bf16.msra.mxu0 0
        %1753 = vmatpush.bf16.msra.mxu0 0
        %1754 = vmatpush.bf16.msra.mxu0 0
        %1755 = vmatpush.bf16.msra.mxu0 0
        %1756 = vmatpush.bf16.msra.mxu0 %v1119
        %1757 = vmatmul.bf16.gmra.mxu0 %v1747
        %v1758 = vpop.f32.mrf.mxu0
        %v1759 = vadd.f32 0.0, %v1758
        %v1760 = vpop.f32.mrf.mxu0
        %1761 = vdwg.mxu0
        %v1762 = vadd.f32 %v1688, %v1759
        %1763 = vrot.lane.b32.xlu0 %v1519, 64
        %v1764 = vpop.permute.xlu0 %1763
        %1765 = vrot.lane.b32.xlu0 %v1524, 64
        %v1766 = vpop.permute.xlu0 %1765
        %v1768 = vsel %vm806, %v1764, 0
        %v1771 = vsel %vm806, %v1766, 0
        %1773 = vmatpush.bf16.xpose.msra.mxu0 0
        %1774 = vmatpush.bf16.xpose.msra.mxu0 0
        %1775 = vmatpush.bf16.xpose.msra.mxu0 0
        %1776 = vmatpush.bf16.xpose.msra.mxu0 0
        %1777 = vmatpush.bf16.xpose.msra.mxu0 0
        %1778 = vmatpush.bf16.xpose.msra.mxu0 0
        %1779 = vmatpush.bf16.xpose.msra.mxu0 0
        %1780 = vmatpush.bf16.xpose.msra.mxu0 %v1771
        %1781 = vmatmul.bf16.gmra.mxu0 %v1768
        %v1782 = vpop.f32.mrf.mxu0
        %v1783 = vadd.f32 0.0, %v1782
        %v1784 = vpop.f32.mrf.mxu0
        %1785 = vdwg.mxu0
        %v1786 = vsel %vm826, %v1783, -inf
        %1787 = vmax.xlane.f32.xlu0 %v1786
        %v1788 = vpop.xlane.xlu0 %1787
        %v1789 = vsub.f32 %v1783, %v1788
        %v1790 = vmul.f32 %v1789, 1.442695
        %v1791 = vpow.pop %v1790
        %v1792 = vsel %vm826, %v1791, 0.0
        %1793 = vadd.xlane.f32.xlu0 %v1792
        %v1794 = vpop.xlane.xlu0 %1793
        %v1795 = vrcp.pop %v1794
        %v1796 = vmul.f32 %v1791, %v1795
        %v1797 = vpack.c.bf16 %v1796, %v1796
        %1798 = vrot.lane.b32.xlu0 %v1560, 64
        %v1799 = vpop.permute.xlu0 %1798
        %v1801 = vsel %vm826, %v1797, 0
        %v1804 = vsel %vm842, %v1799, 0
        %1806 = vmatpush.bf16.msra.mxu0 0
        %1807 = vmatpush.bf16.msra.mxu0 0
        %1808 = vmatpush.bf16.msra.mxu0 0
        %1809 = vmatpush.bf16.msra.mxu0 0
        %1810 = vmatpush.bf16.msra.mxu0 0
        %1811 = vmatpush.bf16.msra.mxu0 0
        %1812 = vmatpush.bf16.msra.mxu0 0
        %1813 = vmatpush.bf16.msra.mxu0 %v1804
        %1814 = vmatmul.bf16.gmra.mxu0 %v1801
        %v1815 = vpop.f32.mrf.mxu0
        %v1816 = vadd.f32 0.0, %v1815
        %v1817 = vpop.f32.mrf.mxu0
        %1818 = vdwg.mxu0
        %v1819 = vpack.c.bf16 %v1816, %v1816
        %v1821 = vsel %vm806, %v1819, 0
        %1823 = vmatpush.bf16.msra.mxu0 0
        %1824 = vmatpush.bf16.msra.mxu0 0
        %1825 = vmatpush.bf16.msra.mxu0 0
        %1826 = vmatpush.bf16.msra.mxu0 0
        %1827 = vmatpush.bf16.msra.mxu0 0
        %1828 = vmatpush.bf16.msra.mxu0 0
        %1829 = vmatpush.bf16.msra.mxu0 0
        %1830 = vmatpush.bf16.msra.mxu0 %v1201
        %1831 = vmatmul.bf16.gmra.mxu0 %v1821
        %v1832 = vpop.f32.mrf.mxu0
        %v1833 = vadd.f32 0.0, %v1832
        %v1834 = vpop.f32.mrf.mxu0
        %1835 = vdwg.mxu0
        %v1836 = vadd.f32 %v1762, %v1833
        %1837 = vrot.lane.b32.xlu0 %v1519, 48
        %v1838 = vpop.permute.xlu0 %1837
        %1839 = vrot.lane.b32.xlu0 %v1524, 48
        %v1840 = vpop.permute.xlu0 %1839
        %v1842 = vsel %vm806, %v1838, 0
        %v1845 = vsel %vm806, %v1840, 0
        %1847 = vmatpush.bf16.xpose.msra.mxu0 0
        %1848 = vmatpush.bf16.xpose.msra.mxu0 0
        %1849 = vmatpush.bf16.xpose.msra.mxu0 0
        %1850 = vmatpush.bf16.xpose.msra.mxu0 0
        %1851 = vmatpush.bf16.xpose.msra.mxu0 0
        %1852 = vmatpush.bf16.xpose.msra.mxu0 0
        %1853 = vmatpush.bf16.xpose.msra.mxu0 0
        %1854 = vmatpush.bf16.xpose.msra.mxu0 %v1845
        %1855 = vmatmul.bf16.gmra.mxu0 %v1842
        %v1856 = vpop.f32.mrf.mxu0
        %v1857 = vadd.f32 0.0, %v1856
        %v1858 = vpop.f32.mrf.mxu0
        %1859 = vdwg.mxu0
        %v1860 = vsel %vm826, %v1857, -inf
        %1861 = vmax.xlane.f32.xlu0 %v1860
        %v1862 = vpop.xlane.xlu0 %1861
        %v1863 = vsub.f32 %v1857, %v1862
        %v1864 = vmul.f32 %v1863, 1.442695
        %v1865 = vpow.pop %v1864
        %v1866 = vsel %vm826, %v1865, 0.0
        %1867 = vadd.xlane.f32.xlu0 %v1866
        %v1868 = vpop.xlane.xlu0 %1867
        %v1869 = vrcp.pop %v1868
        %v1870 = vmul.f32 %v1865, %v1869
        %v1871 = vpack.c.bf16 %v1870, %v1870
        %1872 = vrot.lane.b32.xlu0 %v1560, 48
        %v1873 = vpop.permute.xlu0 %1872
        %v1875 = vsel %vm826, %v1871, 0
        %v1878 = vsel %vm842, %v1873, 0
        %1880 = vmatpush.bf16.msra.mxu0 0
        %1881 = vmatpush.bf16.msra.mxu0 0
        %1882 = vmatpush.bf16.msra.mxu0 0
        %1883 = vmatpush.bf16.msra.mxu0 0
        %1884 = vmatpush.bf16.msra.mxu0 0
        %1885 = vmatpush.bf16.msra.mxu0 0
        %1886 = vmatpush.bf16.msra.mxu0 0
        %1887 = vmatpush.bf16.msra.mxu0 %v1878
        %1888 = vmatmul.bf16.gmra.mxu0 %v1875
        %v1889 = vpop.f32.mrf.mxu0
        %v1890 = vadd.f32 0.0, %v1889
        %v1891 = vpop.f32.mrf.mxu0
        %1892 = vdwg.mxu0
        %v1893 = vpack.c.bf16 %v1890, %v1890
        %v1895 = vsel %vm806, %v1893, 0
        %1897 = vmatpush.bf16.msra.mxu0 0
        %1898 = vmatpush.bf16.msra.mxu0 0
        %1899 = vmatpush.bf16.msra.mxu0 0
        %1900 = vmatpush.bf16.msra.mxu0 0
        %1901 = vmatpush.bf16.msra.mxu0 0
        %1902 = vmatpush.bf16.msra.mxu0 0
        %1903 = vmatpush.bf16.msra.mxu0 0
        %1904 = vmatpush.bf16.msra.mxu0 %v1283
        %1905 = vmatmul.bf16.gmra.mxu0 %v1895
        %v1906 = vpop.f32.mrf.mxu0
        %v1907 = vadd.f32 0.0, %v1906
        %v1908 = vpop.f32.mrf.mxu0
        %1909 = vdwg.mxu0
        %v1910 = vadd.f32 %v1836, %v1907
        %1911 = vrot.lane.b32.xlu0 %v1519, 32
        %v1912 = vpop.permute.xlu0 %1911
        %1913 = vrot.lane.b32.xlu0 %v1524, 32
        %v1914 = vpop.permute.xlu0 %1913
        %v1916 = vsel %vm806, %v1912, 0
        %v1919 = vsel %vm806, %v1914, 0
        %1921 = vmatpush.bf16.xpose.msra.mxu0 0
        %1922 = vmatpush.bf16.xpose.msra.mxu0 0
        %1923 = vmatpush.bf16.xpose.msra.mxu0 0
        %1924 = vmatpush.bf16.xpose.msra.mxu0 0
        %1925 = vmatpush.bf16.xpose.msra.mxu0 0
        %1926 = vmatpush.bf16.xpose.msra.mxu0 0
        %1927 = vmatpush.bf16.xpose.msra.mxu0 0
        %1928 = vmatpush.bf16.xpose.msra.mxu0 %v1919
        %1929 = vmatmul.bf16.gmra.mxu0 %v1916
        %v1930 = vpop.f32.mrf.mxu0
        %v1931 = vadd.f32 0.0, %v1930
        %v1932 = vpop.f32.mrf.mxu0
        %1933 = vdwg.mxu0
        %v1934 = vsel %vm826, %v1931, -inf
        %1935 = vmax.xlane.f32.xlu0 %v1934
        %v1936 = vpop.xlane.xlu0 %1935
        %v1937 = vsub.f32 %v1931, %v1936
        %v1938 = vmul.f32 %v1937, 1.442695
        %v1939 = vpow.pop %v1938
        %v1940 = vsel %vm826, %v1939, 0.0
        %1941 = vadd.xlane.f32.xlu0 %v1940
        %v1942 = vpop.xlane.xlu0 %1941
        %v1943 = vrcp.pop %v1942
        %v1944 = vmul.f32 %v1939, %v1943
        %v1945 = vpack.c.bf16 %v1944, %v1944
        %1946 = vrot.lane.b32.xlu0 %v1560, 32
        %v1947 = vpop.permute.xlu0 %1946
        %v1949 = vsel %vm826, %v1945, 0
        %v1952 = vsel %vm842, %v1947, 0
        %1954 = vmatpush.bf16.msra.mxu0 0
        %1955 = vmatpush.bf16.msra.mxu0 0
        %1956 = vmatpush.bf16.msra.mxu0 0
        %1957 = vmatpush.bf16.msra.mxu0 0
        %1958 = vmatpush.bf16.msra.mxu0 0
        %1959 = vmatpush.bf16.msra.mxu0 0
        %1960 = vmatpush.bf16.msra.mxu0 0
        %1961 = vmatpush.bf16.msra.mxu0 %v1952
        %1962 = vmatmul.bf16.gmra.mxu0 %v1949
        %v1963 = vpop.f32.mrf.mxu0
        %v1964 = vadd.f32 0.0, %v1963
        %v1965 = vpop.f32.mrf.mxu0
        %1966 = vdwg.mxu0
        %v1967 = vpack.c.bf16 %v1964, %v1964
        %v1969 = vsel %vm806, %v1967, 0
        %1971 = vmatpush.bf16.msra.mxu0 0
        %1972 = vmatpush.bf16.msra.mxu0 0
        %1973 = vmatpush.bf16.msra.mxu0 0
        %1974 = vmatpush.bf16.msra.mxu0 0
        %1975 = vmatpush.bf16.msra.mxu0 0
        %1976 = vmatpush.bf16.msra.mxu0 0
        %1977 = vmatpush.bf16.msra.mxu0 0
        %1978 = vmatpush.bf16.msra.mxu0 %v1365
        %1979 = vmatmul.bf16.gmra.mxu0 %v1969
        %v1980 = vpop.f32.mrf.mxu0
        %v1981 = vadd.f32 0.0, %v1980
        %v1982 = vpop.f32.mrf.mxu0
        %1983 = vdwg.mxu0
        %v1984 = vadd.f32 %v1910, %v1981
        %1985 = vrot.lane.b32.xlu0 %v1519, 16
        %v1986 = vpop.permute.xlu0 %1985
        %1987 = vrot.lane.b32.xlu0 %v1524, 16
        %v1988 = vpop.permute.xlu0 %1987
        %v1990 = vsel %vm806, %v1986, 0
        %v1993 = vsel %vm806, %v1988, 0
        %1995 = vmatpush.bf16.xpose.msra.mxu0 0
        %1996 = vmatpush.bf16.xpose.msra.mxu0 0
        %1997 = vmatpush.bf16.xpose.msra.mxu0 0
        %1998 = vmatpush.bf16.xpose.msra.mxu0 0
        %1999 = vmatpush.bf16.xpose.msra.mxu0 0
        %2000 = vmatpush.bf16.xpose.msra.mxu0 0
        %2001 = vmatpush.bf16.xpose.msra.mxu0 0
        %2002 = vmatpush.bf16.xpose.msra.mxu0 %v1993
        %2003 = vmatmul.bf16.gmra.mxu0 %v1990
        %v2004 = vpop.f32.mrf.mxu0
        %v2005 = vadd.f32 0.0, %v2004
        %v2006 = vpop.f32.mrf.mxu0
        %2007 = vdwg.mxu0
        %v2008 = vsel %vm826, %v2005, -inf
        %2009 = vmax.xlane.f32.xlu0 %v2008
        %v2010 = vpop.xlane.xlu0 %2009
        %v2011 = vsub.f32 %v2005, %v2010
        %v2012 = vmul.f32 %v2011, 1.442695
        %v2013 = vpow.pop %v2012
        %v2014 = vsel %vm826, %v2013, 0.0
        %2015 = vadd.xlane.f32.xlu0 %v2014
        %v2016 = vpop.xlane.xlu0 %2015
        %v2017 = vrcp.pop %v2016
        %v2018 = vmul.f32 %v2013, %v2017
        %v2019 = vpack.c.bf16 %v2018, %v2018
        %2020 = vrot.lane.b32.xlu0 %v1560, 16
        %v2021 = vpop.permute.xlu0 %2020
        %v2023 = vsel %vm826, %v2019, 0
        %v2026 = vsel %vm842, %v2021, 0
        %2028 = vmatpush.bf16.msra.mxu0 0
        %2029 = vmatpush.bf16.msra.mxu0 0
        %2030 = vmatpush.bf16.msra.mxu0 0
        %2031 = vmatpush.bf16.msra.mxu0 0
        %2032 = vmatpush.bf16.msra.mxu0 0
        %2033 = vmatpush.bf16.msra.mxu0 0
        %2034 = vmatpush.bf16.msra.mxu0 0
        %2035 = vmatpush.bf16.msra.mxu0 %v2026
        %2036 = vmatmul.bf16.gmra.mxu0 %v2023
        %v2037 = vpop.f32.mrf.mxu0
        %v2038 = vadd.f32 0.0, %v2037
        %v2039 = vpop.f32.mrf.mxu0
        %2040 = vdwg.mxu0
        %v2041 = vpack.c.bf16 %v2038, %v2038
        %v2043 = vsel %vm806, %v2041, 0
        %2045 = vmatpush.bf16.msra.mxu0 0
        %2046 = vmatpush.bf16.msra.mxu0 0
        %2047 = vmatpush.bf16.msra.mxu0 0
        %2048 = vmatpush.bf16.msra.mxu0 0
        %2049 = vmatpush.bf16.msra.mxu0 0
        %2050 = vmatpush.bf16.msra.mxu0 0
        %2051 = vmatpush.bf16.msra.mxu0 0
        %2052 = vmatpush.bf16.msra.mxu0 %v1447
        %2053 = vmatmul.bf16.gmra.mxu0 %v2043
        %v2054 = vpop.f32.mrf.mxu0
        %v2055 = vadd.f32 0.0, %v2054
        %v2056 = vpop.f32.mrf.mxu0
        %2057 = vdwg.mxu0
        %v2058 = vadd.f32 %v1984, %v2055
        %v2059 = vld [vmem:[%s4] sm:$0x1]
        %v2061 = vperm.slane %v2059, 0
        %v2063 = vadd.f32 %v1465, %v2061
        %v2064 = vadd.f32 %v2058, %v2061
        %v2065 = vadd.f32 %v585, %v2063
        %v2066 = vadd.f32 %v586, %v2064
        %v2067 = vld [vmem:[%s5] sm:$0x1]
        %v2068 = vld [vmem:[%s6] sm:$0x1]
        %2069 = vadd.xlane.f32.xlu0 %v2065
        %v2070 = vpop.xlane.xlu0 %2069
        %2071 = vadd.xlane.f32.xlu0 %v2066
        %v2072 = vpop.xlane.xlu0 %2071
        %v2073 = vrcp.pop 128.0
        %v2074 = vmul.f32 128.0, %v2073
        %v2075 = vsub.f32 1.0, %v2074
        %v2076 = vmul.f32 %v2073, %v2075
        %v2077 = vadd.f32 %v2073, %v2076
        %vm2078 = vweird.f32 %v2073
        %v2079 = vsel %vm2078, %v2073, %v2077
        %v2080 = vmul.f32 %v2070, %v2079
        %v2081 = vmul.f32 %v2072, %v2079
        %v2082 = vsub.f32 %v2065, %v2080
        %v2083 = vsub.f32 %v2066, %v2081
        %v2084 = vmul.f32 %v2082, %v2082
        %v2085 = vmul.f32 %v2083, %v2083
        %2086 = vadd.xlane.f32.xlu0 %v2084
        %v2087 = vpop.xlane.xlu0 %2086
        %2088 = vadd.xlane.f32.xlu0 %v2085
        %v2089 = vpop.xlane.xlu0 %2088
        %v2090 = vmul.f32 %v2087, %v2079
        %v2091 = vmul.f32 %v2089, %v2079
        %v2092 = vadd.f32 %v2090, 1e-05
        %v2093 = vadd.f32 %v2091, 1e-05
        %v2094 = vrsqrt.pop %v2092
        %v2095 = vmul.f32 %v2094, %v2092
        %v2096 = vmul.f32 %v2095, %v2094
        %v2097 = vmul.f32 0.5, %v2096
        %v2098 = vsub.f32 1.5, %v2097
        %v2099 = vmul.f32 %v2094, %v2098
        %vm2100 = vweird.f32 %v2092
        %vm2101 = vweird.f32 %v2094
        %vm2102 = vmor %vm2100, %vm2101
        %v2103 = vsel %vm2102, %v2094, %v2099
        %v2104 = vrsqrt.pop %v2093
        %v2105 = vmul.f32 %v2104, %v2093
        %v2106 = vmul.f32 %v2105, %v2104
        %v2107 = vmul.f32 0.5, %v2106
        %v2108 = vsub.f32 1.5, %v2107
        %v2109 = vmul.f32 %v2104, %v2108
        %vm2110 = vweird.f32 %v2093
        %vm2111 = vweird.f32 %v2104
        %vm2112 = vmor %vm2110, %vm2111
        %v2113 = vsel %vm2112, %v2104, %v2109
        %v2114 = vmul.f32 %v2082, %v2103
        %v2115 = vmul.f32 %v2083, %v2113
        %v2117 = vperm.slane %v2067, 0
        %v2119 = vmul.f32 %v2114, %v2117
        %v2120 = vmul.f32 %v2115, %v2117
        %v2122 = vperm.slane %v2068, 0
        %v2124 = vadd.f32 %v2119, %v2122
        %v2125 = vadd.f32 %v2120, %v2122
        %v2126 = vpack.c.bf16 %v2125, %v2124
        %v2127 = vld [vmem:[#allocation9] sm:$0xf]
        %v2128 = vld [vmem:[#allocation9 + $0x4] sm:$0xf]
        %v2129 = vld [vmem:[#allocation9 + $0x8] sm:$0xf]
        %v2130 = vld [vmem:[#allocation9 + $0xc] sm:$0xf]
        %v2131 = vld [vmem:[#allocation9 + $0x10] sm:$0xf]
        %v2132 = vld [vmem:[#allocation9 + $0x14] sm:$0xf]
        %v2133 = vld [vmem:[#allocation9 + $0x18] sm:$0xf]
        %v2134 = vld [vmem:[#allocation9 + $0x1c] sm:$0xf]
        %v2135 = vld [vmem:[#allocation9 + $0x20] sm:$0xf]
        %v2136 = vld [vmem:[#allocation9 + $0x24] sm:$0xf]
        %v2137 = vld [vmem:[#allocation9 + $0x28] sm:$0xf]
        %v2138 = vld [vmem:[#allocation9 + $0x2c] sm:$0xf]
        %v2139 = vld [vmem:[#allocation9 + $0x30] sm:$0xf]
        %v2140 = vld [vmem:[#allocation9 + $0x34] sm:$0xf]
        %v2141 = vld [vmem:[#allocation9 + $0x38] sm:$0xf]
        %v2142 = vld [vmem:[#allocation9 + $0x3c] sm:$0xf]
        %v2143 = vld [vmem:[%s8] sm:$0x1]
        %v2145 = vperm.slane %v2143, 0
        %v2163 = vunpack.c.l.b16 %v2127
        %v2164 = vunpack.c.l.b16 %v2128
        %v2165 = vunpack.c.l.b16 %v2129
        %v2166 = vunpack.c.l.b16 %v2130
        %v2167 = vunpack.c.l.b16 %v2131
        %v2168 = vunpack.c.l.b16 %v2132
        %v2169 = vunpack.c.l.b16 %v2133
        %v2170 = vunpack.c.l.b16 %v2134
        %v2171 = vunpack.c.l.b16 %v2135
        %v2172 = vunpack.c.l.b16 %v2136
        %v2173 = vunpack.c.l.b16 %v2137
        %v2174 = vunpack.c.l.b16 %v2138
        %v2175 = vunpack.c.l.b16 %v2139
        %v2176 = vunpack.c.l.b16 %v2140
        %v2177 = vunpack.c.l.b16 %v2141
        %v2178 = vunpack.c.l.b16 %v2142
        %v2179 = vpack.c.b16 %v2164, %v2163
        %v2180 = vpack.c.b16 %v2166, %v2165
        %v2181 = vpack.c.b16 %v2168, %v2167
        %v2182 = vpack.c.b16 %v2170, %v2169
        %v2183 = vpack.c.b16 %v2172, %v2171
        %v2184 = vpack.c.b16 %v2174, %v2173
        %v2185 = vpack.c.b16 %v2176, %v2175
        %v2186 = vpack.c.b16 %v2178, %v2177
        %2195 = vmatpush.bf16.msra.mxu0 %v2186
        %2196 = vmatpush.bf16.msra.mxu0 %v2185
        %2197 = vmatpush.bf16.msra.mxu0 %v2184
        %2198 = vmatpush.bf16.msra.mxu0 %v2183
        %2199 = vmatpush.bf16.msra.mxu0 %v2182
        %2200 = vmatpush.bf16.msra.mxu0 %v2181
        %2201 = vmatpush.bf16.msra.mxu0 %v2180
        %2202 = vmatpush.bf16.msra.mxu0 %v2179
        %2203 = vmatmul.bf16.gmra.mxu0 %v2126
        %v2204 = vpop.f32.mrf.mxu0
        %v2205 = vadd.f32 %v2145, %v2204
        %v2206 = vpop.f32.mrf.mxu0
        %v2207 = vadd.f32 %v2145, %v2206
        %2208 = vdwg.mxu0
        %v2209 = vmax.f32 %v2205, 0.0
        %v2210 = vmax.f32 %v2207, 0.0
        %v2211 = vpack.c.bf16 %v2210, %v2209
        %v2212 = vld [vmem:[#allocation11] sm:$0xf]
        %v2213 = vld [vmem:[#allocation11 + $0x4] sm:$0xf]
        %v2214 = vld [vmem:[#allocation11 + $0x8] sm:$0xf]
        %v2215 = vld [vmem:[#allocation11 + $0xc] sm:$0xf]
        %v2216 = vld [vmem:[#allocation11 + $0x10] sm:$0xf]
        %v2217 = vld [vmem:[#allocation11 + $0x14] sm:$0xf]
        %v2218 = vld [vmem:[#allocation11 + $0x18] sm:$0xf]
        %v2219 = vld [vmem:[#allocation11 + $0x1c] sm:$0xf]
        %v2220 = vld [vmem:[#allocation11 + $0x20] sm:$0xf]
        %v2221 = vld [vmem:[#allocation11 + $0x24] sm:$0xf]
        %v2222 = vld [vmem:[#allocation11 + $0x28] sm:$0xf]
        %v2223 = vld [vmem:[#allocation11 + $0x2c] sm:$0xf]
        %v2224 = vld [vmem:[#allocation11 + $0x30] sm:$0xf]
        %v2225 = vld [vmem:[#allocation11 + $0x34] sm:$0xf]
        %v2226 = vld [vmem:[#allocation11 + $0x38] sm:$0xf]
        %v2227 = vld [vmem:[#allocation11 + $0x3c] sm:$0xf]
        %v2228 = vld [vmem:[%s10] sm:$0x1]
        %v2230 = vperm.slane %v2228, 0
        %v2248 = vunpack.c.l.b16 %v2212
        %v2249 = vunpack.c.l.b16 %v2213
        %v2250 = vunpack.c.l.b16 %v2214
        %v2251 = vunpack.c.l.b16 %v2215
        %v2252 = vunpack.c.l.b16 %v2216
        %v2253 = vunpack.c.l.b16 %v2217
        %v2254 = vunpack.c.l.b16 %v2218
        %v2255 = vunpack.c.l.b16 %v2219
        %v2256 = vunpack.c.l.b16 %v2220
        %v2257 = vunpack.c.l.b16 %v2221
        %v2258 = vunpack.c.l.b16 %v2222
        %v2259 = vunpack.c.l.b16 %v2223
        %v2260 = vunpack.c.l.b16 %v2224
        %v2261 = vunpack.c.l.b16 %v2225
        %v2262 = vunpack.c.l.b16 %v2226
        %v2263 = vunpack.c.l.b16 %v2227
        %v2264 = vpack.c.b16 %v2249, %v2248
        %v2265 = vpack.c.b16 %v2251, %v2250
        %v2266 = vpack.c.b16 %v2253, %v2252
        %v2267 = vpack.c.b16 %v2255, %v2254
        %v2268 = vpack.c.b16 %v2257, %v2256
        %v2269 = vpack.c.b16 %v2259, %v2258
        %v2270 = vpack.c.b16 %v2261, %v2260
        %v2271 = vpack.c.b16 %v2263, %v2262
        %2280 = vmatpush.bf16.msra.mxu0 %v2271
        %2281 = vmatpush.bf16.msra.mxu0 %v2270
        %2282 = vmatpush.bf16.msra.mxu0 %v2269
        %2283 = vmatpush.bf16.msra.mxu0 %v2268
        %2284 = vmatpush.bf16.msra.mxu0 %v2267
        %2285 = vmatpush.bf16.msra.mxu0 %v2266
        %2286 = vmatpush.bf16.msra.mxu0 %v2265
        %2287 = vmatpush.bf16.msra.mxu0 %v2264
        %2288 = vmatmul.bf16.gmra.mxu0 %v2211
        %v2289 = vpop.f32.mrf.mxu0
        %v2290 = vadd.f32 %v2230, %v2289
        %v2291 = vpop.f32.mrf.mxu0
        %v2292 = vadd.f32 %v2230, %v2291
        %2293 = vdwg.mxu0
        %v2294 = vadd.f32 %v2124, %v2290
        %v2295 = vadd.f32 %v2125, %v2292
        %v2296 = vld [vmem:[%s11] sm:$0x1]
        %v2297 = vld [vmem:[%s12] sm:$0x1]
        %2298 = vadd.xlane.f32.xlu0 %v2294
        %v2299 = vpop.xlane.xlu0 %2298
        %2300 = vadd.xlane.f32.xlu0 %v2295
        %v2301 = vpop.xlane.xlu0 %2300
        %v2302 = vmul.f32 %v2299, %v2079
        %v2303 = vmul.f32 %v2301, %v2079
        %v2304 = vsub.f32 %v2294, %v2302
        %v2305 = vsub.f32 %v2295, %v2303
        %v2306 = vmul.f32 %v2304, %v2304
        %v2307 = vmul.f32 %v2305, %v2305
        %2308 = vadd.xlane.f32.xlu0 %v2306
        %v2309 = vpop.xlane.xlu0 %2308
        %2310 = vadd.xlane.f32.xlu0 %v2307
        %v2311 = vpop.xlane.xlu0 %2310
        %v2312 = vmul.f32 %v2309, %v2079
        %v2313 = vmul.f32 %v2311, %v2079
        %v2314 = vadd.f32 %v2312, 1e-05
        %v2315 = vadd.f32 %v2313, 1e-05
        %v2316 = vrsqrt.pop %v2314
        %v2317 = vmul.f32 %v2316, %v2314
        %v2318 = vmul.f32 %v2317, %v2316
        %v2319 = vmul.f32 0.5, %v2318
        %v2320 = vsub.f32 1.5, %v2319
        %v2321 = vmul.f32 %v2316, %v2320
        %vm2322 = vweird.f32 %v2314
        %vm2323 = vweird.f32 %v2316
        %vm2324 = vmor %vm2322, %vm2323
        %v2325 = vsel %vm2324, %v2316, %v2321
        %v2326 = vrsqrt.pop %v2315
        %v2327 = vmul.f32 %v2326, %v2315
        %v2328 = vmul.f32 %v2327, %v2326
        %v2329 = vmul.f32 0.5, %v2328
        %v2330 = vsub.f32 1.5, %v2329
        %v2331 = vmul.f32 %v2326, %v2330
        %vm2332 = vweird.f32 %v2315
        %vm2333 = vweird.f32 %v2326
        %vm2334 = vmor %vm2332, %vm2333
        %v2335 = vsel %vm2334, %v2326, %v2331
        %v2336 = vmul.f32 %v2304, %v2325
        %v2337 = vmul.f32 %v2305, %v2335
        %v2339 = vperm.slane %v2296, 0
        %v2341 = vmul.f32 %v2336, %v2339
        %v2342 = vmul.f32 %v2337, %v2339
        %v2344 = vperm.slane %v2297, 0
        %v2346 = vadd.f32 %v2341, %v2344
        %v2347 = vadd.f32 %v2342, %v2344
        %v2348 = vld [vmem:[%s13] sm:$0x1]
        %v2350 = vperm.slane %v2348, 0
        %v2352 = vmul.f32 %v2346, %v2350
        %v2353 = vmul.f32 %v2347, %v2350
        %2354 = vadd.xlane.f32.xlu0 %v2352
        %v2355 = vpop.xlane.xlu0 %2354
        %2356 = vadd.xlane.f32.xlu0 %v2353
        %v2357 = vpop.xlane.xlu0 %2356
        %v2358 = vld [vmem:[#allocation2] sm:$0x1]
        %v2360 = vperm.slane %v2358, 0
        %2361 = vset.pattern.permute.xlu0 0
        %2362 = vperm.xlu0 %2361, %v2360
        %v2363 = vpop.permute.xlu0 %2362
        %v2365 = vadd.f32 %v2355, %v2363
        %v2366 = vadd.f32 %v2357, %v2363
        %v2367 = vxor.u32 %v2365, 2147483648
        %v2368 = vxor.u32 %v2366, 2147483648
        %v2369 = vmul.f32 %v2367, 1.442695
        %v2370 = vpow.pop %v2369
        %v2371 = vmul.f32 %v2368, 1.442695
        %v2372 = vpow.pop %v2371
        %v2373 = vadd.f32 %v2370, 1.0
        %v2374 = vadd.f32 %v2372, 1.0
        %v2375 = vrcp.pop %v2373
        %v2376 = vmul.f32 %v2373, %v2375
        %v2377 = vsub.f32 1.0, %v2376
        %v2378 = vmul.f32 %v2375, %v2377
        %v2379 = vadd.f32 %v2375, %v2378
        %vm2380 = vweird.f32 %v2373
        %vm2381 = vweird.f32 %v2375
        %vm2382 = vmor %vm2380, %vm2381
        %v2383 = vsel %vm2382, %v2375, %v2379
        %v2384 = vand.u32 2147483647, %v2373
        %vm2385 = vcmp.eq.f32.partialorder %v2384, 8.507059e+37
        %v2386 = vand.u32 %v2373, 2147483648
        %v2387 = vor.u32 1.1754944e-38, %v2386
        %v2388 = vsel %vm2385, %v2387, %v2383
        %v2389 = vmul.f32 1.0, %v2388
        %v2390 = vrcp.pop %v2374
        %v2391 = vmul.f32 %v2374, %v2390
        %v2392 = vsub.f32 1.0, %v2391
        %v2393 = vmul.f32 %v2390, %v2392
        %v2394 = vadd.f32 %v2390, %v2393
        %vm2395 = vweird.f32 %v2374
        %vm2396 = vweird.f32 %v2390
        %vm2397 = vmor %vm2395, %vm2396
        %v2398 = vsel %vm2397, %v2390, %v2394
        %v2399 = vand.u32 2147483647, %v2374
        %vm2400 = vcmp.eq.f32.partialorder %v2399, 8.507059e+37
        %v2401 = vand.u32 %v2374, 2147483648
        %v2402 = vor.u32 1.1754944e-38, %v2401
        %v2403 = vsel %vm2400, %v2402, %v2398
        %v2404 = vmul.f32 1.0, %v2403
        %v2407 = vlaneseq
        %v2408 = vand.u32 %v2407, 127
        %v2409 = vperm.slane %v2389, %v2408
        %v2410 = vperm.slane %v2404, %v2408
        %vm2411 = vcmask 1041409
        %v2412 = vsel %vm2411, %v2410, %v2409
        %vm2414 = vcmask 58368
        %2415 = vst.msk [vmem:[%s582] sm:$0x3] %vm2414, %v2412
        %s2416 = sand.u32 %s364, 1
        %s2417 = scalar_lea.sflag [#allocation5], %s2416
        %s2418 = sand.u32 %s364, 1
        %s2419 = smul.addr %s2418, 2
        %s2420 = scalar_lea.vmem [#allocation12], %s2419
        // Predicated region
        $region101: #{tpu_custom_call.1} parent=79 // pred_check
          %p2421 = pneg %p374
        $region102: #{tpu_custom_call.1} parent=79 // pred_check_branch
          %2423 = sbr.rel (%p2421) target = $region104
        $region103: #{tpu_custom_call.1} parent=79 // pred_region
          %2425 = vsyncadd %s2417, 0
          %s2426 = smul.addr %s36, 2
          %s2427 = scalar_lea.hbm %s15, %s2426
          %s2429 = sshll.u32 %s2420, 4
          %s2430 = int_to_ptr.vmem [resolvable:$true] %s2429
          %s2431 = sshll.u32 %s2427, 4
          %s2432 = int_to_ptr.hbm [resolvable:$true] %s2431
          %2434 = dma.vmem_to_hbm [thread:$0]  %s2430, 32, %s2432, %s2417
        $region104: #{tpu_custom_call.1} parent=79 // pred_fallthru
          _
      $region80: #{tpu_custom_call.1} parent=5 // pred_fallthru
        _
      %p2435 = scmp.le.s32.totalorder 2, %s31
      // Predicated region
      $region105: #{tpu_custom_call.1} parent=5 // pred_check
        %p2436 = pneg %p2435
      $region106: #{tpu_custom_call.1} parent=5 // pred_check_branch
        %2438 = sbr.rel (%p2436) target = $region108
      $region107: #{tpu_custom_call.1} parent=5 // pred_region
        %s2439 = ssub.s32 %s31, 2
        // Predicated region
        $region109: #{tpu_custom_call.1} parent=107 // pred_check
          %p2440 = pneg %p380
        $region110: #{tpu_custom_call.1} parent=107 // pred_check_branch
          %2442 = sbr.rel (%p2440) target = $region112
        $region111: #{tpu_custom_call.1} parent=107 // pred_region
          %s2443 = sand.u32 %s365, 1
          %s2444 = scalar_lea.sflag [#allocation5], %s2443
          %s2445 = sand.u32 %s365, 1
          %s2446 = smul.addr %s2445, 2
          %s2447 = scalar_lea.vmem [#allocation12], %s2446
          %2449 = dma.done %s2444, 32
        $region112: #{tpu_custom_call.1} parent=107 // pred_fallthru
          _
      $region108: #{tpu_custom_call.1} parent=5 // pred_fallthru
        _
    $region6: #{tpu_custom_call.1} parent=1 // loop_footer
      %s35 = sadd.s32 1, %s31
    $region7: #{tpu_custom_call.1} parent=1 // loop_footer_branch
      %30 = sbr.rel target = $region3
    $region8: #{tpu_custom_call.1} parent=1 // loop_exit
      _
    %2450 = vsyncpa [#allocation4], 1
    %s2451 = scalar_lea.sflag [#allocation4], 1
    %2452 = vsyncpa %s2451, 1
    %2453 = vsyncpa [#allocation7], 1
    %2454 = vsyncpa [#allocation10], 1
    %2455 = vsyncpa [#allocation5], 1
    %s2456 = scalar_lea.sflag [#allocation5], 1
    %2457 = vsyncpa %s2456, 1

</llo_original>
